<compile_context>
chip_gen: v7x
topology: tpu7x:2x2x1
jax: 0.10.0
libtpu: 0.0.40
codegen_flags: <defaults>
</compile_context>

<pallas_src>
import math

import jax
import jax.numpy as jnp
import numpy as np
from jax import lax
from jax.experimental import pallas as pl
from jax.experimental.pallas import tpu as pltpu

LN_EPS = 1e-5  # PyTorch LayerNorm default eps; gamma=1, beta=0 (default init)


def _layer_norm(z):
    mu = jnp.mean(z, axis=-1, keepdims=True)
    var = jnp.mean(jnp.square(z - mu), axis=-1, keepdims=True)
    return (z - mu) * lax.rsqrt(var + LN_EPS)


# ----------------------------- fused Pallas kernel --------------------------

def fused_model_kernel(x_ref, ffw_ref, ffb_ref, wux_ref, wuhc_ref, b_ref,
                       h0_ref, c0_ref, lnm_ref, fcw_ref, fcb_ref, o_ref,
                       z_sc, xg_sc):
    T, Bp, Fin = x_ref.shape
    L = wux_ref.shape[0]
    H = ffw_ref.shape[1]
    G = 4 * H

    # Static per-lane vectors for the packed-gate trick; built once and
    # pre-broadcast (hoisted out of the unrolled time loop).
    col = lax.broadcasted_iota(jnp.int32, (1, G), 1)
    is_c = col >= 3 * H
    s2 = jnp.broadcast_to(jnp.where(is_c, 0.25, 1.0), (Bp, G))   # rsqrt(v/4)=2*rsqrt(v)
    mul = jnp.broadcast_to(jnp.where(is_c, 2.0, 1.0), (Bp, G))   # tanh(x)=2*sig(2x)-1
    add = jnp.broadcast_to(jnp.where(is_c, -1.0, 0.0), (Bp, G))
    ln_mat = lnm_ref[...]                                        # (4H,4H) blockdiag 1/H

    # --- feed-forward: one lane-friendly (T*Bp, Fin) @ (Fin, H) matmul -------
    x_all = x_ref[...].reshape(T * Bp, Fin)
    z0 = jnp.dot(x_all, ffw_ref[...],
                 preferred_element_type=jnp.float32) + ffb_ref[...]
    z_sc[...] = z0.reshape(T, Bp, H)               # time-major activations

    hsum = jnp.zeros((Bp, H), jnp.float32)

    # --- stacked SotaLSTM layers (weights resident in VMEM for the call) ----
    for l in range(L):                              # static layer loop
        wuhc = wuhc_ref[l]                          # (2H,4H) rows=[h;c], peephole folded
        h0 = jnp.broadcast_to(h0_ref[l], (Bp, H))
        c0 = jnp.broadcast_to(c0_ref[l], (Bp, H))

        # Hoisted input-side projection for the whole sequence (one MXU matmul).
        xg = jnp.dot(z_sc[...].reshape(T * Bp, H), wux_ref[l],
                     preferred_element_type=jnp.float32) + b_ref[l]
        xg_sc[...] = xg.reshape(T, Bp, G)

        def step(t, carry):
            h, c, hs = carry
            hc = jnp.concatenate([h, c], axis=1)                 # (Bp, 2H)
            gates = xg_sc[t] + jnp.dot(hc, wuhc,
                                       preferred_element_type=jnp.float32)
            # Packed LayerNorm stats: per-H-block mean and E[x^2] via one
            # (2Bp, 4H) @ (4H, 4H) block-diagonal matmul on the MXU.
            stacked = jnp.concatenate([gates, gates * gates], axis=0)
            stats = jnp.dot(stacked, ln_mat, preferred_element_type=jnp.float32)
            mean = stats[:Bp]
            var = jnp.maximum(stats[Bp:] - mean * mean, 0.0)     # clamp (padded rows)
            inv = lax.rsqrt((var + LN_EPS) * s2)                 # c-block pre-scaled x2
            act = jax.nn.sigmoid((gates - mean) * inv) * mul + add  # ONE EUP push
            i_t = act[:, 0:H]
            f_t = act[:, H:2 * H]
            o_t = act[:, 2 * H:3 * H]
            tc_t = act[:, 3 * H:4 * H]                           # = tanh(LN(c-gate))
            # eval mode: F.dropout is identity (d_h = d_c = 1), so the convex
            # mix collapses to c = c_prim, h = h_prim.
            # TODO(synk): training-mode dropout masks (d_h/d_c) not implemented.
            c_new = f_t * c + i_t * tc_t
            h_new = jnp.tanh(c_new) * o_t
            z_sc[t] = h_new                                      # next layer's input
            return h_new, c_new, hs + h_new

        _, _, hsum = lax.fori_loop(0, T, step, (h0, c0, hsum), unroll=True)

    # --- head: mean over layers & time, fc, softmax --------------------------
    z2 = hsum * (1.0 / (L * T))                                  # (Bp, H)
    logits = jnp.dot(z2, fcw_ref[...],
                     preferred_element_type=jnp.float32) + fcb_ref[...]
    m = jnp.max(logits, axis=1, keepdims=True)
    e = jnp.exp(logits - m)
    inv = pl.reciprocal(jnp.sum(e, axis=1, keepdims=True), approx=True)
    o_ref[...] = (e * inv).astype(o_ref.dtype)


# ------------------------------ wrapper --------------------------------------

def model_forward(params, x, lengths=None):
    # `lengths` is accepted to match the PyTorch signature but is unused there too.
    B, T, Fin = x.shape
    H = int(params['ff_w'].shape[1])
    L = int(params['WUx_all'].shape[0])
    C = int(params['fc_w'].shape[1])
    Bp = max(8, ((B + 7) // 8) * 8)                 # pad batch to sublane granularity

    x_tm = jnp.transpose(x, (1, 0, 2))              # time-major (T, B, F)
    if Bp != B:
        x_tm = jnp.pad(x_tm, ((0, 0), (0, Bp - B), (0, 0)))

    out = pl.pallas_call(
        fused_model_kernel,
        out_shape=jax.ShapeDtypeStruct((Bp, C), jnp.float32),
        grid=(1,),
        in_specs=[
            pl.BlockSpec((T, Bp, Fin), lambda i: (0, 0, 0)),       # x (time-major)
            pl.BlockSpec((Fin, H), lambda i: (0, 0)),              # ff weight
            pl.BlockSpec((1, H), lambda i: (0, 0)),                # ff bias
            pl.BlockSpec((L, H, 4 * H), lambda i: (0, 0, 0)),      # x-side gate weights
            pl.BlockSpec((L, 2 * H, 4 * H), lambda i: (0, 0, 0)),  # [h;c] gate weights
            pl.BlockSpec((L, 1, 4 * H), lambda i: (0, 0, 0)),      # biases
            pl.BlockSpec((L, 1, H), lambda i: (0, 0, 0)),          # h_0
            pl.BlockSpec((L, 1, H), lambda i: (0, 0, 0)),          # c_0
            pl.BlockSpec((4 * H, 4 * H), lambda i: (0, 0)),        # LN stats matrix
            pl.BlockSpec((H, C), lambda i: (0, 0)),                # fc weight
            pl.BlockSpec((1, C), lambda i: (0, 0)),                # fc bias
        ],
        out_specs=pl.BlockSpec((Bp, C), lambda i: (0, 0)),
        scratch_shapes=[pltpu.VMEM((T, Bp, H), jnp.float32),       # activation buffer
                        pltpu.VMEM((T, Bp, 4 * H), jnp.float32)],  # hoisted x-gates
        # TODO(synk): when B grows, add a batch-tile grid axis marked "parallel"
        # so v7x's second TensorCore is used, and keep scratch within 64 MiB.
        compiler_params=pltpu.CompilerParams(
            dimension_semantics=("arbitrary",)),
    )(x_tm, params['ff_w'], params['ff_b'], params['WUx_all'],
      params['WUhc_all'], params['b_all'], params['h0_all'], params['c0_all'],
      params['ln_mat'], params['fc_w'], params['fc_b'])
    return out[:B]


# --------------------------- parameter setup --------------------------------

def init_params(key, hidden, num_layers, in_features, out_features):
    H = hidden
    stdv = 1.0 / math.sqrt(H)
    ks = iter(jax.random.split(key, 4 + 5 * num_layers))

    b_ff = 1.0 / math.sqrt(in_features)
    ff_w = jax.random.uniform(next(ks), (in_features, H), jnp.float32, -b_ff, b_ff)
    ff_b = jax.random.uniform(next(ks), (1, H), jnp.float32, -b_ff, b_ff)
    b_fc = 1.0 / math.sqrt(H)
    fc_w = jax.random.uniform(next(ks), (H, out_features), jnp.float32, -b_fc, b_fc)
    fc_b = jax.random.uniform(next(ks), (1, out_features), jnp.float32, -b_fc, b_fc)

    wux_l, wuhc_l, b_l, h0_l, c0_l, layers_raw = [], [], [], [], [], []
    for _ in range(num_layers):
        W = jax.random.uniform(next(ks), (4 * H, 4 * H), jnp.float32, -stdv, stdv)
        U = jax.random.uniform(next(ks), (4 * H, 4 * H), jnp.float32, -stdv, stdv)
        b = jnp.zeros((4 * H,), jnp.float32).at[H:2 * H].set(1.0)
        wp = jax.random.uniform(next(ks), (3 * H,), jnp.float32, -stdv, stdv)
        h0 = jax.random.uniform(next(ks), (H,), jnp.float32, -stdv, stdv)
        c0 = jax.random.uniform(next(ks), (H,), jnp.float32, -stdv, stdv)
        layers_raw.append(dict(W=W, U=U, b=b, wp=wp, h0=h0, c0=c0))

        # x_t.repeat(1,3) @ W[:3H,:3H] == x_t @ (W[0:H,:3H]+W[H:2H,:3H]+W[2H:3H,:3H])
        W3, U3 = W[:3 * H, :3 * H], U[:3 * H, :3 * H]
        Wsum = W3[0:H] + W3[H:2 * H] + W3[2 * H:3 * H]           # (H, 3H)
        Usum = U3[0:H] + U3[H:2 * H] + U3[2 * H:3 * H]           # (H, 3H)
        Wc, Uc = W[3 * H:, 3 * H:], U[3 * H:, 3 * H:]            # (H, H)
        wux_l.append(jnp.concatenate([Wsum, Wc], axis=1))        # x rows   (H, 4H)
        h_rows = jnp.concatenate([Usum, Uc], axis=1)             # h rows   (H, 4H)
        # peephole folded into the recurrent matmul as diagonal c-rows:
        c_rows = jnp.concatenate(
            [jnp.diag(wp[0:H]), jnp.diag(wp[H:2 * H]), jnp.diag(wp[2 * H:3 * H]),
             jnp.zeros((H, H), jnp.float32)], axis=1)            # (H, 4H)
        wuhc_l.append(jnp.concatenate([h_rows, c_rows], axis=0)) # (2H, 4H)
        b_l.append(b[None, :])                                   # (1, 4H)
        h0_l.append(h0[None, :])
        c0_l.append(c0[None, :])

    # block-diagonal 1/H matrix: gates @ ln_mat -> per-gate means (packed LN stats)
    ln_np = np.zeros((4 * H, 4 * H), np.float32)
    for g in range(4):
        ln_np[g * H:(g + 1) * H, g * H:(g + 1) * H] = 1.0 / H

    params = dict(ff_w=ff_w, ff_b=ff_b, fc_w=fc_w, fc_b=fc_b,
                  WUx_all=jnp.stack(wux_l), WUhc_all=jnp.stack(wuhc_l),
                  b_all=jnp.stack(b_l), h0_all=jnp.stack(h0_l),
                  c0_all=jnp.stack(c0_l), ln_mat=jnp.asarray(ln_np))
    raw = dict(hidden=H, ff_w=ff_w, ff_b=ff_b, fc_w=fc_w, fc_b=fc_b,
               layers=layers_raw)
    return params, raw


# ------------------------ pure-JAX reference (checks) -----------------------

def ref_forward(raw, x):
    H = raw['hidden']
    z0 = x @ raw['ff_w'] + raw['ff_b']                           # (B, T, H)
    B, T, _ = z0.shape
    layer_outs = []
    for lp in raw['layers']:
        W, U, b, wp = lp['W'], lp['U'], lp['b'], lp['wp']
        h = jnp.broadcast_to(lp['h0'], (B, H))
        c = jnp.broadcast_to(lp['c0'], (B, H))
        outs = []
        for t in range(T):
            x_t = z0[:, t, :]
            x_r = jnp.concatenate([x_t, x_t, x_t], axis=1)
            h_r = jnp.concatenate([h, h, h], axis=1)
            c_r = jnp.concatenate([c, c, c], axis=1)
            gates = x_r @ W[:3 * H, :3 * H] + h_r @ U[:3 * H, :3 * H] + b[:3 * H] + wp * c_r
            i_t = jax.nn.sigmoid(_layer_norm(gates[:, 0:H]))
            f_t = jax.nn.sigmoid(_layer_norm(gates[:, H:2 * H]))
            o_t = jax.nn.sigmoid(_layer_norm(gates[:, 2 * H:3 * H]))
            gc = _layer_norm(x_t @ W[3 * H:, 3 * H:] + h @ U[3 * H:, 3 * H:] + b[3 * H:])
            c = f_t * c + i_t * jnp.tanh(gc)
            h = jnp.tanh(c) * o_t
            outs.append(h)
        out = jnp.stack(outs, axis=1)                            # (B, T, H)
        layer_outs.append(out)
        z0 = out
    z1 = jnp.mean(jnp.stack(layer_outs, axis=1), axis=1)         # mean over layers
    z2 = jnp.mean(z1, axis=1)                                    # mean over time
    logits = z2 @ raw['fc_w'] + raw['fc_b']
    return jax.nn.softmax(logits, axis=1)


if __name__ == "__main__":
    B, T, Fin, H, L = 4, 8, 48, 32, 2
    key = jax.random.PRNGKey(0)
    k_x, k_p = jax.random.split(key)
    x = jax.random.normal(k_x, (B, T, Fin), dtype=jnp.float32)
    lengths = jnp.full((B,), T, dtype=jnp.int32)   # unused by the forward pass
    params, raw = init_params(k_p, H, L, Fin, 4)

    y = jax.block_until_ready(model_forward(params, x, lengths))
    y_ref = ref_forward(raw, x)
    np.testing.assert_allclose(np.asarray(y), np.asarray(y_ref), atol=5e-3, rtol=0)
    assert y.shape == (B, 4)
    print("KERNEL_OK")
</pallas_src>

<mosaic_0001>
module attributes {stable_mosaic.version = 11 : i64} {
  func.func @fused_model_kernel(%arg0: i32, %arg1: memref<8x8x48xf32, #tpu.memory_space<vmem>>, %arg2: memref<48x32xf32, #tpu.memory_space<vmem>>, %arg3: memref<1x32xf32, #tpu.memory_space<vmem>>, %arg4: memref<2x32x128xf32, #tpu.memory_space<vmem>>, %arg5: memref<2x64x128xf32, #tpu.memory_space<vmem>>, %arg6: memref<2x1x128xf32, #tpu.memory_space<vmem>>, %arg7: memref<2x1x32xf32, #tpu.memory_space<vmem>>, %arg8: memref<2x1x32xf32, #tpu.memory_space<vmem>>, %arg9: memref<128x128xf32, #tpu.memory_space<vmem>>, %arg10: memref<32x4xf32, #tpu.memory_space<vmem>>, %arg11: memref<1x4xf32, #tpu.memory_space<vmem>>, %arg12: memref<8x4xf32, #tpu.memory_space<vmem>>, %arg13: memref<8x8x32xf32, #tpu.memory_space<vmem>>, %arg14: memref<8x8x128xf32, #tpu.memory_space<vmem>>) attributes {dimension_semantics = [#tpu.dimension_semantics<arbitrary>], iteration_bounds = array<i64: 1>, scalar_prefetch = 0 : i64, scratch_operands = 2 : i64, tpu.core_type = #tpu.core_type<tc>, window_params = [{pipeline_mode = #tpu.pipeline_mode<synchronous>, transform_indices = @transform_0, window_bounds = array<i64: 8, 8, 48>}, {pipeline_mode = #tpu.pipeline_mode<synchronous>, transform_indices = @transform_1, window_bounds = array<i64: 48, 32>}, {pipeline_mode = #tpu.pipeline_mode<synchronous>, transform_indices = @transform_2, window_bounds = array<i64: 1, 32>}, {pipeline_mode = #tpu.pipeline_mode<synchronous>, transform_indices = @transform_3, window_bounds = array<i64: 2, 32, 128>}, {pipeline_mode = #tpu.pipeline_mode<synchronous>, transform_indices = @transform_4, window_bounds = array<i64: 2, 64, 128>}, {pipeline_mode = #tpu.pipeline_mode<synchronous>, transform_indices = @transform_5, window_bounds = array<i64: 2, 1, 128>}, {pipeline_mode = #tpu.pipeline_mode<synchronous>, transform_indices = @transform_6, window_bounds = array<i64: 2, 1, 32>}, {pipeline_mode = #tpu.pipeline_mode<synchronous>, transform_indices = @transform_7, window_bounds = array<i64: 2, 1, 32>}, {pipeline_mode = #tpu.pipeline_mode<synchronous>, transform_indices = @transform_8, window_bounds = array<i64: 128, 128>}, {pipeline_mode = #tpu.pipeline_mode<synchronous>, transform_indices = @transform_9, window_bounds = array<i64: 32, 4>}, {pipeline_mode = #tpu.pipeline_mode<synchronous>, transform_indices = @transform_10, window_bounds = array<i64: 1, 4>}, {pipeline_mode = #tpu.pipeline_mode<synchronous>, transform_indices = @transform_11, window_bounds = array<i64: 8, 4>}]} {
    %0 = tpu.iota {dimensions = array<i32: 1>} : vector<1x128xi32>
    %c96_i32 = arith.constant 96 : i32
    %1 = vector.broadcast %c96_i32 : i32 to vector<1x128xi32>
    %2 = arith.cmpi sge, %0, %1 : vector<1x128xi32>
    %cst = arith.constant 2.500000e-01 : f32
    %cst_0 = arith.constant 1.000000e+00 : f32
    %3 = vector.broadcast %cst : f32 to vector<1x128xf32>
    %4 = vector.broadcast %cst_0 : f32 to vector<1x128xf32>
    %5 = arith.select %2, %3, %4 : vector<1x128xi1>, vector<1x128xf32>
    %6 = vector.shape_cast %5 : vector<1x128xf32> to vector<1x128xf32>
    %7 = vector.broadcast %6 : vector<1x128xf32> to vector<8x128xf32>
    %cst_1 = arith.constant 2.000000e+00 : f32
    %cst_2 = arith.constant 1.000000e+00 : f32
    %8 = vector.broadcast %cst_1 : f32 to vector<1x128xf32>
    %9 = vector.broadcast %cst_2 : f32 to vector<1x128xf32>
    %10 = arith.select %2, %8, %9 : vector<1x128xi1>, vector<1x128xf32>
    %11 = vector.shape_cast %10 : vector<1x128xf32> to vector<1x128xf32>
    %12 = vector.broadcast %11 : vector<1x128xf32> to vector<8x128xf32>
    %cst_3 = arith.constant -1.000000e+00 : f32
    %cst_4 = arith.constant 0.000000e+00 : f32
    %13 = vector.broadcast %cst_3 : f32 to vector<1x128xf32>
    %14 = vector.broadcast %cst_4 : f32 to vector<1x128xf32>
    %15 = arith.select %2, %13, %14 : vector<1x128xi1>, vector<1x128xf32>
    %16 = vector.shape_cast %15 : vector<1x128xf32> to vector<1x128xf32>
    %17 = vector.broadcast %16 : vector<1x128xf32> to vector<8x128xf32>
    %c0 = arith.constant 0 : index
    %c0_5 = arith.constant 0 : index
    %18 = vector.load %arg9[%c0, %c0_5] : memref<128x128xf32, #tpu.memory_space<vmem>>, vector<128x128xf32>
    %c0_6 = arith.constant 0 : index
    %c0_7 = arith.constant 0 : index
    %c0_8 = arith.constant 0 : index
    %19 = vector.load %arg1[%c0_6, %c0_7, %c0_8] : memref<8x8x48xf32, #tpu.memory_space<vmem>>, vector<8x8x48xf32>
    %20 = vector.shape_cast %19 : vector<8x8x48xf32> to vector<64x48xf32>
    %c0_9 = arith.constant 0 : index
    %c0_10 = arith.constant 0 : index
    %21 = vector.load %arg2[%c0_9, %c0_10] : memref<48x32xf32, #tpu.memory_space<vmem>>, vector<48x32xf32>
    %cst_11 = arith.constant dense<0.000000e+00> : vector<64x32xf32>
    %22 = tpu.matmul %20, %21, %cst_11 {dimension_numbers = #tpu.dot_dimension_numbers<[1], [0], [0], [1], [0, 0, 1, 1], [], []>} : vector<64x48xf32>, vector<48x32xf32>, vector<64x32xf32> -> vector<64x32xf32>
    %c0_12 = arith.constant 0 : index
    %c0_13 = arith.constant 0 : index
    %23 = vector.load %arg3[%c0_12, %c0_13] : memref<1x32xf32, #tpu.memory_space<vmem>>, vector<1x32xf32>
    %24 = vector.broadcast %23 : vector<1x32xf32> to vector<64x32xf32>
    %25 = arith.addf %22, %24 : vector<64x32xf32>
    %26 = vector.shape_cast %25 : vector<64x32xf32> to vector<8x8x32xf32>
    %c0_14 = arith.constant 0 : index
    %c0_15 = arith.constant 0 : index
    %c0_16 = arith.constant 0 : index
    %27 = vector.load %arg13[%c0_14, %c0_15, %c0_16] : memref<8x8x32xf32, #tpu.memory_space<vmem>>, vector<8x8x32xf32>
    tpu.vector_store %arg13[%c0_14, %c0_15, %c0_16], %26 {strides = array<i32>} : memref<8x8x32xf32, #tpu.memory_space<vmem>>, vector<8x8x32xf32>,
    %cst_17 = arith.constant 0.000000e+00 : f32
    %28 = vector.broadcast %cst_17 : f32 to vector<8x32xf32>
    %c0_18 = arith.constant 0 : index
    %c0_19 = arith.constant 0 : index
    %c0_20 = arith.constant 0 : index
    %29 = vector.load %arg5[%c0_18, %c0_19, %c0_20] : memref<2x64x128xf32, #tpu.memory_space<vmem>>, vector<1x64x128xf32>
    %30 = vector.shape_cast %29 : vector<1x64x128xf32> to vector<64x128xf32>
    %c0_21 = arith.constant 0 : index
    %c0_22 = arith.constant 0 : index
    %c0_23 = arith.constant 0 : index
    %31 = vector.load %arg7[%c0_21, %c0_22, %c0_23] : memref<2x1x32xf32, #tpu.memory_space<vmem>>, vector<1x1x32xf32>
    %32 = vector.shape_cast %31 : vector<1x1x32xf32> to vector<1x32xf32>
    %33 = vector.shape_cast %32 : vector<1x32xf32> to vector<1x32xf32>
    %34 = vector.broadcast %33 : vector<1x32xf32> to vector<8x32xf32>
    %c0_24 = arith.constant 0 : index
    %c0_25 = arith.constant 0 : index
    %c0_26 = arith.constant 0 : index
    %35 = vector.load %arg8[%c0_24, %c0_25, %c0_26] : memref<2x1x32xf32, #tpu.memory_space<vmem>>, vector<1x1x32xf32>
    %36 = vector.shape_cast %35 : vector<1x1x32xf32> to vector<1x32xf32>
    %37 = vector.shape_cast %36 : vector<1x32xf32> to vector<1x32xf32>
    %38 = vector.broadcast %37 : vector<1x32xf32> to vector<8x32xf32>
    %c0_27 = arith.constant 0 : index
    %c0_28 = arith.constant 0 : index
    %c0_29 = arith.constant 0 : index
    %39 = vector.load %arg13[%c0_27, %c0_28, %c0_29] : memref<8x8x32xf32, #tpu.memory_space<vmem>>, vector<8x8x32xf32>
    %40 = vector.shape_cast %39 : vector<8x8x32xf32> to vector<64x32xf32>
    %c0_30 = arith.constant 0 : index
    %c0_31 = arith.constant 0 : index
    %c0_32 = arith.constant 0 : index
    %41 = vector.load %arg4[%c0_30, %c0_31, %c0_32] : memref<2x32x128xf32, #tpu.memory_space<vmem>>, vector<1x32x128xf32>
    %42 = vector.shape_cast %41 : vector<1x32x128xf32> to vector<32x128xf32>
    %cst_33 = arith.constant dense<0.000000e+00> : vector<64x128xf32>
    %43 = tpu.matmul %40, %42, %cst_33 {dimension_numbers = #tpu.dot_dimension_numbers<[1], [0], [0], [1], [0, 0, 1, 1], [], []>} : vector<64x32xf32>, vector<32x128xf32>, vector<64x128xf32> -> vector<64x128xf32>
    %c0_34 = arith.constant 0 : index
    %c0_35 = arith.constant 0 : index
    %c0_36 = arith.constant 0 : index
    %44 = vector.load %arg6[%c0_34, %c0_35, %c0_36] : memref<2x1x128xf32, #tpu.memory_space<vmem>>, vector<1x1x128xf32>
    %45 = vector.shape_cast %44 : vector<1x1x128xf32> to vector<1x128xf32>
    %46 = vector.broadcast %45 : vector<1x128xf32> to vector<64x128xf32>
    %47 = arith.addf %43, %46 : vector<64x128xf32>
    %48 = vector.shape_cast %47 : vector<64x128xf32> to vector<8x8x128xf32>
    %c0_37 = arith.constant 0 : index
    %c0_38 = arith.constant 0 : index
    %c0_39 = arith.constant 0 : index
    %49 = vector.load %arg14[%c0_37, %c0_38, %c0_39] : memref<8x8x128xf32, #tpu.memory_space<vmem>>, vector<8x8x128xf32>
    tpu.vector_store %arg14[%c0_37, %c0_38, %c0_39], %48 {strides = array<i32>} : memref<8x8x128xf32, #tpu.memory_space<vmem>>, vector<8x8x128xf32>,
    %c0_i32 = arith.constant 0 : i32
    %50 = tpu.concatenate %34, %38 in 1 : vector<8x32xf32>, vector<8x32xf32> -> vector<8x64xf32>
    %51 = arith.index_cast %c0_i32 : i32 to index
    %c0_40 = arith.constant 0 : index
    %c0_41 = arith.constant 0 : index
    %52 = vector.load %arg14[%51, %c0_40, %c0_41] : memref<8x8x128xf32, #tpu.memory_space<vmem>>, vector<1x8x128xf32>
    %53 = vector.shape_cast %52 : vector<1x8x128xf32> to vector<8x128xf32>
    %cst_42 = arith.constant dense<0.000000e+00> : vector<8x128xf32>
    %54 = tpu.matmul %50, %30, %cst_42 {dimension_numbers = #tpu.dot_dimension_numbers<[1], [0], [0], [1], [0, 0, 1, 1], [], []>} : vector<8x64xf32>, vector<64x128xf32>, vector<8x128xf32> -> vector<8x128xf32>
    %55 = arith.addf %53, %54 : vector<8x128xf32>
    %56 = arith.mulf %55, %55 : vector<8x128xf32>
    %57 = tpu.concatenate %55, %56 in 0 : vector<8x128xf32>, vector<8x128xf32> -> vector<16x128xf32>
    %cst_43 = arith.constant dense<0.000000e+00> : vector<16x128xf32>
    %58 = tpu.matmul %57, %18, %cst_43 {dimension_numbers = #tpu.dot_dimension_numbers<[1], [0], [0], [1], [0, 0, 1, 1], [], []>} : vector<16x128xf32>, vector<128x128xf32>, vector<16x128xf32> -> vector<16x128xf32>
    %59 = vector.extract_strided_slice %58 {offsets = [0, 0], sizes = [8, 128], strides = [1, 1]} : vector<16x128xf32> to vector<8x128xf32>
    %60 = vector.extract_strided_slice %58 {offsets = [8, 0], sizes = [8, 128], strides = [1, 1]} : vector<16x128xf32> to vector<8x128xf32>
    %61 = arith.mulf %59, %59 : vector<8x128xf32>
    %62 = arith.subf %60, %61 : vector<8x128xf32>
    %cst_44 = arith.constant 0.000000e+00 : f32
    %63 = vector.broadcast %cst_44 : f32 to vector<8x128xf32>
    %64 = arith.maximumf %62, %63 : vector<8x128xf32>
    %cst_45 = arith.constant 9.99999974E-6 : f32
    %65 = vector.broadcast %cst_45 : f32 to vector<8x128xf32>
    %66 = arith.addf %64, %65 : vector<8x128xf32>
    %67 = arith.mulf %66, %7 : vector<8x128xf32>
    %68 = math.rsqrt %67 : vector<8x128xf32>
    %69 = arith.subf %55, %59 : vector<8x128xf32>
    %70 = arith.mulf %69, %68 : vector<8x128xf32>
    %71 = arith.negf %70 : vector<8x128xf32>
    %72 = math.exp %71 : vector<8x128xf32>
    %cst_46 = arith.constant 1.000000e+00 : f32
    %73 = vector.broadcast %cst_46 : f32 to vector<8x128xf32>
    %74 = arith.addf %73, %72 : vector<8x128xf32>
    %75 = arith.divf %73, %74 : vector<8x128xf32>
    %76 = arith.mulf %75, %12 : vector<8x128xf32>
    %77 = arith.addf %76, %17 : vector<8x128xf32>
    %78 = vector.extract_strided_slice %77 {offsets = [0, 0], sizes = [8, 32], strides = [1, 1]} : vector<8x128xf32> to vector<8x32xf32>
    %79 = vector.extract_strided_slice %77 {offsets = [0, 32], sizes = [8, 32], strides = [1, 1]} : vector<8x128xf32> to vector<8x32xf32>
    %80 = vector.extract_strided_slice %77 {offsets = [0, 64], sizes = [8, 32], strides = [1, 1]} : vector<8x128xf32> to vector<8x32xf32>
    %81 = vector.extract_strided_slice %77 {offsets = [0, 96], sizes = [8, 32], strides = [1, 1]} : vector<8x128xf32> to vector<8x32xf32>
    %82 = arith.mulf %79, %38 : vector<8x32xf32>
    %83 = arith.mulf %78, %81 : vector<8x32xf32>
    %84 = arith.addf %82, %83 : vector<8x32xf32>
    %85 = math.tanh %84 : vector<8x32xf32>
    %86 = arith.mulf %85, %80 : vector<8x32xf32>
    %87 = arith.index_cast %c0_i32 : i32 to index
    %c0_47 = arith.constant 0 : index
    %c0_48 = arith.constant 0 : index
    %88 = vector.load %arg13[%87, %c0_47, %c0_48] : memref<8x8x32xf32, #tpu.memory_space<vmem>>, vector<1x8x32xf32>
    %89 = vector.shape_cast %88 : vector<1x8x32xf32> to vector<8x32xf32>
    %90 = vector.shape_cast %86 : vector<8x32xf32> to vector<1x8x32xf32>
    tpu.vector_store %arg13[%87, %c0_47, %c0_48], %90 {strides = array<i32>} : memref<8x8x32xf32, #tpu.memory_space<vmem>>, vector<1x8x32xf32>,
    %91 = arith.addf %28, %86 : vector<8x32xf32>
    %c1_i32 = arith.constant 1 : i32
    %92 = tpu.concatenate %86, %84 in 1 : vector<8x32xf32>, vector<8x32xf32> -> vector<8x64xf32>
    %93 = arith.index_cast %c1_i32 : i32 to index
    %c0_49 = arith.constant 0 : index
    %c0_50 = arith.constant 0 : index
    %94 = vector.load %arg14[%93, %c0_49, %c0_50] : memref<8x8x128xf32, #tpu.memory_space<vmem>>, vector<1x8x128xf32>
    %95 = vector.shape_cast %94 : vector<1x8x128xf32> to vector<8x128xf32>
    %cst_51 = arith.constant dense<0.000000e+00> : vector<8x128xf32>
    %96 = tpu.matmul %92, %30, %cst_51 {dimension_numbers = #tpu.dot_dimension_numbers<[1], [0], [0], [1], [0, 0, 1, 1], [], []>} : vector<8x64xf32>, vector<64x128xf32>, vector<8x128xf32> -> vector<8x128xf32>
    %97 = arith.addf %95, %96 : vector<8x128xf32>
    %98 = arith.mulf %97, %97 : vector<8x128xf32>
    %99 = tpu.concatenate %97, %98 in 0 : vector<8x128xf32>, vector<8x128xf32> -> vector<16x128xf32>
    %cst_52 = arith.constant dense<0.000000e+00> : vector<16x128xf32>
    %100 = tpu.matmul %99, %18, %cst_52 {dimension_numbers = #tpu.dot_dimension_numbers<[1], [0], [0], [1], [0, 0, 1, 1], [], []>} : vector<16x128xf32>, vector<128x128xf32>, vector<16x128xf32> -> vector<16x128xf32>
    %101 = vector.extract_strided_slice %100 {offsets = [0, 0], sizes = [8, 128], strides = [1, 1]} : vector<16x128xf32> to vector<8x128xf32>
    %102 = vector.extract_strided_slice %100 {offsets = [8, 0], sizes = [8, 128], strides = [1, 1]} : vector<16x128xf32> to vector<8x128xf32>
    %103 = arith.mulf %101, %101 : vector<8x128xf32>
    %104 = arith.subf %102, %103 : vector<8x128xf32>
    %cst_53 = arith.constant 0.000000e+00 : f32
    %105 = vector.broadcast %cst_53 : f32 to vector<8x128xf32>
    %106 = arith.maximumf %104, %105 : vector<8x128xf32>
    %cst_54 = arith.constant 9.99999974E-6 : f32
    %107 = vector.broadcast %cst_54 : f32 to vector<8x128xf32>
    %108 = arith.addf %106, %107 : vector<8x128xf32>
    %109 = arith.mulf %108, %7 : vector<8x128xf32>
    %110 = math.rsqrt %109 : vector<8x128xf32>
    %111 = arith.subf %97, %101 : vector<8x128xf32>
    %112 = arith.mulf %111, %110 : vector<8x128xf32>
    %113 = arith.negf %112 : vector<8x128xf32>
    %114 = math.exp %113 : vector<8x128xf32>
    %cst_55 = arith.constant 1.000000e+00 : f32
    %115 = vector.broadcast %cst_55 : f32 to vector<8x128xf32>
    %116 = arith.addf %115, %114 : vector<8x128xf32>
    %117 = arith.divf %115, %116 : vector<8x128xf32>
    %118 = arith.mulf %117, %12 : vector<8x128xf32>
    %119 = arith.addf %118, %17 : vector<8x128xf32>
    %120 = vector.extract_strided_slice %119 {offsets = [0, 0], sizes = [8, 32], strides = [1, 1]} : vector<8x128xf32> to vector<8x32xf32>
    %121 = vector.extract_strided_slice %119 {offsets = [0, 32], sizes = [8, 32], strides = [1, 1]} : vector<8x128xf32> to vector<8x32xf32>
    %122 = vector.extract_strided_slice %119 {offsets = [0, 64], sizes = [8, 32], strides = [1, 1]} : vector<8x128xf32> to vector<8x32xf32>
    %123 = vector.extract_strided_slice %119 {offsets = [0, 96], sizes = [8, 32], strides = [1, 1]} : vector<8x128xf32> to vector<8x32xf32>
    %124 = arith.mulf %121, %84 : vector<8x32xf32>
    %125 = arith.mulf %120, %123 : vector<8x32xf32>
    %126 = arith.addf %124, %125 : vector<8x32xf32>
    %127 = math.tanh %126 : vector<8x32xf32>
    %128 = arith.mulf %127, %122 : vector<8x32xf32>
    %129 = arith.index_cast %c1_i32 : i32 to index
    %c0_56 = arith.constant 0 : index
    %c0_57 = arith.constant 0 : index
    %130 = vector.load %arg13[%129, %c0_56, %c0_57] : memref<8x8x32xf32, #tpu.memory_space<vmem>>, vector<1x8x32xf32>
    %131 = vector.shape_cast %130 : vector<1x8x32xf32> to vector<8x32xf32>
    %132 = vector.shape_cast %128 : vector<8x32xf32> to vector<1x8x32xf32>
    tpu.vector_store %arg13[%129, %c0_56, %c0_57], %132 {strides = array<i32>} : memref<8x8x32xf32, #tpu.memory_space<vmem>>, vector<1x8x32xf32>,
    %133 = arith.addf %91, %128 : vector<8x32xf32>
    %c2_i32 = arith.constant 2 : i32
    %134 = tpu.concatenate %128, %126 in 1 : vector<8x32xf32>, vector<8x32xf32> -> vector<8x64xf32>
    %135 = arith.index_cast %c2_i32 : i32 to index
    %c0_58 = arith.constant 0 : index
    %c0_59 = arith.constant 0 : index
    %136 = vector.load %arg14[%135, %c0_58, %c0_59] : memref<8x8x128xf32, #tpu.memory_space<vmem>>, vector<1x8x128xf32>
    %137 = vector.shape_cast %136 : vector<1x8x128xf32> to vector<8x128xf32>
    %cst_60 = arith.constant dense<0.000000e+00> : vector<8x128xf32>
    %138 = tpu.matmul %134, %30, %cst_60 {dimension_numbers = #tpu.dot_dimension_numbers<[1], [0], [0], [1], [0, 0, 1, 1], [], []>} : vector<8x64xf32>, vector<64x128xf32>, vector<8x128xf32> -> vector<8x128xf32>
    %139 = arith.addf %137, %138 : vector<8x128xf32>
    %140 = arith.mulf %139, %139 : vector<8x128xf32>
    %141 = tpu.concatenate %139, %140 in 0 : vector<8x128xf32>, vector<8x128xf32> -> vector<16x128xf32>
    %cst_61 = arith.constant dense<0.000000e+00> : vector<16x128xf32>
    %142 = tpu.matmul %141, %18, %cst_61 {dimension_numbers = #tpu.dot_dimension_numbers<[1], [0], [0], [1], [0, 0, 1, 1], [], []>} : vector<16x128xf32>, vector<128x128xf32>, vector<16x128xf32> -> vector<16x128xf32>
    %143 = vector.extract_strided_slice %142 {offsets = [0, 0], sizes = [8, 128], strides = [1, 1]} : vector<16x128xf32> to vector<8x128xf32>
    %144 = vector.extract_strided_slice %142 {offsets = [8, 0], sizes = [8, 128], strides = [1, 1]} : vector<16x128xf32> to vector<8x128xf32>
    %145 = arith.mulf %143, %143 : vector<8x128xf32>
    %146 = arith.subf %144, %145 : vector<8x128xf32>
    %cst_62 = arith.constant 0.000000e+00 : f32
    %147 = vector.broadcast %cst_62 : f32 to vector<8x128xf32>
    %148 = arith.maximumf %146, %147 : vector<8x128xf32>
    %cst_63 = arith.constant 9.99999974E-6 : f32
    %149 = vector.broadcast %cst_63 : f32 to vector<8x128xf32>
    %150 = arith.addf %148, %149 : vector<8x128xf32>
    %151 = arith.mulf %150, %7 : vector<8x128xf32>
    %152 = math.rsqrt %151 : vector<8x128xf32>
    %153 = arith.subf %139, %143 : vector<8x128xf32>
    %154 = arith.mulf %153, %152 : vector<8x128xf32>
    %155 = arith.negf %154 : vector<8x128xf32>
    %156 = math.exp %155 : vector<8x128xf32>
    %cst_64 = arith.constant 1.000000e+00 : f32
    %157 = vector.broadcast %cst_64 : f32 to vector<8x128xf32>
    %158 = arith.addf %157, %156 : vector<8x128xf32>
    %159 = arith.divf %157, %158 : vector<8x128xf32>
    %160 = arith.mulf %159, %12 : vector<8x128xf32>
    %161 = arith.addf %160, %17 : vector<8x128xf32>
    %162 = vector.extract_strided_slice %161 {offsets = [0, 0], sizes = [8, 32], strides = [1, 1]} : vector<8x128xf32> to vector<8x32xf32>
    %163 = vector.extract_strided_slice %161 {offsets = [0, 32], sizes = [8, 32], strides = [1, 1]} : vector<8x128xf32> to vector<8x32xf32>
    %164 = vector.extract_strided_slice %161 {offsets = [0, 64], sizes = [8, 32], strides = [1, 1]} : vector<8x128xf32> to vector<8x32xf32>
    %165 = vector.extract_strided_slice %161 {offsets = [0, 96], sizes = [8, 32], strides = [1, 1]} : vector<8x128xf32> to vector<8x32xf32>
    %166 = arith.mulf %163, %126 : vector<8x32xf32>
    %167 = arith.mulf %162, %165 : vector<8x32xf32>
    %168 = arith.addf %166, %167 : vector<8x32xf32>
    %169 = math.tanh %168 : vector<8x32xf32>
    %170 = arith.mulf %169, %164 : vector<8x32xf32>
    %171 = arith.index_cast %c2_i32 : i32 to index
    %c0_65 = arith.constant 0 : index
    %c0_66 = arith.constant 0 : index
    %172 = vector.load %arg13[%171, %c0_65, %c0_66] : memref<8x8x32xf32, #tpu.memory_space<vmem>>, vector<1x8x32xf32>
    %173 = vector.shape_cast %172 : vector<1x8x32xf32> to vector<8x32xf32>
    %174 = vector.shape_cast %170 : vector<8x32xf32> to vector<1x8x32xf32>
    tpu.vector_store %arg13[%171, %c0_65, %c0_66], %174 {strides = array<i32>} : memref<8x8x32xf32, #tpu.memory_space<vmem>>, vector<1x8x32xf32>,
    %175 = arith.addf %133, %170 : vector<8x32xf32>
    %c3_i32 = arith.constant 3 : i32
    %176 = tpu.concatenate %170, %168 in 1 : vector<8x32xf32>, vector<8x32xf32> -> vector<8x64xf32>
    %177 = arith.index_cast %c3_i32 : i32 to index
    %c0_67 = arith.constant 0 : index
    %c0_68 = arith.constant 0 : index
    %178 = vector.load %arg14[%177, %c0_67, %c0_68] : memref<8x8x128xf32, #tpu.memory_space<vmem>>, vector<1x8x128xf32>
    %179 = vector.shape_cast %178 : vector<1x8x128xf32> to vector<8x128xf32>
    %cst_69 = arith.constant dense<0.000000e+00> : vector<8x128xf32>
    %180 = tpu.matmul %176, %30, %cst_69 {dimension_numbers = #tpu.dot_dimension_numbers<[1], [0], [0], [1], [0, 0, 1, 1], [], []>} : vector<8x64xf32>, vector<64x128xf32>, vector<8x128xf32> -> vector<8x128xf32>
    %181 = arith.addf %179, %180 : vector<8x128xf32>
    %182 = arith.mulf %181, %181 : vector<8x128xf32>
    %183 = tpu.concatenate %181, %182 in 0 : vector<8x128xf32>, vector<8x128xf32> -> vector<16x128xf32>
    %cst_70 = arith.constant dense<0.000000e+00> : vector<16x128xf32>
    %184 = tpu.matmul %183, %18, %cst_70 {dimension_numbers = #tpu.dot_dimension_numbers<[1], [0], [0], [1], [0, 0, 1, 1], [], []>} : vector<16x128xf32>, vector<128x128xf32>, vector<16x128xf32> -> vector<16x128xf32>
    %185 = vector.extract_strided_slice %184 {offsets = [0, 0], sizes = [8, 128], strides = [1, 1]} : vector<16x128xf32> to vector<8x128xf32>
    %186 = vector.extract_strided_slice %184 {offsets = [8, 0], sizes = [8, 128], strides = [1, 1]} : vector<16x128xf32> to vector<8x128xf32>
    %187 = arith.mulf %185, %185 : vector<8x128xf32>
    %188 = arith.subf %186, %187 : vector<8x128xf32>
    %cst_71 = arith.constant 0.000000e+00 : f32
    %189 = vector.broadcast %cst_71 : f32 to vector<8x128xf32>
    %190 = arith.maximumf %188, %189 : vector<8x128xf32>
    %cst_72 = arith.constant 9.99999974E-6 : f32
    %191 = vector.broadcast %cst_72 : f32 to vector<8x128xf32>
    %192 = arith.addf %190, %191 : vector<8x128xf32>
    %193 = arith.mulf %192, %7 : vector<8x128xf32>
    %194 = math.rsqrt %193 : vector<8x128xf32>
    %195 = arith.subf %181, %185 : vector<8x128xf32>
    %196 = arith.mulf %195, %194 : vector<8x128xf32>
    %197 = arith.negf %196 : vector<8x128xf32>
    %198 = math.exp %197 : vector<8x128xf32>
    %cst_73 = arith.constant 1.000000e+00 : f32
    %199 = vector.broadcast %cst_73 : f32 to vector<8x128xf32>
    %200 = arith.addf %199, %198 : vector<8x128xf32>
    %201 = arith.divf %199, %200 : vector<8x128xf32>
    %202 = arith.mulf %201, %12 : vector<8x128xf32>
    %203 = arith.addf %202, %17 : vector<8x128xf32>
    %204 = vector.extract_strided_slice %203 {offsets = [0, 0], sizes = [8, 32], strides = [1, 1]} : vector<8x128xf32> to vector<8x32xf32>
    %205 = vector.extract_strided_slice %203 {offsets = [0, 32], sizes = [8, 32], strides = [1, 1]} : vector<8x128xf32> to vector<8x32xf32>
    %206 = vector.extract_strided_slice %203 {offsets = [0, 64], sizes = [8, 32], strides = [1, 1]} : vector<8x128xf32> to vector<8x32xf32>
    %207 = vector.extract_strided_slice %203 {offsets = [0, 96], sizes = [8, 32], strides = [1, 1]} : vector<8x128xf32> to vector<8x32xf32>
    %208 = arith.mulf %205, %168 : vector<8x32xf32>
    %209 = arith.mulf %204, %207 : vector<8x32xf32>
    %210 = arith.addf %208, %209 : vector<8x32xf32>
    %211 = math.tanh %210 : vector<8x32xf32>
    %212 = arith.mulf %211, %206 : vector<8x32xf32>
    %213 = arith.index_cast %c3_i32 : i32 to index
    %c0_74 = arith.constant 0 : index
    %c0_75 = arith.constant 0 : index
    %214 = vector.load %arg13[%213, %c0_74, %c0_75] : memref<8x8x32xf32, #tpu.memory_space<vmem>>, vector<1x8x32xf32>
    %215 = vector.shape_cast %214 : vector<1x8x32xf32> to vector<8x32xf32>
    %216 = vector.shape_cast %212 : vector<8x32xf32> to vector<1x8x32xf32>
    tpu.vector_store %arg13[%213, %c0_74, %c0_75], %216 {strides = array<i32>} : memref<8x8x32xf32, #tpu.memory_space<vmem>>, vector<1x8x32xf32>,
    %217 = arith.addf %175, %212 : vector<8x32xf32>
    %c4_i32 = arith.constant 4 : i32
    %218 = tpu.concatenate %212, %210 in 1 : vector<8x32xf32>, vector<8x32xf32> -> vector<8x64xf32>
    %219 = arith.index_cast %c4_i32 : i32 to index
    %c0_76 = arith.constant 0 : index
    %c0_77 = arith.constant 0 : index
    %220 = vector.load %arg14[%219, %c0_76, %c0_77] : memref<8x8x128xf32, #tpu.memory_space<vmem>>, vector<1x8x128xf32>
    %221 = vector.shape_cast %220 : vector<1x8x128xf32> to vector<8x128xf32>
    %cst_78 = arith.constant dense<0.000000e+00> : vector<8x128xf32>
    %222 = tpu.matmul %218, %30, %cst_78 {dimension_numbers = #tpu.dot_dimension_numbers<[1], [0], [0], [1], [0, 0, 1, 1], [], []>} : vector<8x64xf32>, vector<64x128xf32>, vector<8x128xf32> -> vector<8x128xf32>
    %223 = arith.addf %221, %222 : vector<8x128xf32>
    %224 = arith.mulf %223, %223 : vector<8x128xf32>
    %225 = tpu.concatenate %223, %224 in 0 : vector<8x128xf32>, vector<8x128xf32> -> vector<16x128xf32>
    %cst_79 = arith.constant dense<0.000000e+00> : vector<16x128xf32>
    %226 = tpu.matmul %225, %18, %cst_79 {dimension_numbers = #tpu.dot_dimension_numbers<[1], [0], [0], [1], [0, 0, 1, 1], [], []>} : vector<16x128xf32>, vector<128x128xf32>, vector<16x128xf32> -> vector<16x128xf32>
    %227 = vector.extract_strided_slice %226 {offsets = [0, 0], sizes = [8, 128], strides = [1, 1]} : vector<16x128xf32> to vector<8x128xf32>
    %228 = vector.extract_strided_slice %226 {offsets = [8, 0], sizes = [8, 128], strides = [1, 1]} : vector<16x128xf32> to vector<8x128xf32>
    %229 = arith.mulf %227, %227 : vector<8x128xf32>
    %230 = arith.subf %228, %229 : vector<8x128xf32>
    %cst_80 = arith.constant 0.000000e+00 : f32
    %231 = vector.broadcast %cst_80 : f32 to vector<8x128xf32>
    %232 = arith.maximumf %230, %231 : vector<8x128xf32>
    %cst_81 = arith.constant 9.99999974E-6 : f32
    %233 = vector.broadcast %cst_81 : f32 to vector<8x128xf32>
    %234 = arith.addf %232, %233 : vector<8x128xf32>
    %235 = arith.mulf %234, %7 : vector<8x128xf32>
    %236 = math.rsqrt %235 : vector<8x128xf32>
    %237 = arith.subf %223, %227 : vector<8x128xf32>
    %238 = arith.mulf %237, %236 : vector<8x128xf32>
    %239 = arith.negf %238 : vector<8x128xf32>
    %240 = math.exp %239 : vector<8x128xf32>
    %cst_82 = arith.constant 1.000000e+00 : f32
    %241 = vector.broadcast %cst_82 : f32 to vector<8x128xf32>
    %242 = arith.addf %241, %240 : vector<8x128xf32>
    %243 = arith.divf %241, %242 : vector<8x128xf32>
    %244 = arith.mulf %243, %12 : vector<8x128xf32>
    %245 = arith.addf %244, %17 : vector<8x128xf32>
    %246 = vector.extract_strided_slice %245 {offsets = [0, 0], sizes = [8, 32], strides = [1, 1]} : vector<8x128xf32> to vector<8x32xf32>
    %247 = vector.extract_strided_slice %245 {offsets = [0, 32], sizes = [8, 32], strides = [1, 1]} : vector<8x128xf32> to vector<8x32xf32>
    %248 = vector.extract_strided_slice %245 {offsets = [0, 64], sizes = [8, 32], strides = [1, 1]} : vector<8x128xf32> to vector<8x32xf32>
    %249 = vector.extract_strided_slice %245 {offsets = [0, 96], sizes = [8, 32], strides = [1, 1]} : vector<8x128xf32> to vector<8x32xf32>
    %250 = arith.mulf %247, %210 : vector<8x32xf32>
    %251 = arith.mulf %246, %249 : vector<8x32xf32>
    %252 = arith.addf %250, %251 : vector<8x32xf32>
    %253 = math.tanh %252 : vector<8x32xf32>
    %254 = arith.mulf %253, %248 : vector<8x32xf32>
    %255 = arith.index_cast %c4_i32 : i32 to index
    %c0_83 = arith.constant 0 : index
    %c0_84 = arith.constant 0 : index
    %256 = vector.load %arg13[%255, %c0_83, %c0_84] : memref<8x8x32xf32, #tpu.memory_space<vmem>>, vector<1x8x32xf32>
    %257 = vector.shape_cast %256 : vector<1x8x32xf32> to vector<8x32xf32>
    %258 = vector.shape_cast %254 : vector<8x32xf32> to vector<1x8x32xf32>
    tpu.vector_store %arg13[%255, %c0_83, %c0_84], %258 {strides = array<i32>} : memref<8x8x32xf32, #tpu.memory_space<vmem>>, vector<1x8x32xf32>,
    %259 = arith.addf %217, %254 : vector<8x32xf32>
    %c5_i32 = arith.constant 5 : i32
    %260 = tpu.concatenate %254, %252 in 1 : vector<8x32xf32>, vector<8x32xf32> -> vector<8x64xf32>
    %261 = arith.index_cast %c5_i32 : i32 to index
    %c0_85 = arith.constant 0 : index
    %c0_86 = arith.constant 0 : index
    %262 = vector.load %arg14[%261, %c0_85, %c0_86] : memref<8x8x128xf32, #tpu.memory_space<vmem>>, vector<1x8x128xf32>
    %263 = vector.shape_cast %262 : vector<1x8x128xf32> to vector<8x128xf32>
    %cst_87 = arith.constant dense<0.000000e+00> : vector<8x128xf32>
    %264 = tpu.matmul %260, %30, %cst_87 {dimension_numbers = #tpu.dot_dimension_numbers<[1], [0], [0], [1], [0, 0, 1, 1], [], []>} : vector<8x64xf32>, vector<64x128xf32>, vector<8x128xf32> -> vector<8x128xf32>
    %265 = arith.addf %263, %264 : vector<8x128xf32>
    %266 = arith.mulf %265, %265 : vector<8x128xf32>
    %267 = tpu.concatenate %265, %266 in 0 : vector<8x128xf32>, vector<8x128xf32> -> vector<16x128xf32>
    %cst_88 = arith.constant dense<0.000000e+00> : vector<16x128xf32>
    %268 = tpu.matmul %267, %18, %cst_88 {dimension_numbers = #tpu.dot_dimension_numbers<[1], [0], [0], [1], [0, 0, 1, 1], [], []>} : vector<16x128xf32>, vector<128x128xf32>, vector<16x128xf32> -> vector<16x128xf32>
    %269 = vector.extract_strided_slice %268 {offsets = [0, 0], sizes = [8, 128], strides = [1, 1]} : vector<16x128xf32> to vector<8x128xf32>
    %270 = vector.extract_strided_slice %268 {offsets = [8, 0], sizes = [8, 128], strides = [1, 1]} : vector<16x128xf32> to vector<8x128xf32>
    %271 = arith.mulf %269, %269 : vector<8x128xf32>
    %272 = arith.subf %270, %271 : vector<8x128xf32>
    %cst_89 = arith.constant 0.000000e+00 : f32
    %273 = vector.broadcast %cst_89 : f32 to vector<8x128xf32>
    %274 = arith.maximumf %272, %273 : vector<8x128xf32>
    %cst_90 = arith.constant 9.99999974E-6 : f32
    %275 = vector.broadcast %cst_90 : f32 to vector<8x128xf32>
    %276 = arith.addf %274, %275 : vector<8x128xf32>
    %277 = arith.mulf %276, %7 : vector<8x128xf32>
    %278 = math.rsqrt %277 : vector<8x128xf32>
    %279 = arith.subf %265, %269 : vector<8x128xf32>
    %280 = arith.mulf %279, %278 : vector<8x128xf32>
    %281 = arith.negf %280 : vector<8x128xf32>
    %282 = math.exp %281 : vector<8x128xf32>
    %cst_91 = arith.constant 1.000000e+00 : f32
    %283 = vector.broadcast %cst_91 : f32 to vector<8x128xf32>
    %284 = arith.addf %283, %282 : vector<8x128xf32>
    %285 = arith.divf %283, %284 : vector<8x128xf32>
    %286 = arith.mulf %285, %12 : vector<8x128xf32>
    %287 = arith.addf %286, %17 : vector<8x128xf32>
    %288 = vector.extract_strided_slice %287 {offsets = [0, 0], sizes = [8, 32], strides = [1, 1]} : vector<8x128xf32> to vector<8x32xf32>
    %289 = vector.extract_strided_slice %287 {offsets = [0, 32], sizes = [8, 32], strides = [1, 1]} : vector<8x128xf32> to vector<8x32xf32>
    %290 = vector.extract_strided_slice %287 {offsets = [0, 64], sizes = [8, 32], strides = [1, 1]} : vector<8x128xf32> to vector<8x32xf32>
    %291 = vector.extract_strided_slice %287 {offsets = [0, 96], sizes = [8, 32], strides = [1, 1]} : vector<8x128xf32> to vector<8x32xf32>
    %292 = arith.mulf %289, %252 : vector<8x32xf32>
    %293 = arith.mulf %288, %291 : vector<8x32xf32>
    %294 = arith.addf %292, %293 : vector<8x32xf32>
    %295 = math.tanh %294 : vector<8x32xf32>
    %296 = arith.mulf %295, %290 : vector<8x32xf32>
    %297 = arith.index_cast %c5_i32 : i32 to index
    %c0_92 = arith.constant 0 : index
    %c0_93 = arith.constant 0 : index
    %298 = vector.load %arg13[%297, %c0_92, %c0_93] : memref<8x8x32xf32, #tpu.memory_space<vmem>>, vector<1x8x32xf32>
    %299 = vector.shape_cast %298 : vector<1x8x32xf32> to vector<8x32xf32>
    %300 = vector.shape_cast %296 : vector<8x32xf32> to vector<1x8x32xf32>
    tpu.vector_store %arg13[%297, %c0_92, %c0_93], %300 {strides = array<i32>} : memref<8x8x32xf32, #tpu.memory_space<vmem>>, vector<1x8x32xf32>,
    %301 = arith.addf %259, %296 : vector<8x32xf32>
    %c6_i32 = arith.constant 6 : i32
    %302 = tpu.concatenate %296, %294 in 1 : vector<8x32xf32>, vector<8x32xf32> -> vector<8x64xf32>
    %303 = arith.index_cast %c6_i32 : i32 to index
    %c0_94 = arith.constant 0 : index
    %c0_95 = arith.constant 0 : index
    %304 = vector.load %arg14[%303, %c0_94, %c0_95] : memref<8x8x128xf32, #tpu.memory_space<vmem>>, vector<1x8x128xf32>
    %305 = vector.shape_cast %304 : vector<1x8x128xf32> to vector<8x128xf32>
    %cst_96 = arith.constant dense<0.000000e+00> : vector<8x128xf32>
    %306 = tpu.matmul %302, %30, %cst_96 {dimension_numbers = #tpu.dot_dimension_numbers<[1], [0], [0], [1], [0, 0, 1, 1], [], []>} : vector<8x64xf32>, vector<64x128xf32>, vector<8x128xf32> -> vector<8x128xf32>
    %307 = arith.addf %305, %306 : vector<8x128xf32>
    %308 = arith.mulf %307, %307 : vector<8x128xf32>
    %309 = tpu.concatenate %307, %308 in 0 : vector<8x128xf32>, vector<8x128xf32> -> vector<16x128xf32>
    %cst_97 = arith.constant dense<0.000000e+00> : vector<16x128xf32>
    %310 = tpu.matmul %309, %18, %cst_97 {dimension_numbers = #tpu.dot_dimension_numbers<[1], [0], [0], [1], [0, 0, 1, 1], [], []>} : vector<16x128xf32>, vector<128x128xf32>, vector<16x128xf32> -> vector<16x128xf32>
    %311 = vector.extract_strided_slice %310 {offsets = [0, 0], sizes = [8, 128], strides = [1, 1]} : vector<16x128xf32> to vector<8x128xf32>
    %312 = vector.extract_strided_slice %310 {offsets = [8, 0], sizes = [8, 128], strides = [1, 1]} : vector<16x128xf32> to vector<8x128xf32>
    %313 = arith.mulf %311, %311 : vector<8x128xf32>
    %314 = arith.subf %312, %313 : vector<8x128xf32>
    %cst_98 = arith.constant 0.000000e+00 : f32
    %315 = vector.broadcast %cst_98 : f32 to vector<8x128xf32>
    %316 = arith.maximumf %314, %315 : vector<8x128xf32>
    %cst_99 = arith.constant 9.99999974E-6 : f32
    %317 = vector.broadcast %cst_99 : f32 to vector<8x128xf32>
    %318 = arith.addf %316, %317 : vector<8x128xf32>
    %319 = arith.mulf %318, %7 : vector<8x128xf32>
    %320 = math.rsqrt %319 : vector<8x128xf32>
    %321 = arith.subf %307, %311 : vector<8x128xf32>
    %322 = arith.mulf %321, %320 : vector<8x128xf32>
    %323 = arith.negf %322 : vector<8x128xf32>
    %324 = math.exp %323 : vector<8x128xf32>
    %cst_100 = arith.constant 1.000000e+00 : f32
    %325 = vector.broadcast %cst_100 : f32 to vector<8x128xf32>
    %326 = arith.addf %325, %324 : vector<8x128xf32>
    %327 = arith.divf %325, %326 : vector<8x128xf32>
    %328 = arith.mulf %327, %12 : vector<8x128xf32>
    %329 = arith.addf %328, %17 : vector<8x128xf32>
    %330 = vector.extract_strided_slice %329 {offsets = [0, 0], sizes = [8, 32], strides = [1, 1]} : vector<8x128xf32> to vector<8x32xf32>
    %331 = vector.extract_strided_slice %329 {offsets = [0, 32], sizes = [8, 32], strides = [1, 1]} : vector<8x128xf32> to vector<8x32xf32>
    %332 = vector.extract_strided_slice %329 {offsets = [0, 64], sizes = [8, 32], strides = [1, 1]} : vector<8x128xf32> to vector<8x32xf32>
    %333 = vector.extract_strided_slice %329 {offsets = [0, 96], sizes = [8, 32], strides = [1, 1]} : vector<8x128xf32> to vector<8x32xf32>
    %334 = arith.mulf %331, %294 : vector<8x32xf32>
    %335 = arith.mulf %330, %333 : vector<8x32xf32>
    %336 = arith.addf %334, %335 : vector<8x32xf32>
    %337 = math.tanh %336 : vector<8x32xf32>
    %338 = arith.mulf %337, %332 : vector<8x32xf32>
    %339 = arith.index_cast %c6_i32 : i32 to index
    %c0_101 = arith.constant 0 : index
    %c0_102 = arith.constant 0 : index
    %340 = vector.load %arg13[%339, %c0_101, %c0_102] : memref<8x8x32xf32, #tpu.memory_space<vmem>>, vector<1x8x32xf32>
    %341 = vector.shape_cast %340 : vector<1x8x32xf32> to vector<8x32xf32>
    %342 = vector.shape_cast %338 : vector<8x32xf32> to vector<1x8x32xf32>
    tpu.vector_store %arg13[%339, %c0_101, %c0_102], %342 {strides = array<i32>} : memref<8x8x32xf32, #tpu.memory_space<vmem>>, vector<1x8x32xf32>,
    %343 = arith.addf %301, %338 : vector<8x32xf32>
    %c7_i32 = arith.constant 7 : i32
    %344 = tpu.concatenate %338, %336 in 1 : vector<8x32xf32>, vector<8x32xf32> -> vector<8x64xf32>
    %345 = arith.index_cast %c7_i32 : i32 to index
    %c0_103 = arith.constant 0 : index
    %c0_104 = arith.constant 0 : index
    %346 = vector.load %arg14[%345, %c0_103, %c0_104] : memref<8x8x128xf32, #tpu.memory_space<vmem>>, vector<1x8x128xf32>
    %347 = vector.shape_cast %346 : vector<1x8x128xf32> to vector<8x128xf32>
    %cst_105 = arith.constant dense<0.000000e+00> : vector<8x128xf32>
    %348 = tpu.matmul %344, %30, %cst_105 {dimension_numbers = #tpu.dot_dimension_numbers<[1], [0], [0], [1], [0, 0, 1, 1], [], []>} : vector<8x64xf32>, vector<64x128xf32>, vector<8x128xf32> -> vector<8x128xf32>
    %349 = arith.addf %347, %348 : vector<8x128xf32>
    %350 = arith.mulf %349, %349 : vector<8x128xf32>
    %351 = tpu.concatenate %349, %350 in 0 : vector<8x128xf32>, vector<8x128xf32> -> vector<16x128xf32>
    %cst_106 = arith.constant dense<0.000000e+00> : vector<16x128xf32>
    %352 = tpu.matmul %351, %18, %cst_106 {dimension_numbers = #tpu.dot_dimension_numbers<[1], [0], [0], [1], [0, 0, 1, 1], [], []>} : vector<16x128xf32>, vector<128x128xf32>, vector<16x128xf32> -> vector<16x128xf32>
    %353 = vector.extract_strided_slice %352 {offsets = [0, 0], sizes = [8, 128], strides = [1, 1]} : vector<16x128xf32> to vector<8x128xf32>
    %354 = vector.extract_strided_slice %352 {offsets = [8, 0], sizes = [8, 128], strides = [1, 1]} : vector<16x128xf32> to vector<8x128xf32>
    %355 = arith.mulf %353, %353 : vector<8x128xf32>
    %356 = arith.subf %354, %355 : vector<8x128xf32>
    %cst_107 = arith.constant 0.000000e+00 : f32
    %357 = vector.broadcast %cst_107 : f32 to vector<8x128xf32>
    %358 = arith.maximumf %356, %357 : vector<8x128xf32>
    %cst_108 = arith.constant 9.99999974E-6 : f32
    %359 = vector.broadcast %cst_108 : f32 to vector<8x128xf32>
    %360 = arith.addf %358, %359 : vector<8x128xf32>
    %361 = arith.mulf %360, %7 : vector<8x128xf32>
    %362 = math.rsqrt %361 : vector<8x128xf32>
    %363 = arith.subf %349, %353 : vector<8x128xf32>
    %364 = arith.mulf %363, %362 : vector<8x128xf32>
    %365 = arith.negf %364 : vector<8x128xf32>
    %366 = math.exp %365 : vector<8x128xf32>
    %cst_109 = arith.constant 1.000000e+00 : f32
    %367 = vector.broadcast %cst_109 : f32 to vector<8x128xf32>
    %368 = arith.addf %367, %366 : vector<8x128xf32>
    %369 = arith.divf %367, %368 : vector<8x128xf32>
    %370 = arith.mulf %369, %12 : vector<8x128xf32>
    %371 = arith.addf %370, %17 : vector<8x128xf32>
    %372 = vector.extract_strided_slice %371 {offsets = [0, 0], sizes = [8, 32], strides = [1, 1]} : vector<8x128xf32> to vector<8x32xf32>
    %373 = vector.extract_strided_slice %371 {offsets = [0, 32], sizes = [8, 32], strides = [1, 1]} : vector<8x128xf32> to vector<8x32xf32>
    %374 = vector.extract_strided_slice %371 {offsets = [0, 64], sizes = [8, 32], strides = [1, 1]} : vector<8x128xf32> to vector<8x32xf32>
    %375 = vector.extract_strided_slice %371 {offsets = [0, 96], sizes = [8, 32], strides = [1, 1]} : vector<8x128xf32> to vector<8x32xf32>
    %376 = arith.mulf %373, %336 : vector<8x32xf32>
    %377 = arith.mulf %372, %375 : vector<8x32xf32>
    %378 = arith.addf %376, %377 : vector<8x32xf32>
    %379 = math.tanh %378 : vector<8x32xf32>
    %380 = arith.mulf %379, %374 : vector<8x32xf32>
    %381 = arith.index_cast %c7_i32 : i32 to index
    %c0_110 = arith.constant 0 : index
    %c0_111 = arith.constant 0 : index
    %382 = vector.load %arg13[%381, %c0_110, %c0_111] : memref<8x8x32xf32, #tpu.memory_space<vmem>>, vector<1x8x32xf32>
    %383 = vector.shape_cast %382 : vector<1x8x32xf32> to vector<8x32xf32>
    %384 = vector.shape_cast %380 : vector<8x32xf32> to vector<1x8x32xf32>
    tpu.vector_store %arg13[%381, %c0_110, %c0_111], %384 {strides = array<i32>} : memref<8x8x32xf32, #tpu.memory_space<vmem>>, vector<1x8x32xf32>,
    %385 = arith.addf %343, %380 : vector<8x32xf32>
    %c8_i32 = arith.constant 8 : i32
    %c1 = arith.constant 1 : index
    %c0_112 = arith.constant 0 : index
    %c0_113 = arith.constant 0 : index
    %386 = vector.load %arg5[%c1, %c0_112, %c0_113] : memref<2x64x128xf32, #tpu.memory_space<vmem>>, vector<1x64x128xf32>
    %387 = vector.shape_cast %386 : vector<1x64x128xf32> to vector<64x128xf32>
    %c1_114 = arith.constant 1 : index
    %c0_115 = arith.constant 0 : index
    %c0_116 = arith.constant 0 : index
    %388 = vector.load %arg7[%c1_114, %c0_115, %c0_116] : memref<2x1x32xf32, #tpu.memory_space<vmem>>, vector<1x1x32xf32>
    %389 = vector.shape_cast %388 : vector<1x1x32xf32> to vector<1x32xf32>
    %390 = vector.shape_cast %389 : vector<1x32xf32> to vector<1x32xf32>
    %391 = vector.broadcast %390 : vector<1x32xf32> to vector<8x32xf32>
    %c1_117 = arith.constant 1 : index
    %c0_118 = arith.constant 0 : index
    %c0_119 = arith.constant 0 : index
    %392 = vector.load %arg8[%c1_117, %c0_118, %c0_119] : memref<2x1x32xf32, #tpu.memory_space<vmem>>, vector<1x1x32xf32>
    %393 = vector.shape_cast %392 : vector<1x1x32xf32> to vector<1x32xf32>
    %394 = vector.shape_cast %393 : vector<1x32xf32> to vector<1x32xf32>
    %395 = vector.broadcast %394 : vector<1x32xf32> to vector<8x32xf32>
    %c0_120 = arith.constant 0 : index
    %c0_121 = arith.constant 0 : index
    %c0_122 = arith.constant 0 : index
    %396 = vector.load %arg13[%c0_120, %c0_121, %c0_122] : memref<8x8x32xf32, #tpu.memory_space<vmem>>, vector<8x8x32xf32>
    %397 = vector.shape_cast %396 : vector<8x8x32xf32> to vector<64x32xf32>
    %c1_123 = arith.constant 1 : index
    %c0_124 = arith.constant 0 : index
    %c0_125 = arith.constant 0 : index
    %398 = vector.load %arg4[%c1_123, %c0_124, %c0_125] : memref<2x32x128xf32, #tpu.memory_space<vmem>>, vector<1x32x128xf32>
    %399 = vector.shape_cast %398 : vector<1x32x128xf32> to vector<32x128xf32>
    %cst_126 = arith.constant dense<0.000000e+00> : vector<64x128xf32>
    %400 = tpu.matmul %397, %399, %cst_126 {dimension_numbers = #tpu.dot_dimension_numbers<[1], [0], [0], [1], [0, 0, 1, 1], [], []>} : vector<64x32xf32>, vector<32x128xf32>, vector<64x128xf32> -> vector<64x128xf32>
    %c1_127 = arith.constant 1 : index
    %c0_128 = arith.constant 0 : index
    %c0_129 = arith.constant 0 : index
    %401 = vector.load %arg6[%c1_127, %c0_128, %c0_129] : memref<2x1x128xf32, #tpu.memory_space<vmem>>, vector<1x1x128xf32>
    %402 = vector.shape_cast %401 : vector<1x1x128xf32> to vector<1x128xf32>
    %403 = vector.broadcast %402 : vector<1x128xf32> to vector<64x128xf32>
    %404 = arith.addf %400, %403 : vector<64x128xf32>
    %405 = vector.shape_cast %404 : vector<64x128xf32> to vector<8x8x128xf32>
    %c0_130 = arith.constant 0 : index
    %c0_131 = arith.constant 0 : index
    %c0_132 = arith.constant 0 : index
    %406 = vector.load %arg14[%c0_130, %c0_131, %c0_132] : memref<8x8x128xf32, #tpu.memory_space<vmem>>, vector<8x8x128xf32>
    tpu.vector_store %arg14[%c0_130, %c0_131, %c0_132], %405 {strides = array<i32>} : memref<8x8x128xf32, #tpu.memory_space<vmem>>, vector<8x8x128xf32>,
    %c0_i32_133 = arith.constant 0 : i32
    %407 = tpu.concatenate %391, %395 in 1 : vector<8x32xf32>, vector<8x32xf32> -> vector<8x64xf32>
    %408 = arith.index_cast %c0_i32_133 : i32 to index
    %c0_134 = arith.constant 0 : index
    %c0_135 = arith.constant 0 : index
    %409 = vector.load %arg14[%408, %c0_134, %c0_135] : memref<8x8x128xf32, #tpu.memory_space<vmem>>, vector<1x8x128xf32>
    %410 = vector.shape_cast %409 : vector<1x8x128xf32> to vector<8x128xf32>
    %cst_136 = arith.constant dense<0.000000e+00> : vector<8x128xf32>
    %411 = tpu.matmul %407, %387, %cst_136 {dimension_numbers = #tpu.dot_dimension_numbers<[1], [0], [0], [1], [0, 0, 1, 1], [], []>} : vector<8x64xf32>, vector<64x128xf32>, vector<8x128xf32> -> vector<8x128xf32>
    %412 = arith.addf %410, %411 : vector<8x128xf32>
    %413 = arith.mulf %412, %412 : vector<8x128xf32>
    %414 = tpu.concatenate %412, %413 in 0 : vector<8x128xf32>, vector<8x128xf32> -> vector<16x128xf32>
    %cst_137 = arith.constant dense<0.000000e+00> : vector<16x128xf32>
    %415 = tpu.matmul %414, %18, %cst_137 {dimension_numbers = #tpu.dot_dimension_numbers<[1], [0], [0], [1], [0, 0, 1, 1], [], []>} : vector<16x128xf32>, vector<128x128xf32>, vector<16x128xf32> -> vector<16x128xf32>
    %416 = vector.extract_strided_slice %415 {offsets = [0, 0], sizes = [8, 128], strides = [1, 1]} : vector<16x128xf32> to vector<8x128xf32>
    %417 = vector.extract_strided_slice %415 {offsets = [8, 0], sizes = [8, 128], strides = [1, 1]} : vector<16x128xf32> to vector<8x128xf32>
    %418 = arith.mulf %416, %416 : vector<8x128xf32>
    %419 = arith.subf %417, %418 : vector<8x128xf32>
    %cst_138 = arith.constant 0.000000e+00 : f32
    %420 = vector.broadcast %cst_138 : f32 to vector<8x128xf32>
    %421 = arith.maximumf %419, %420 : vector<8x128xf32>
    %cst_139 = arith.constant 9.99999974E-6 : f32
    %422 = vector.broadcast %cst_139 : f32 to vector<8x128xf32>
    %423 = arith.addf %421, %422 : vector<8x128xf32>
    %424 = arith.mulf %423, %7 : vector<8x128xf32>
    %425 = math.rsqrt %424 : vector<8x128xf32>
    %426 = arith.subf %412, %416 : vector<8x128xf32>
    %427 = arith.mulf %426, %425 : vector<8x128xf32>
    %428 = arith.negf %427 : vector<8x128xf32>
    %429 = math.exp %428 : vector<8x128xf32>
    %cst_140 = arith.constant 1.000000e+00 : f32
    %430 = vector.broadcast %cst_140 : f32 to vector<8x128xf32>
    %431 = arith.addf %430, %429 : vector<8x128xf32>
    %432 = arith.divf %430, %431 : vector<8x128xf32>
    %433 = arith.mulf %432, %12 : vector<8x128xf32>
    %434 = arith.addf %433, %17 : vector<8x128xf32>
    %435 = vector.extract_strided_slice %434 {offsets = [0, 0], sizes = [8, 32], strides = [1, 1]} : vector<8x128xf32> to vector<8x32xf32>
    %436 = vector.extract_strided_slice %434 {offsets = [0, 32], sizes = [8, 32], strides = [1, 1]} : vector<8x128xf32> to vector<8x32xf32>
    %437 = vector.extract_strided_slice %434 {offsets = [0, 64], sizes = [8, 32], strides = [1, 1]} : vector<8x128xf32> to vector<8x32xf32>
    %438 = vector.extract_strided_slice %434 {offsets = [0, 96], sizes = [8, 32], strides = [1, 1]} : vector<8x128xf32> to vector<8x32xf32>
    %439 = arith.mulf %436, %395 : vector<8x32xf32>
    %440 = arith.mulf %435, %438 : vector<8x32xf32>
    %441 = arith.addf %439, %440 : vector<8x32xf32>
    %442 = math.tanh %441 : vector<8x32xf32>
    %443 = arith.mulf %442, %437 : vector<8x32xf32>
    %444 = arith.index_cast %c0_i32_133 : i32 to index
    %c0_141 = arith.constant 0 : index
    %c0_142 = arith.constant 0 : index
    %445 = vector.load %arg13[%444, %c0_141, %c0_142] : memref<8x8x32xf32, #tpu.memory_space<vmem>>, vector<1x8x32xf32>
    %446 = vector.shape_cast %445 : vector<1x8x32xf32> to vector<8x32xf32>
    %447 = vector.shape_cast %443 : vector<8x32xf32> to vector<1x8x32xf32>
    tpu.vector_store %arg13[%444, %c0_141, %c0_142], %447 {strides = array<i32>} : memref<8x8x32xf32, #tpu.memory_space<vmem>>, vector<1x8x32xf32>,
    %448 = arith.addf %385, %443 : vector<8x32xf32>
    %c1_i32_143 = arith.constant 1 : i32
    %449 = tpu.concatenate %443, %441 in 1 : vector<8x32xf32>, vector<8x32xf32> -> vector<8x64xf32>
    %450 = arith.index_cast %c1_i32_143 : i32 to index
    %c0_144 = arith.constant 0 : index
    %c0_145 = arith.constant 0 : index
    %451 = vector.load %arg14[%450, %c0_144, %c0_145] : memref<8x8x128xf32, #tpu.memory_space<vmem>>, vector<1x8x128xf32>
    %452 = vector.shape_cast %451 : vector<1x8x128xf32> to vector<8x128xf32>
    %cst_146 = arith.constant dense<0.000000e+00> : vector<8x128xf32>
    %453 = tpu.matmul %449, %387, %cst_146 {dimension_numbers = #tpu.dot_dimension_numbers<[1], [0], [0], [1], [0, 0, 1, 1], [], []>} : vector<8x64xf32>, vector<64x128xf32>, vector<8x128xf32> -> vector<8x128xf32>
    %454 = arith.addf %452, %453 : vector<8x128xf32>
    %455 = arith.mulf %454, %454 : vector<8x128xf32>
    %456 = tpu.concatenate %454, %455 in 0 : vector<8x128xf32>, vector<8x128xf32> -> vector<16x128xf32>
    %cst_147 = arith.constant dense<0.000000e+00> : vector<16x128xf32>
    %457 = tpu.matmul %456, %18, %cst_147 {dimension_numbers = #tpu.dot_dimension_numbers<[1], [0], [0], [1], [0, 0, 1, 1], [], []>} : vector<16x128xf32>, vector<128x128xf32>, vector<16x128xf32> -> vector<16x128xf32>
    %458 = vector.extract_strided_slice %457 {offsets = [0, 0], sizes = [8, 128], strides = [1, 1]} : vector<16x128xf32> to vector<8x128xf32>
    %459 = vector.extract_strided_slice %457 {offsets = [8, 0], sizes = [8, 128], strides = [1, 1]} : vector<16x128xf32> to vector<8x128xf32>
    %460 = arith.mulf %458, %458 : vector<8x128xf32>
    %461 = arith.subf %459, %460 : vector<8x128xf32>
    %cst_148 = arith.constant 0.000000e+00 : f32
    %462 = vector.broadcast %cst_148 : f32 to vector<8x128xf32>
    %463 = arith.maximumf %461, %462 : vector<8x128xf32>
    %cst_149 = arith.constant 9.99999974E-6 : f32
    %464 = vector.broadcast %cst_149 : f32 to vector<8x128xf32>
    %465 = arith.addf %463, %464 : vector<8x128xf32>
    %466 = arith.mulf %465, %7 : vector<8x128xf32>
    %467 = math.rsqrt %466 : vector<8x128xf32>
    %468 = arith.subf %454, %458 : vector<8x128xf32>
    %469 = arith.mulf %468, %467 : vector<8x128xf32>
    %470 = arith.negf %469 : vector<8x128xf32>
    %471 = math.exp %470 : vector<8x128xf32>
    %cst_150 = arith.constant 1.000000e+00 : f32
    %472 = vector.broadcast %cst_150 : f32 to vector<8x128xf32>
    %473 = arith.addf %472, %471 : vector<8x128xf32>
    %474 = arith.divf %472, %473 : vector<8x128xf32>
    %475 = arith.mulf %474, %12 : vector<8x128xf32>
    %476 = arith.addf %475, %17 : vector<8x128xf32>
    %477 = vector.extract_strided_slice %476 {offsets = [0, 0], sizes = [8, 32], strides = [1, 1]} : vector<8x128xf32> to vector<8x32xf32>
    %478 = vector.extract_strided_slice %476 {offsets = [0, 32], sizes = [8, 32], strides = [1, 1]} : vector<8x128xf32> to vector<8x32xf32>
    %479 = vector.extract_strided_slice %476 {offsets = [0, 64], sizes = [8, 32], strides = [1, 1]} : vector<8x128xf32> to vector<8x32xf32>
    %480 = vector.extract_strided_slice %476 {offsets = [0, 96], sizes = [8, 32], strides = [1, 1]} : vector<8x128xf32> to vector<8x32xf32>
    %481 = arith.mulf %478, %441 : vector<8x32xf32>
    %482 = arith.mulf %477, %480 : vector<8x32xf32>
    %483 = arith.addf %481, %482 : vector<8x32xf32>
    %484 = math.tanh %483 : vector<8x32xf32>
    %485 = arith.mulf %484, %479 : vector<8x32xf32>
    %486 = arith.index_cast %c1_i32_143 : i32 to index
    %c0_151 = arith.constant 0 : index
    %c0_152 = arith.constant 0 : index
    %487 = vector.load %arg13[%486, %c0_151, %c0_152] : memref<8x8x32xf32, #tpu.memory_space<vmem>>, vector<1x8x32xf32>
    %488 = vector.shape_cast %487 : vector<1x8x32xf32> to vector<8x32xf32>
    %489 = vector.shape_cast %485 : vector<8x32xf32> to vector<1x8x32xf32>
    tpu.vector_store %arg13[%486, %c0_151, %c0_152], %489 {strides = array<i32>} : memref<8x8x32xf32, #tpu.memory_space<vmem>>, vector<1x8x32xf32>,
    %490 = arith.addf %448, %485 : vector<8x32xf32>
    %c2_i32_153 = arith.constant 2 : i32
    %491 = tpu.concatenate %485, %483 in 1 : vector<8x32xf32>, vector<8x32xf32> -> vector<8x64xf32>
    %492 = arith.index_cast %c2_i32_153 : i32 to index
    %c0_154 = arith.constant 0 : index
    %c0_155 = arith.constant 0 : index
    %493 = vector.load %arg14[%492, %c0_154, %c0_155] : memref<8x8x128xf32, #tpu.memory_space<vmem>>, vector<1x8x128xf32>
    %494 = vector.shape_cast %493 : vector<1x8x128xf32> to vector<8x128xf32>
    %cst_156 = arith.constant dense<0.000000e+00> : vector<8x128xf32>
    %495 = tpu.matmul %491, %387, %cst_156 {dimension_numbers = #tpu.dot_dimension_numbers<[1], [0], [0], [1], [0, 0, 1, 1], [], []>} : vector<8x64xf32>, vector<64x128xf32>, vector<8x128xf32> -> vector<8x128xf32>
    %496 = arith.addf %494, %495 : vector<8x128xf32>
    %497 = arith.mulf %496, %496 : vector<8x128xf32>
    %498 = tpu.concatenate %496, %497 in 0 : vector<8x128xf32>, vector<8x128xf32> -> vector<16x128xf32>
    %cst_157 = arith.constant dense<0.000000e+00> : vector<16x128xf32>
    %499 = tpu.matmul %498, %18, %cst_157 {dimension_numbers = #tpu.dot_dimension_numbers<[1], [0], [0], [1], [0, 0, 1, 1], [], []>} : vector<16x128xf32>, vector<128x128xf32>, vector<16x128xf32> -> vector<16x128xf32>
    %500 = vector.extract_strided_slice %499 {offsets = [0, 0], sizes = [8, 128], strides = [1, 1]} : vector<16x128xf32> to vector<8x128xf32>
    %501 = vector.extract_strided_slice %499 {offsets = [8, 0], sizes = [8, 128], strides = [1, 1]} : vector<16x128xf32> to vector<8x128xf32>
    %502 = arith.mulf %500, %500 : vector<8x128xf32>
    %503 = arith.subf %501, %502 : vector<8x128xf32>
    %cst_158 = arith.constant 0.000000e+00 : f32
    %504 = vector.broadcast %cst_158 : f32 to vector<8x128xf32>
    %505 = arith.maximumf %503, %504 : vector<8x128xf32>
    %cst_159 = arith.constant 9.99999974E-6 : f32
    %506 = vector.broadcast %cst_159 : f32 to vector<8x128xf32>
    %507 = arith.addf %505, %506 : vector<8x128xf32>
    %508 = arith.mulf %507, %7 : vector<8x128xf32>
    %509 = math.rsqrt %508 : vector<8x128xf32>
    %510 = arith.subf %496, %500 : vector<8x128xf32>
    %511 = arith.mulf %510, %509 : vector<8x128xf32>
    %512 = arith.negf %511 : vector<8x128xf32>
    %513 = math.exp %512 : vector<8x128xf32>
    %cst_160 = arith.constant 1.000000e+00 : f32
    %514 = vector.broadcast %cst_160 : f32 to vector<8x128xf32>
    %515 = arith.addf %514, %513 : vector<8x128xf32>
    %516 = arith.divf %514, %515 : vector<8x128xf32>
    %517 = arith.mulf %516, %12 : vector<8x128xf32>
    %518 = arith.addf %517, %17 : vector<8x128xf32>
    %519 = vector.extract_strided_slice %518 {offsets = [0, 0], sizes = [8, 32], strides = [1, 1]} : vector<8x128xf32> to vector<8x32xf32>
    %520 = vector.extract_strided_slice %518 {offsets = [0, 32], sizes = [8, 32], strides = [1, 1]} : vector<8x128xf32> to vector<8x32xf32>
    %521 = vector.extract_strided_slice %518 {offsets = [0, 64], sizes = [8, 32], strides = [1, 1]} : vector<8x128xf32> to vector<8x32xf32>
    %522 = vector.extract_strided_slice %518 {offsets = [0, 96], sizes = [8, 32], strides = [1, 1]} : vector<8x128xf32> to vector<8x32xf32>
    %523 = arith.mulf %520, %483 : vector<8x32xf32>
    %524 = arith.mulf %519, %522 : vector<8x32xf32>
    %525 = arith.addf %523, %524 : vector<8x32xf32>
    %526 = math.tanh %525 : vector<8x32xf32>
    %527 = arith.mulf %526, %521 : vector<8x32xf32>
    %528 = arith.index_cast %c2_i32_153 : i32 to index
    %c0_161 = arith.constant 0 : index
    %c0_162 = arith.constant 0 : index
    %529 = vector.load %arg13[%528, %c0_161, %c0_162] : memref<8x8x32xf32, #tpu.memory_space<vmem>>, vector<1x8x32xf32>
    %530 = vector.shape_cast %529 : vector<1x8x32xf32> to vector<8x32xf32>
    %531 = vector.shape_cast %527 : vector<8x32xf32> to vector<1x8x32xf32>
    tpu.vector_store %arg13[%528, %c0_161, %c0_162], %531 {strides = array<i32>} : memref<8x8x32xf32, #tpu.memory_space<vmem>>, vector<1x8x32xf32>,
    %532 = arith.addf %490, %527 : vector<8x32xf32>
    %c3_i32_163 = arith.constant 3 : i32
    %533 = tpu.concatenate %527, %525 in 1 : vector<8x32xf32>, vector<8x32xf32> -> vector<8x64xf32>
    %534 = arith.index_cast %c3_i32_163 : i32 to index
    %c0_164 = arith.constant 0 : index
    %c0_165 = arith.constant 0 : index
    %535 = vector.load %arg14[%534, %c0_164, %c0_165] : memref<8x8x128xf32, #tpu.memory_space<vmem>>, vector<1x8x128xf32>
    %536 = vector.shape_cast %535 : vector<1x8x128xf32> to vector<8x128xf32>
    %cst_166 = arith.constant dense<0.000000e+00> : vector<8x128xf32>
    %537 = tpu.matmul %533, %387, %cst_166 {dimension_numbers = #tpu.dot_dimension_numbers<[1], [0], [0], [1], [0, 0, 1, 1], [], []>} : vector<8x64xf32>, vector<64x128xf32>, vector<8x128xf32> -> vector<8x128xf32>
    %538 = arith.addf %536, %537 : vector<8x128xf32>
    %539 = arith.mulf %538, %538 : vector<8x128xf32>
    %540 = tpu.concatenate %538, %539 in 0 : vector<8x128xf32>, vector<8x128xf32> -> vector<16x128xf32>
    %cst_167 = arith.constant dense<0.000000e+00> : vector<16x128xf32>
    %541 = tpu.matmul %540, %18, %cst_167 {dimension_numbers = #tpu.dot_dimension_numbers<[1], [0], [0], [1], [0, 0, 1, 1], [], []>} : vector<16x128xf32>, vector<128x128xf32>, vector<16x128xf32> -> vector<16x128xf32>
    %542 = vector.extract_strided_slice %541 {offsets = [0, 0], sizes = [8, 128], strides = [1, 1]} : vector<16x128xf32> to vector<8x128xf32>
    %543 = vector.extract_strided_slice %541 {offsets = [8, 0], sizes = [8, 128], strides = [1, 1]} : vector<16x128xf32> to vector<8x128xf32>
    %544 = arith.mulf %542, %542 : vector<8x128xf32>
    %545 = arith.subf %543, %544 : vector<8x128xf32>
    %cst_168 = arith.constant 0.000000e+00 : f32
    %546 = vector.broadcast %cst_168 : f32 to vector<8x128xf32>
    %547 = arith.maximumf %545, %546 : vector<8x128xf32>
    %cst_169 = arith.constant 9.99999974E-6 : f32
    %548 = vector.broadcast %cst_169 : f32 to vector<8x128xf32>
    %549 = arith.addf %547, %548 : vector<8x128xf32>
    %550 = arith.mulf %549, %7 : vector<8x128xf32>
    %551 = math.rsqrt %550 : vector<8x128xf32>
    %552 = arith.subf %538, %542 : vector<8x128xf32>
    %553 = arith.mulf %552, %551 : vector<8x128xf32>
    %554 = arith.negf %553 : vector<8x128xf32>
    %555 = math.exp %554 : vector<8x128xf32>
    %cst_170 = arith.constant 1.000000e+00 : f32
    %556 = vector.broadcast %cst_170 : f32 to vector<8x128xf32>
    %557 = arith.addf %556, %555 : vector<8x128xf32>
    %558 = arith.divf %556, %557 : vector<8x128xf32>
    %559 = arith.mulf %558, %12 : vector<8x128xf32>
    %560 = arith.addf %559, %17 : vector<8x128xf32>
    %561 = vector.extract_strided_slice %560 {offsets = [0, 0], sizes = [8, 32], strides = [1, 1]} : vector<8x128xf32> to vector<8x32xf32>
    %562 = vector.extract_strided_slice %560 {offsets = [0, 32], sizes = [8, 32], strides = [1, 1]} : vector<8x128xf32> to vector<8x32xf32>
    %563 = vector.extract_strided_slice %560 {offsets = [0, 64], sizes = [8, 32], strides = [1, 1]} : vector<8x128xf32> to vector<8x32xf32>
    %564 = vector.extract_strided_slice %560 {offsets = [0, 96], sizes = [8, 32], strides = [1, 1]} : vector<8x128xf32> to vector<8x32xf32>
    %565 = arith.mulf %562, %525 : vector<8x32xf32>
    %566 = arith.mulf %561, %564 : vector<8x32xf32>
    %567 = arith.addf %565, %566 : vector<8x32xf32>
    %568 = math.tanh %567 : vector<8x32xf32>
    %569 = arith.mulf %568, %563 : vector<8x32xf32>
    %570 = arith.index_cast %c3_i32_163 : i32 to index
    %c0_171 = arith.constant 0 : index
    %c0_172 = arith.constant 0 : index
    %571 = vector.load %arg13[%570, %c0_171, %c0_172] : memref<8x8x32xf32, #tpu.memory_space<vmem>>, vector<1x8x32xf32>
    %572 = vector.shape_cast %571 : vector<1x8x32xf32> to vector<8x32xf32>
    %573 = vector.shape_cast %569 : vector<8x32xf32> to vector<1x8x32xf32>
    tpu.vector_store %arg13[%570, %c0_171, %c0_172], %573 {strides = array<i32>} : memref<8x8x32xf32, #tpu.memory_space<vmem>>, vector<1x8x32xf32>,
    %574 = arith.addf %532, %569 : vector<8x32xf32>
    %c4_i32_173 = arith.constant 4 : i32
    %575 = tpu.concatenate %569, %567 in 1 : vector<8x32xf32>, vector<8x32xf32> -> vector<8x64xf32>
    %576 = arith.index_cast %c4_i32_173 : i32 to index
    %c0_174 = arith.constant 0 : index
    %c0_175 = arith.constant 0 : index
    %577 = vector.load %arg14[%576, %c0_174, %c0_175] : memref<8x8x128xf32, #tpu.memory_space<vmem>>, vector<1x8x128xf32>
    %578 = vector.shape_cast %577 : vector<1x8x128xf32> to vector<8x128xf32>
    %cst_176 = arith.constant dense<0.000000e+00> : vector<8x128xf32>
    %579 = tpu.matmul %575, %387, %cst_176 {dimension_numbers = #tpu.dot_dimension_numbers<[1], [0], [0], [1], [0, 0, 1, 1], [], []>} : vector<8x64xf32>, vector<64x128xf32>, vector<8x128xf32> -> vector<8x128xf32>
    %580 = arith.addf %578, %579 : vector<8x128xf32>
    %581 = arith.mulf %580, %580 : vector<8x128xf32>
    %582 = tpu.concatenate %580, %581 in 0 : vector<8x128xf32>, vector<8x128xf32> -> vector<16x128xf32>
    %cst_177 = arith.constant dense<0.000000e+00> : vector<16x128xf32>
    %583 = tpu.matmul %582, %18, %cst_177 {dimension_numbers = #tpu.dot_dimension_numbers<[1], [0], [0], [1], [0, 0, 1, 1], [], []>} : vector<16x128xf32>, vector<128x128xf32>, vector<16x128xf32> -> vector<16x128xf32>
    %584 = vector.extract_strided_slice %583 {offsets = [0, 0], sizes = [8, 128], strides = [1, 1]} : vector<16x128xf32> to vector<8x128xf32>
    %585 = vector.extract_strided_slice %583 {offsets = [8, 0], sizes = [8, 128], strides = [1, 1]} : vector<16x128xf32> to vector<8x128xf32>
    %586 = arith.mulf %584, %584 : vector<8x128xf32>
    %587 = arith.subf %585, %586 : vector<8x128xf32>
    %cst_178 = arith.constant 0.000000e+00 : f32
    %588 = vector.broadcast %cst_178 : f32 to vector<8x128xf32>
    %589 = arith.maximumf %587, %588 : vector<8x128xf32>
    %cst_179 = arith.constant 9.99999974E-6 : f32
    %590 = vector.broadcast %cst_179 : f32 to vector<8x128xf32>
    %591 = arith.addf %589, %590 : vector<8x128xf32>
    %592 = arith.mulf %591, %7 : vector<8x128xf32>
    %593 = math.rsqrt %592 : vector<8x128xf32>
    %594 = arith.subf %580, %584 : vector<8x128xf32>
    %595 = arith.mulf %594, %593 : vector<8x128xf32>
    %596 = arith.negf %595 : vector<8x128xf32>
    %597 = math.exp %596 : vector<8x128xf32>
    %cst_180 = arith.constant 1.000000e+00 : f32
    %598 = vector.broadcast %cst_180 : f32 to vector<8x128xf32>
    %599 = arith.addf %598, %597 : vector<8x128xf32>
    %600 = arith.divf %598, %599 : vector<8x128xf32>
    %601 = arith.mulf %600, %12 : vector<8x128xf32>
    %602 = arith.addf %601, %17 : vector<8x128xf32>
    %603 = vector.extract_strided_slice %602 {offsets = [0, 0], sizes = [8, 32], strides = [1, 1]} : vector<8x128xf32> to vector<8x32xf32>
    %604 = vector.extract_strided_slice %602 {offsets = [0, 32], sizes = [8, 32], strides = [1, 1]} : vector<8x128xf32> to vector<8x32xf32>
    %605 = vector.extract_strided_slice %602 {offsets = [0, 64], sizes = [8, 32], strides = [1, 1]} : vector<8x128xf32> to vector<8x32xf32>
    %606 = vector.extract_strided_slice %602 {offsets = [0, 96], sizes = [8, 32], strides = [1, 1]} : vector<8x128xf32> to vector<8x32xf32>
    %607 = arith.mulf %604, %567 : vector<8x32xf32>
    %608 = arith.mulf %603, %606 : vector<8x32xf32>
    %609 = arith.addf %607, %608 : vector<8x32xf32>
    %610 = math.tanh %609 : vector<8x32xf32>
    %611 = arith.mulf %610, %605 : vector<8x32xf32>
    %612 = arith.index_cast %c4_i32_173 : i32 to index
    %c0_181 = arith.constant 0 : index
    %c0_182 = arith.constant 0 : index
    %613 = vector.load %arg13[%612, %c0_181, %c0_182] : memref<8x8x32xf32, #tpu.memory_space<vmem>>, vector<1x8x32xf32>
    %614 = vector.shape_cast %613 : vector<1x8x32xf32> to vector<8x32xf32>
    %615 = vector.shape_cast %611 : vector<8x32xf32> to vector<1x8x32xf32>
    tpu.vector_store %arg13[%612, %c0_181, %c0_182], %615 {strides = array<i32>} : memref<8x8x32xf32, #tpu.memory_space<vmem>>, vector<1x8x32xf32>,
    %616 = arith.addf %574, %611 : vector<8x32xf32>
    %c5_i32_183 = arith.constant 5 : i32
    %617 = tpu.concatenate %611, %609 in 1 : vector<8x32xf32>, vector<8x32xf32> -> vector<8x64xf32>
    %618 = arith.index_cast %c5_i32_183 : i32 to index
    %c0_184 = arith.constant 0 : index
    %c0_185 = arith.constant 0 : index
    %619 = vector.load %arg14[%618, %c0_184, %c0_185] : memref<8x8x128xf32, #tpu.memory_space<vmem>>, vector<1x8x128xf32>
    %620 = vector.shape_cast %619 : vector<1x8x128xf32> to vector<8x128xf32>
    %cst_186 = arith.constant dense<0.000000e+00> : vector<8x128xf32>
    %621 = tpu.matmul %617, %387, %cst_186 {dimension_numbers = #tpu.dot_dimension_numbers<[1], [0], [0], [1], [0, 0, 1, 1], [], []>} : vector<8x64xf32>, vector<64x128xf32>, vector<8x128xf32> -> vector<8x128xf32>
    %622 = arith.addf %620, %621 : vector<8x128xf32>
    %623 = arith.mulf %622, %622 : vector<8x128xf32>
    %624 = tpu.concatenate %622, %623 in 0 : vector<8x128xf32>, vector<8x128xf32> -> vector<16x128xf32>
    %cst_187 = arith.constant dense<0.000000e+00> : vector<16x128xf32>
    %625 = tpu.matmul %624, %18, %cst_187 {dimension_numbers = #tpu.dot_dimension_numbers<[1], [0], [0], [1], [0, 0, 1, 1], [], []>} : vector<16x128xf32>, vector<128x128xf32>, vector<16x128xf32> -> vector<16x128xf32>
    %626 = vector.extract_strided_slice %625 {offsets = [0, 0], sizes = [8, 128], strides = [1, 1]} : vector<16x128xf32> to vector<8x128xf32>
    %627 = vector.extract_strided_slice %625 {offsets = [8, 0], sizes = [8, 128], strides = [1, 1]} : vector<16x128xf32> to vector<8x128xf32>
    %628 = arith.mulf %626, %626 : vector<8x128xf32>
    %629 = arith.subf %627, %628 : vector<8x128xf32>
    %cst_188 = arith.constant 0.000000e+00 : f32
    %630 = vector.broadcast %cst_188 : f32 to vector<8x128xf32>
    %631 = arith.maximumf %629, %630 : vector<8x128xf32>
    %cst_189 = arith.constant 9.99999974E-6 : f32
    %632 = vector.broadcast %cst_189 : f32 to vector<8x128xf32>
    %633 = arith.addf %631, %632 : vector<8x128xf32>
    %634 = arith.mulf %633, %7 : vector<8x128xf32>
    %635 = math.rsqrt %634 : vector<8x128xf32>
    %636 = arith.subf %622, %626 : vector<8x128xf32>
    %637 = arith.mulf %636, %635 : vector<8x128xf32>
    %638 = arith.negf %637 : vector<8x128xf32>
    %639 = math.exp %638 : vector<8x128xf32>
    %cst_190 = arith.constant 1.000000e+00 : f32
    %640 = vector.broadcast %cst_190 : f32 to vector<8x128xf32>
    %641 = arith.addf %640, %639 : vector<8x128xf32>
    %642 = arith.divf %640, %641 : vector<8x128xf32>
    %643 = arith.mulf %642, %12 : vector<8x128xf32>
    %644 = arith.addf %643, %17 : vector<8x128xf32>
    %645 = vector.extract_strided_slice %644 {offsets = [0, 0], sizes = [8, 32], strides = [1, 1]} : vector<8x128xf32> to vector<8x32xf32>
    %646 = vector.extract_strided_slice %644 {offsets = [0, 32], sizes = [8, 32], strides = [1, 1]} : vector<8x128xf32> to vector<8x32xf32>
    %647 = vector.extract_strided_slice %644 {offsets = [0, 64], sizes = [8, 32], strides = [1, 1]} : vector<8x128xf32> to vector<8x32xf32>
    %648 = vector.extract_strided_slice %644 {offsets = [0, 96], sizes = [8, 32], strides = [1, 1]} : vector<8x128xf32> to vector<8x32xf32>
    %649 = arith.mulf %646, %609 : vector<8x32xf32>
    %650 = arith.mulf %645, %648 : vector<8x32xf32>
    %651 = arith.addf %649, %650 : vector<8x32xf32>
    %652 = math.tanh %651 : vector<8x32xf32>
    %653 = arith.mulf %652, %647 : vector<8x32xf32>
    %654 = arith.index_cast %c5_i32_183 : i32 to index
    %c0_191 = arith.constant 0 : index
    %c0_192 = arith.constant 0 : index
    %655 = vector.load %arg13[%654, %c0_191, %c0_192] : memref<8x8x32xf32, #tpu.memory_space<vmem>>, vector<1x8x32xf32>
    %656 = vector.shape_cast %655 : vector<1x8x32xf32> to vector<8x32xf32>
    %657 = vector.shape_cast %653 : vector<8x32xf32> to vector<1x8x32xf32>
    tpu.vector_store %arg13[%654, %c0_191, %c0_192], %657 {strides = array<i32>} : memref<8x8x32xf32, #tpu.memory_space<vmem>>, vector<1x8x32xf32>,
    %658 = arith.addf %616, %653 : vector<8x32xf32>
    %c6_i32_193 = arith.constant 6 : i32
    %659 = tpu.concatenate %653, %651 in 1 : vector<8x32xf32>, vector<8x32xf32> -> vector<8x64xf32>
    %660 = arith.index_cast %c6_i32_193 : i32 to index
    %c0_194 = arith.constant 0 : index
    %c0_195 = arith.constant 0 : index
    %661 = vector.load %arg14[%660, %c0_194, %c0_195] : memref<8x8x128xf32, #tpu.memory_space<vmem>>, vector<1x8x128xf32>
    %662 = vector.shape_cast %661 : vector<1x8x128xf32> to vector<8x128xf32>
    %cst_196 = arith.constant dense<0.000000e+00> : vector<8x128xf32>
    %663 = tpu.matmul %659, %387, %cst_196 {dimension_numbers = #tpu.dot_dimension_numbers<[1], [0], [0], [1], [0, 0, 1, 1], [], []>} : vector<8x64xf32>, vector<64x128xf32>, vector<8x128xf32> -> vector<8x128xf32>
    %664 = arith.addf %662, %663 : vector<8x128xf32>
    %665 = arith.mulf %664, %664 : vector<8x128xf32>
    %666 = tpu.concatenate %664, %665 in 0 : vector<8x128xf32>, vector<8x128xf32> -> vector<16x128xf32>
    %cst_197 = arith.constant dense<0.000000e+00> : vector<16x128xf32>
    %667 = tpu.matmul %666, %18, %cst_197 {dimension_numbers = #tpu.dot_dimension_numbers<[1], [0], [0], [1], [0, 0, 1, 1], [], []>} : vector<16x128xf32>, vector<128x128xf32>, vector<16x128xf32> -> vector<16x128xf32>
    %668 = vector.extract_strided_slice %667 {offsets = [0, 0], sizes = [8, 128], strides = [1, 1]} : vector<16x128xf32> to vector<8x128xf32>
    %669 = vector.extract_strided_slice %667 {offsets = [8, 0], sizes = [8, 128], strides = [1, 1]} : vector<16x128xf32> to vector<8x128xf32>
    %670 = arith.mulf %668, %668 : vector<8x128xf32>
    %671 = arith.subf %669, %670 : vector<8x128xf32>
    %cst_198 = arith.constant 0.000000e+00 : f32
    %672 = vector.broadcast %cst_198 : f32 to vector<8x128xf32>
    %673 = arith.maximumf %671, %672 : vector<8x128xf32>
    %cst_199 = arith.constant 9.99999974E-6 : f32
    %674 = vector.broadcast %cst_199 : f32 to vector<8x128xf32>
    %675 = arith.addf %673, %674 : vector<8x128xf32>
    %676 = arith.mulf %675, %7 : vector<8x128xf32>
    %677 = math.rsqrt %676 : vector<8x128xf32>
    %678 = arith.subf %664, %668 : vector<8x128xf32>
    %679 = arith.mulf %678, %677 : vector<8x128xf32>
    %680 = arith.negf %679 : vector<8x128xf32>
    %681 = math.exp %680 : vector<8x128xf32>
    %cst_200 = arith.constant 1.000000e+00 : f32
    %682 = vector.broadcast %cst_200 : f32 to vector<8x128xf32>
    %683 = arith.addf %682, %681 : vector<8x128xf32>
    %684 = arith.divf %682, %683 : vector<8x128xf32>
    %685 = arith.mulf %684, %12 : vector<8x128xf32>
    %686 = arith.addf %685, %17 : vector<8x128xf32>
    %687 = vector.extract_strided_slice %686 {offsets = [0, 0], sizes = [8, 32], strides = [1, 1]} : vector<8x128xf32> to vector<8x32xf32>
    %688 = vector.extract_strided_slice %686 {offsets = [0, 32], sizes = [8, 32], strides = [1, 1]} : vector<8x128xf32> to vector<8x32xf32>
    %689 = vector.extract_strided_slice %686 {offsets = [0, 64], sizes = [8, 32], strides = [1, 1]} : vector<8x128xf32> to vector<8x32xf32>
    %690 = vector.extract_strided_slice %686 {offsets = [0, 96], sizes = [8, 32], strides = [1, 1]} : vector<8x128xf32> to vector<8x32xf32>
    %691 = arith.mulf %688, %651 : vector<8x32xf32>
    %692 = arith.mulf %687, %690 : vector<8x32xf32>
    %693 = arith.addf %691, %692 : vector<8x32xf32>
    %694 = math.tanh %693 : vector<8x32xf32>
    %695 = arith.mulf %694, %689 : vector<8x32xf32>
    %696 = arith.index_cast %c6_i32_193 : i32 to index
    %c0_201 = arith.constant 0 : index
    %c0_202 = arith.constant 0 : index
    %697 = vector.load %arg13[%696, %c0_201, %c0_202] : memref<8x8x32xf32, #tpu.memory_space<vmem>>, vector<1x8x32xf32>
    %698 = vector.shape_cast %697 : vector<1x8x32xf32> to vector<8x32xf32>
    %699 = vector.shape_cast %695 : vector<8x32xf32> to vector<1x8x32xf32>
    tpu.vector_store %arg13[%696, %c0_201, %c0_202], %699 {strides = array<i32>} : memref<8x8x32xf32, #tpu.memory_space<vmem>>, vector<1x8x32xf32>,
    %700 = arith.addf %658, %695 : vector<8x32xf32>
    %c7_i32_203 = arith.constant 7 : i32
    %701 = tpu.concatenate %695, %693 in 1 : vector<8x32xf32>, vector<8x32xf32> -> vector<8x64xf32>
    %702 = arith.index_cast %c7_i32_203 : i32 to index
    %c0_204 = arith.constant 0 : index
    %c0_205 = arith.constant 0 : index
    %703 = vector.load %arg14[%702, %c0_204, %c0_205] : memref<8x8x128xf32, #tpu.memory_space<vmem>>, vector<1x8x128xf32>
    %704 = vector.shape_cast %703 : vector<1x8x128xf32> to vector<8x128xf32>
    %cst_206 = arith.constant dense<0.000000e+00> : vector<8x128xf32>
    %705 = tpu.matmul %701, %387, %cst_206 {dimension_numbers = #tpu.dot_dimension_numbers<[1], [0], [0], [1], [0, 0, 1, 1], [], []>} : vector<8x64xf32>, vector<64x128xf32>, vector<8x128xf32> -> vector<8x128xf32>
    %706 = arith.addf %704, %705 : vector<8x128xf32>
    %707 = arith.mulf %706, %706 : vector<8x128xf32>
    %708 = tpu.concatenate %706, %707 in 0 : vector<8x128xf32>, vector<8x128xf32> -> vector<16x128xf32>
    %cst_207 = arith.constant dense<0.000000e+00> : vector<16x128xf32>
    %709 = tpu.matmul %708, %18, %cst_207 {dimension_numbers = #tpu.dot_dimension_numbers<[1], [0], [0], [1], [0, 0, 1, 1], [], []>} : vector<16x128xf32>, vector<128x128xf32>, vector<16x128xf32> -> vector<16x128xf32>
    %710 = vector.extract_strided_slice %709 {offsets = [0, 0], sizes = [8, 128], strides = [1, 1]} : vector<16x128xf32> to vector<8x128xf32>
    %711 = vector.extract_strided_slice %709 {offsets = [8, 0], sizes = [8, 128], strides = [1, 1]} : vector<16x128xf32> to vector<8x128xf32>
    %712 = arith.mulf %710, %710 : vector<8x128xf32>
    %713 = arith.subf %711, %712 : vector<8x128xf32>
    %cst_208 = arith.constant 0.000000e+00 : f32
    %714 = vector.broadcast %cst_208 : f32 to vector<8x128xf32>
    %715 = arith.maximumf %713, %714 : vector<8x128xf32>
    %cst_209 = arith.constant 9.99999974E-6 : f32
    %716 = vector.broadcast %cst_209 : f32 to vector<8x128xf32>
    %717 = arith.addf %715, %716 : vector<8x128xf32>
    %718 = arith.mulf %717, %7 : vector<8x128xf32>
    %719 = math.rsqrt %718 : vector<8x128xf32>
    %720 = arith.subf %706, %710 : vector<8x128xf32>
    %721 = arith.mulf %720, %719 : vector<8x128xf32>
    %722 = arith.negf %721 : vector<8x128xf32>
    %723 = math.exp %722 : vector<8x128xf32>
    %cst_210 = arith.constant 1.000000e+00 : f32
    %724 = vector.broadcast %cst_210 : f32 to vector<8x128xf32>
    %725 = arith.addf %724, %723 : vector<8x128xf32>
    %726 = arith.divf %724, %725 : vector<8x128xf32>
    %727 = arith.mulf %726, %12 : vector<8x128xf32>
    %728 = arith.addf %727, %17 : vector<8x128xf32>
    %729 = vector.extract_strided_slice %728 {offsets = [0, 0], sizes = [8, 32], strides = [1, 1]} : vector<8x128xf32> to vector<8x32xf32>
    %730 = vector.extract_strided_slice %728 {offsets = [0, 32], sizes = [8, 32], strides = [1, 1]} : vector<8x128xf32> to vector<8x32xf32>
    %731 = vector.extract_strided_slice %728 {offsets = [0, 64], sizes = [8, 32], strides = [1, 1]} : vector<8x128xf32> to vector<8x32xf32>
    %732 = vector.extract_strided_slice %728 {offsets = [0, 96], sizes = [8, 32], strides = [1, 1]} : vector<8x128xf32> to vector<8x32xf32>
    %733 = arith.mulf %730, %693 : vector<8x32xf32>
    %734 = arith.mulf %729, %732 : vector<8x32xf32>
    %735 = arith.addf %733, %734 : vector<8x32xf32>
    %736 = math.tanh %735 : vector<8x32xf32>
    %737 = arith.mulf %736, %731 : vector<8x32xf32>
    %738 = arith.index_cast %c7_i32_203 : i32 to index
    %c0_211 = arith.constant 0 : index
    %c0_212 = arith.constant 0 : index
    %739 = vector.load %arg13[%738, %c0_211, %c0_212] : memref<8x8x32xf32, #tpu.memory_space<vmem>>, vector<1x8x32xf32>
    %740 = vector.shape_cast %739 : vector<1x8x32xf32> to vector<8x32xf32>
    %741 = vector.shape_cast %737 : vector<8x32xf32> to vector<1x8x32xf32>
    tpu.vector_store %arg13[%738, %c0_211, %c0_212], %741 {strides = array<i32>} : memref<8x8x32xf32, #tpu.memory_space<vmem>>, vector<1x8x32xf32>,
    %742 = arith.addf %700, %737 : vector<8x32xf32>
    %c8_i32_213 = arith.constant 8 : i32
    %cst_214 = arith.constant 6.250000e-02 : f32
    %743 = vector.broadcast %cst_214 : f32 to vector<8x32xf32>
    %744 = arith.mulf %742, %743 : vector<8x32xf32>
    %c0_215 = arith.constant 0 : index
    %c0_216 = arith.constant 0 : index
    %745 = vector.load %arg10[%c0_215, %c0_216] : memref<32x4xf32, #tpu.memory_space<vmem>>, vector<32x4xf32>
    %cst_217 = arith.constant dense<0.000000e+00> : vector<8x4xf32>
    %746 = tpu.matmul %744, %745, %cst_217 {dimension_numbers = #tpu.dot_dimension_numbers<[1], [0], [0], [1], [0, 0, 1, 1], [], []>} : vector<8x32xf32>, vector<32x4xf32>, vector<8x4xf32> -> vector<8x4xf32>
    %c0_218 = arith.constant 0 : index
    %c0_219 = arith.constant 0 : index
    %747 = vector.load %arg11[%c0_218, %c0_219] : memref<1x4xf32, #tpu.memory_space<vmem>>, vector<1x4xf32>
    %748 = vector.broadcast %747 : vector<1x4xf32> to vector<8x4xf32>
    %749 = arith.addf %746, %748 : vector<8x4xf32>
    %cst_220 = arith.constant dense<0xFF800000> : vector<8xf32>
    %750 = vector.multi_reduction <maximumf>, %749, %cst_220 [1] : vector<8x4xf32> to vector<8xf32>
    %751 = vector.shape_cast %750 : vector<8xf32> to vector<8x1xf32>
    %752 = vector.broadcast %751 : vector<8x1xf32> to vector<8x4xf32>
    %753 = arith.subf %749, %752 : vector<8x4xf32>
    %754 = math.exp %753 : vector<8x4xf32>
    %cst_221 = arith.constant dense<0.000000e+00> : vector<8xf32>
    %755 = vector.multi_reduction <add>, %754, %cst_221 [1] : vector<8x4xf32> to vector<8xf32>
    %756 = vector.shape_cast %755 : vector<8xf32> to vector<8x1xf32>
    %757 = tpu.reciprocal %756 {approx = true} : vector<8x1xf32> -> vector<8x1xf32>
    %758 = vector.broadcast %757 : vector<8x1xf32> to vector<8x4xf32>
    %759 = arith.mulf %754, %758 : vector<8x4xf32>
    %c0_222 = arith.constant 0 : index
    %c0_223 = arith.constant 0 : index
    %760 = vector.load %arg12[%c0_222, %c0_223] : memref<8x4xf32, #tpu.memory_space<vmem>>, vector<8x4xf32>
    tpu.vector_store %arg12[%c0_222, %c0_223], %759 {strides = array<i32>} : memref<8x4xf32, #tpu.memory_space<vmem>>, vector<8x4xf32>,
    return
  }
  func.func @transform_0(%arg0: i32) -> (i32, i32, i32) {
    %c0_i32 = arith.constant 0 : i32
    %c0_i32_0 = arith.constant 0 : i32
    %c0_i32_1 = arith.constant 0 : i32
    %c0_i32_2 = arith.constant 0 : i32
    return %c0_i32, %c0_i32_0, %c0_i32_1 : i32, i32, i32
  }
  func.func @transform_1(%arg0: i32) -> (i32, i32) {
    %c0_i32 = arith.constant 0 : i32
    %c0_i32_0 = arith.constant 0 : i32
    %c0_i32_1 = arith.constant 0 : i32
    return %c0_i32, %c0_i32_0 : i32, i32
  }
  func.func @transform_2(%arg0: i32) -> (i32, i32) {
    %c0_i32 = arith.constant 0 : i32
    %c0_i32_0 = arith.constant 0 : i32
    %c0_i32_1 = arith.constant 0 : i32
    return %c0_i32, %c0_i32_0 : i32, i32
  }
  func.func @transform_3(%arg0: i32) -> (i32, i32, i32) {
    %c0_i32 = arith.constant 0 : i32
    %c0_i32_0 = arith.constant 0 : i32
    %c0_i32_1 = arith.constant 0 : i32
    %c0_i32_2 = arith.constant 0 : i32
    return %c0_i32, %c0_i32_0, %c0_i32_1 : i32, i32, i32
  }
  func.func @transform_4(%arg0: i32) -> (i32, i32, i32) {
    %c0_i32 = arith.constant 0 : i32
    %c0_i32_0 = arith.constant 0 : i32
    %c0_i32_1 = arith.constant 0 : i32
    %c0_i32_2 = arith.constant 0 : i32
    return %c0_i32, %c0_i32_0, %c0_i32_1 : i32, i32, i32
  }
  func.func @transform_5(%arg0: i32) -> (i32, i32, i32) {
    %c0_i32 = arith.constant 0 : i32
    %c0_i32_0 = arith.constant 0 : i32
    %c0_i32_1 = arith.constant 0 : i32
    %c0_i32_2 = arith.constant 0 : i32
    return %c0_i32, %c0_i32_0, %c0_i32_1 : i32, i32, i32
  }
  func.func @transform_6(%arg0: i32) -> (i32, i32, i32) {
    %c0_i32 = arith.constant 0 : i32
    %c0_i32_0 = arith.constant 0 : i32
    %c0_i32_1 = arith.constant 0 : i32
    %c0_i32_2 = arith.constant 0 : i32
    return %c0_i32, %c0_i32_0, %c0_i32_1 : i32, i32, i32
  }
  func.func @transform_7(%arg0: i32) -> (i32, i32, i32) {
    %c0_i32 = arith.constant 0 : i32
    %c0_i32_0 = arith.constant 0 : i32
    %c0_i32_1 = arith.constant 0 : i32
    %c0_i32_2 = arith.constant 0 : i32
    return %c0_i32, %c0_i32_0, %c0_i32_1 : i32, i32, i32
  }
  func.func @transform_8(%arg0: i32) -> (i32, i32) {
    %c0_i32 = arith.constant 0 : i32
    %c0_i32_0 = arith.constant 0 : i32
    %c0_i32_1 = arith.constant 0 : i32
    return %c0_i32, %c0_i32_0 : i32, i32
  }
  func.func @transform_9(%arg0: i32) -> (i32, i32) {
    %c0_i32 = arith.constant 0 : i32
    %c0_i32_0 = arith.constant 0 : i32
    %c0_i32_1 = arith.constant 0 : i32
    return %c0_i32, %c0_i32_0 : i32, i32
  }
  func.func @transform_10(%arg0: i32) -> (i32, i32) {
    %c0_i32 = arith.constant 0 : i32
    %c0_i32_0 = arith.constant 0 : i32
    %c0_i32_1 = arith.constant 0 : i32
    return %c0_i32, %c0_i32_0 : i32, i32
  }
  func.func @transform_11(%arg0: i32) -> (i32, i32) {
    %c0_i32 = arith.constant 0 : i32
    %c0_i32_0 = arith.constant 0 : i32
    %c0_i32_1 = arith.constant 0 : i32
    return %c0_i32, %c0_i32_0 : i32, i32
  }
}

</mosaic_0001>

<llo_original>
// kernel: tpu_custom_call.1
$region0: #{tpu_custom_call.1}
  #allocation0 [shape = 'u32[]', space=smem, size = 0x4, offset = 0x4, fixed_abs, tag = 'smem constant byte address 0x4 - core index']
  #allocation1 [shape = 'u32[144,128]{1,0:T(1,128)}', space=vmem, size = 0x12000, scoped, tag = 'internal scratch']
  #allocation2 [shape = 'f32[8,8,32]{2,1,0:T(8,128)}', space=vmem, size = 0x8000, scoped, tag = 'scratch operand']
  #allocation3 [shape = 'f32[8,8,128]{2,1,0:T(8,128)}', space=vmem, size = 0x8000, scoped, tag = 'scratch operand']
  %s0 = inlined_call_operand.hbm [shape: f32[8,8,48], index: 0, kind: input, shape index: {}]
  %s1 = inlined_call_operand.vmem [shape: f32[48,32], index: 1, kind: input, shape index: {}]
  %s2 = inlined_call_operand.hbm [shape: f32[1,32], index: 2, kind: input, shape index: {}]
  %s3 = inlined_call_operand.hbm [shape: f32[2,32,128], index: 3, kind: input, shape index: {}]
  %s4 = inlined_call_operand.vmem [shape: f32[2,64,128], index: 4, kind: input, shape index: {}]
  %s5 = inlined_call_operand.vmem [shape: f32[2,1,128], index: 5, kind: input, shape index: {}]
  %s6 = inlined_call_operand.vmem [shape: f32[2,1,32], index: 6, kind: input, shape index: {}]
  %s7 = inlined_call_operand.vmem [shape: f32[2,1,32], index: 7, kind: input, shape index: {}]
  %s8 = inlined_call_operand.hbm [shape: f32[128,128], index: 8, kind: input, shape index: {}]
  %s9 = inlined_call_operand.vmem [shape: f32[32,4], index: 9, kind: input, shape index: {}]
  %s10 = inlined_call_operand.vmem [shape: f32[1,4], index: 10, kind: input, shape index: {}]
  %s11 = inlined_call_operand.vmem [shape: f32[8,4], index: 11, kind: output, shape index: {}]
  %s12 = sld [smem:[#allocation0]]
  $region70: #{tpu_custom_call.1} parent=0
    _
  %s14 = ssub.s32 1, %s12
  %s15 = scalar_select 0, %s14, %s12
  $region1: #{tpu_custom_call.1} parent=0
    #allocation4 [shape = 'u8[32768]{0}', space=vmem, size = 0x8000, scoped, tag = 'input window, operand 0, single buffered']
    #allocation5 [shape = 's32[1]{0}', space=sflag, size = 0x4, scoped, tag = 'scoped memory for tpu_custom_call.1']
    #allocation6 [shape = 'u8[512]{0}', space=vmem, size = 0x400, scoped, tag = 'input window, operand 2, single buffered']
    #allocation7 [shape = 's32[1]{0}', space=sflag, size = 0x4, scoped, tag = 'scoped memory for tpu_custom_call.1']
    #allocation8 [shape = 'u8[32768]{0}', space=vmem, size = 0x8000, scoped, tag = 'input window, operand 3, single buffered']
    #allocation9 [shape = 'u8[65536]{0}', space=vmem, size = 0x10000, scoped, tag = 'input window, operand 8, single buffered']
    #allocation10 [shape = 's32[1]{0}', space=sflag, size = 0x4, scoped, tag = 'scoped memory for tpu_custom_call.1']
    %16 = vsyncpa [#allocation5], 0
    %17 = vsyncpa [#allocation7], 0
    %18 = vsyncpa [#allocation10], 0
    // Predicated region
    $region2: #{tpu_custom_call.1} parent=1 // pred_check
      _
    $region3: #{tpu_custom_call.1} parent=1 // pred_check_branch
      %20 = sbr.rel (0) target = $region5
    $region4: #{tpu_custom_call.1} parent=1 // pred_region
      %s22 = ssub.s32 1024, 1024
      %23 = vsyncadd [#allocation5], %s22
      %s24 = sshll.u32 [#allocation4], 4
      %s25 = int_to_ptr.vmem [resolvable:$true] %s24
      %30 = dma.hbm_to_vmem [thread:$0]  %s0, 1024, %s25, [#allocation5], 128, 128, 8
    $region5: #{tpu_custom_call.1} parent=1 // pred_fallthru
      _
    // Predicated region
    $region6: #{tpu_custom_call.1} parent=1 // pred_check
      _
    $region7: #{tpu_custom_call.1} parent=1 // pred_check_branch
      %32 = sbr.rel (0) target = $region9
    $region8: #{tpu_custom_call.1} parent=1 // pred_region
      _
    $region9: #{tpu_custom_call.1} parent=1 // pred_fallthru
      _
    // Predicated region
    $region10: #{tpu_custom_call.1} parent=1 // pred_check
      _
    $region11: #{tpu_custom_call.1} parent=1 // pred_check_branch
      %34 = sbr.rel (0) target = $region13
    $region12: #{tpu_custom_call.1} parent=1 // pred_region
      %s36 = ssub.s32 16, 16
      %37 = vsyncadd [#allocation7], %s36
      %s39 = sshll.u32 [#allocation6], 4
      %s40 = int_to_ptr.vmem [resolvable:$true] %s39
      %42 = dma.hbm_to_vmem [thread:$0]  %s2, 16, %s40, [#allocation7]
    $region13: #{tpu_custom_call.1} parent=1 // pred_fallthru
      _
    // Predicated region
    $region14: #{tpu_custom_call.1} parent=1 // pred_check
      _
    $region15: #{tpu_custom_call.1} parent=1 // pred_check_branch
      %44 = sbr.rel (0) target = $region17
    $region16: #{tpu_custom_call.1} parent=1 // pred_region
      %s46 = ssub.s32 1024, 1024
      %47 = vsyncadd [#allocation7], %s46
      %s48 = sshll.u32 [#allocation8], 4
      %s49 = int_to_ptr.vmem [resolvable:$true] %s48
      %54 = dma.hbm_to_vmem [thread:$0]  %s3, 1024, %s49, [#allocation7], 128, 128, 8
    $region17: #{tpu_custom_call.1} parent=1 // pred_fallthru
      _
    // Predicated region
    $region18: #{tpu_custom_call.1} parent=1 // pred_check
      _
    $region19: #{tpu_custom_call.1} parent=1 // pred_check_branch
      %56 = sbr.rel (0) target = $region21
    $region20: #{tpu_custom_call.1} parent=1 // pred_region
      _
    $region21: #{tpu_custom_call.1} parent=1 // pred_fallthru
      _
    // Predicated region
    $region22: #{tpu_custom_call.1} parent=1 // pred_check
      _
    $region23: #{tpu_custom_call.1} parent=1 // pred_check_branch
      %58 = sbr.rel (0) target = $region25
    $region24: #{tpu_custom_call.1} parent=1 // pred_region
      _
    $region25: #{tpu_custom_call.1} parent=1 // pred_fallthru
      _
    // Predicated region
    $region26: #{tpu_custom_call.1} parent=1 // pred_check
      _
    $region27: #{tpu_custom_call.1} parent=1 // pred_check_branch
      %60 = sbr.rel (0) target = $region29
    $region28: #{tpu_custom_call.1} parent=1 // pred_region
      _
    $region29: #{tpu_custom_call.1} parent=1 // pred_fallthru
      _
    // Predicated region
    $region30: #{tpu_custom_call.1} parent=1 // pred_check
      _
    $region31: #{tpu_custom_call.1} parent=1 // pred_check_branch
      %62 = sbr.rel (0) target = $region33
    $region32: #{tpu_custom_call.1} parent=1 // pred_region
      _
    $region33: #{tpu_custom_call.1} parent=1 // pred_fallthru
      _
    // Predicated region
    $region34: #{tpu_custom_call.1} parent=1 // pred_check
      _
    $region35: #{tpu_custom_call.1} parent=1 // pred_check_branch
      %64 = sbr.rel (0) target = $region37
    $region36: #{tpu_custom_call.1} parent=1 // pred_region
      %s66 = ssub.s32 2048, 2048
      %67 = vsyncadd [#allocation10], %s66
      %s68 = sshll.u32 [#allocation9], 4
      %s69 = int_to_ptr.vmem [resolvable:$true] %s68
      %74 = dma.hbm_to_vmem [thread:$0]  %s8, 2048, %s69, [#allocation10], 128, 128, 8
    $region37: #{tpu_custom_call.1} parent=1 // pred_fallthru
      _
    // Predicated region
    $region38: #{tpu_custom_call.1} parent=1 // pred_check
      _
    $region39: #{tpu_custom_call.1} parent=1 // pred_check_branch
      %76 = sbr.rel (0) target = $region41
    $region40: #{tpu_custom_call.1} parent=1 // pred_region
      _
    $region41: #{tpu_custom_call.1} parent=1 // pred_fallthru
      _
    // Predicated region
    $region42: #{tpu_custom_call.1} parent=1 // pred_check
      _
    $region43: #{tpu_custom_call.1} parent=1 // pred_check_branch
      %78 = sbr.rel (0) target = $region45
    $region44: #{tpu_custom_call.1} parent=1 // pred_region
      _
    $region45: #{tpu_custom_call.1} parent=1 // pred_fallthru
      _
    // Predicated region
    $region46: #{tpu_custom_call.1} parent=1 // pred_check
      _
    $region47: #{tpu_custom_call.1} parent=1 // pred_check_branch
      %80 = sbr.rel (0) target = $region49
    $region48: #{tpu_custom_call.1} parent=1 // pred_region
      %81 = dma.done [#allocation5], 1024
    $region49: #{tpu_custom_call.1} parent=1 // pred_fallthru
      _
    // Predicated region
    $region50: #{tpu_custom_call.1} parent=1 // pred_check
      _
    $region51: #{tpu_custom_call.1} parent=1 // pred_check_branch
      %83 = sbr.rel (0) target = $region53
    $region52: #{tpu_custom_call.1} parent=1 // pred_region
      %84 = dma.done [#allocation7], 16
    $region53: #{tpu_custom_call.1} parent=1 // pred_fallthru
      _
    // Predicated region
    $region54: #{tpu_custom_call.1} parent=1 // pred_check
      _
    $region55: #{tpu_custom_call.1} parent=1 // pred_check_branch
      %86 = sbr.rel (0) target = $region57
    $region56: #{tpu_custom_call.1} parent=1 // pred_region
      %87 = dma.done [#allocation7], 1024
    $region57: #{tpu_custom_call.1} parent=1 // pred_fallthru
      _
    // Predicated region
    $region58: #{tpu_custom_call.1} parent=1 // pred_check
      _
    $region59: #{tpu_custom_call.1} parent=1 // pred_check_branch
      %89 = sbr.rel (0) target = $region61
    $region60: #{tpu_custom_call.1} parent=1 // pred_region
      %90 = dma.done [#allocation10], 2048
    $region61: #{tpu_custom_call.1} parent=1 // pred_fallthru
      _
    %v91 = vlaneseq
    %v92 = vand.u32 %v91, 127
    %vm93 = vcmp.ge.s32.totalorder %v92, 96
    %v94 = vsel %vm93, 0.25, 1.0
    %v95 = vsel %vm93, 2.0, 1.0
    %v96 = vsel %vm93, -1.0, 0.0
    %v97 = vld [vmem:[#allocation9] sm:$0xff]
    %v98 = vld [vmem:[#allocation9 + $0x8] sm:$0xff]
    %v99 = vld [vmem:[#allocation9 + $0x10] sm:$0xff]
    %v100 = vld [vmem:[#allocation9 + $0x18] sm:$0xff]
    %v101 = vld [vmem:[#allocation9 + $0x20] sm:$0xff]
    %v102 = vld [vmem:[#allocation9 + $0x28] sm:$0xff]
    %v103 = vld [vmem:[#allocation9 + $0x30] sm:$0xff]
    %v104 = vld [vmem:[#allocation9 + $0x38] sm:$0xff]
    %v105 = vld [vmem:[#allocation9 + $0x40] sm:$0xff]
    %v106 = vld [vmem:[#allocation9 + $0x48] sm:$0xff]
    %v107 = vld [vmem:[#allocation9 + $0x50] sm:$0xff]
    %v108 = vld [vmem:[#allocation9 + $0x58] sm:$0xff]
    %v109 = vld [vmem:[#allocation9 + $0x60] sm:$0xff]
    %v110 = vld [vmem:[#allocation9 + $0x68] sm:$0xff]
    %v111 = vld [vmem:[#allocation9 + $0x70] sm:$0xff]
    %v112 = vld [vmem:[#allocation9 + $0x78] sm:$0xff]
    %v113 = vld [vmem:[#allocation4] sm:$0xff]
    %v114 = vld [vmem:[#allocation4 + $0x8] sm:$0xff]
    %v115 = vld [vmem:[#allocation4 + $0x10] sm:$0xff]
    %v116 = vld [vmem:[#allocation4 + $0x18] sm:$0xff]
    %v117 = vld [vmem:[#allocation4 + $0x20] sm:$0xff]
    %v118 = vld [vmem:[#allocation4 + $0x28] sm:$0xff]
    %v119 = vld [vmem:[#allocation4 + $0x30] sm:$0xff]
    %v120 = vld [vmem:[#allocation4 + $0x38] sm:$0xff]
    %v121 = vld [vmem:[%s1] sm:$0xff]
    %v122 = vld [vmem:[%s1 + $0x8] sm:$0xff]
    %v123 = vld [vmem:[%s1 + $0x10] sm:$0xff]
    %v124 = vld [vmem:[%s1 + $0x18] sm:$0xff]
    %v125 = vld [vmem:[%s1 + $0x20] sm:$0xff]
    %v126 = vld [vmem:[%s1 + $0x28] sm:$0xff]
    %v127 = vld [vmem:[#allocation6] sm:$0x1]
    %v129 = vlaneseq
    %v130 = vshrl.u32 %v129, 7
    %v131 = vsub.s32 0, %v130
    %v132 = vrot.slane %v127, %v131
    %vm134 = vcmask 392192
    %v136 = vsel %vm134, %v113, 0
    %v139 = vsel %vm134, %v114, 0
    %v142 = vsel %vm134, %v115, 0
    %v145 = vsel %vm134, %v116, 0
    %v148 = vsel %vm134, %v117, 0
    %v151 = vsel %vm134, %v118, 0
    %v154 = vsel %vm134, %v119, 0
    %v157 = vsel %vm134, %v120, 0
    %159 = vmatprep.subr.mxu0 0.0
    %160 = vmatpush1.msra.mxu0 %v121
    %161 = vmatprep.subr.mxu0 0.0
    %162 = vmatpush1.msra.mxu0 %v122
    %163 = vmatprep.subr.mxu0 0.0
    %164 = vmatpush1.msra.mxu0 %v123
    %165 = vmatprep.subr.mxu0 0.0
    %166 = vmatpush1.msra.mxu0 %v124
    %167 = vmatprep.subr.mxu0 0.0
    %168 = vmatpush1.msra.mxu0 %v125
    %169 = vmatprep.subr.mxu0 0.0
    %170 = vmatpush1.msra.mxu0 %v126
    %171 = vmatprep.subr.mxu0 0.0
    %172 = vmatpush1.msra.mxu0 0.0
    %173 = vmatprep.subr.mxu0 0.0
    %174 = vmatpush1.msra.mxu0 0.0
    %175 = vmatprep.subr.mxu0 0.0
    %176 = vmatpush1.msra.mxu0 0.0
    %177 = vmatprep.subr.mxu0 0.0
    %178 = vmatpush1.msra.mxu0 0.0
    %179 = vmatprep.subr.mxu0 0.0
    %180 = vmatpush1.msra.mxu0 0.0
    %181 = vmatprep.subr.mxu0 0.0
    %182 = vmatpush1.msra.mxu0 0.0
    %183 = vmatprep.subr.mxu0 0.0
    %184 = vmatpush1.msra.mxu0 0.0
    %185 = vmatprep.subr.mxu0 0.0
    %186 = vmatpush1.msra.mxu0 0.0
    %187 = vmatprep.subr.mxu0 0.0
    %188 = vmatpush1.msra.mxu0 0.0
    %189 = vmatprep.subr.mxu0 0.0
    %190 = vmatpush1.msra.mxu0 0.0
    %191 = vmatprep.subr.mxu0 0.0
    %192 = vmatpush1.msra.mxu0 0.0
    %193 = vmatprep.subr.mxu0 0.0
    %194 = vmatpush1.msra.mxu0 0.0
    %195 = vmatprep.subr.mxu0 0.0
    %196 = vmatpush1.msra.mxu0 0.0
    %197 = vmatprep.subr.mxu0 0.0
    %198 = vmatpush1.msra.mxu0 0.0
    %199 = vmatprep.subr.mxu0 0.0
    %200 = vmatpush1.msra.mxu0 0.0
    %201 = vmatprep.subr.mxu0 0.0
    %202 = vmatpush1.msra.mxu0 0.0
    %203 = vmatprep.subr.mxu0 0.0
    %204 = vmatpush1.msra.mxu0 0.0
    %205 = vmatprep.subr.mxu0 0.0
    %206 = vmatpush1.msra.mxu0 0.0
    %207 = vmatprep.subr.mxu0 0.0
    %208 = vmatpush1.msra.mxu0 0.0
    %209 = vmatprep.subr.mxu0 0.0
    %210 = vmatpush1.msra.mxu0 0.0
    %211 = vmatprep.subr.mxu0 0.0
    %212 = vmatpush1.msra.mxu0 0.0
    %213 = vmatprep.subr.mxu0 0.0
    %214 = vmatpush1.msra.mxu0 0.0
    %215 = vmatprep.subr.mxu0 0.0
    %216 = vmatpush1.msra.mxu0 0.0
    %217 = vmatprep.subr.mxu0 0.0
    %218 = vmatpush1.msra.mxu0 0.0
    %219 = vmatprep.subr.mxu0 0.0
    %220 = vmatpush1.msra.mxu0 0.0
    %221 = vmatprep.subr.mxu0 0.0
    %222 = vmatpush1.msra.mxu0 0.0
    %223 = vmatprep.mubr.f32.mxu0 0.0
    %224 = vmatmul.mubr.f32.gmra.mrb[0].mxu0 %v136
    %v225 = vpop.f32.mrb[0].mxu0
    %v226 = vadd.f32 %v132, %v225
    %v227 = vpop.f32.mrb[0].mxu0
    %228 = vmatprep.mubr.f32.mxu0 0.0
    %229 = vmatmul.mubr.f32.gmra.mrb[0].mxu0 %v139
    %v230 = vpop.f32.mrb[0].mxu0
    %v231 = vadd.f32 %v132, %v230
    %v232 = vpop.f32.mrb[0].mxu0
    %233 = vmatprep.mubr.f32.mxu0 0.0
    %234 = vmatmul.mubr.f32.gmra.mrb[0].mxu0 %v142
    %v235 = vpop.f32.mrb[0].mxu0
    %v236 = vadd.f32 %v132, %v235
    %v237 = vpop.f32.mrb[0].mxu0
    %238 = vmatprep.mubr.f32.mxu0 0.0
    %239 = vmatmul.mubr.f32.gmra.mrb[0].mxu0 %v145
    %v240 = vpop.f32.mrb[0].mxu0
    %v241 = vadd.f32 %v132, %v240
    %v242 = vpop.f32.mrb[0].mxu0
    %243 = vmatprep.mubr.f32.mxu0 0.0
    %244 = vmatmul.mubr.f32.gmra.mrb[0].mxu0 %v148
    %v245 = vpop.f32.mrb[0].mxu0
    %v246 = vadd.f32 %v132, %v245
    %v247 = vpop.f32.mrb[0].mxu0
    %248 = vmatprep.mubr.f32.mxu0 0.0
    %249 = vmatmul.mubr.f32.gmra.mrb[0].mxu0 %v151
    %v250 = vpop.f32.mrb[0].mxu0
    %v251 = vadd.f32 %v132, %v250
    %v252 = vpop.f32.mrb[0].mxu0
    %253 = vmatprep.mubr.f32.mxu0 0.0
    %254 = vmatmul.mubr.f32.gmra.mrb[0].mxu0 %v154
    %v255 = vpop.f32.mrb[0].mxu0
    %v256 = vadd.f32 %v132, %v255
    %v257 = vpop.f32.mrb[0].mxu0
    %258 = vmatprep.mubr.f32.mxu0 0.0
    %259 = vmatmul.mubr.f32.gmra.mrb[0].mxu0 %v157
    %v260 = vpop.f32.mrb[0].mxu0
    %v261 = vadd.f32 %v132, %v260
    %v262 = vpop.f32.mrb[0].mxu0
    %263 = vdwg.mxu0
    %vm264 = vcmask 261120
    %265 = vst.msk [vmem:[#allocation2] sm:$0xff] %vm264, %v226
    %266 = vst.msk [vmem:[#allocation2 + $0x8] sm:$0xff] %vm264, %v231
    %267 = vst.msk [vmem:[#allocation2 + $0x10] sm:$0xff] %vm264, %v236
    %268 = vst.msk [vmem:[#allocation2 + $0x18] sm:$0xff] %vm264, %v241
    %269 = vst.msk [vmem:[#allocation2 + $0x20] sm:$0xff] %vm264, %v246
    %270 = vst.msk [vmem:[#allocation2 + $0x28] sm:$0xff] %vm264, %v251
    %271 = vst.msk [vmem:[#allocation2 + $0x30] sm:$0xff] %vm264, %v256
    %272 = vst.msk [vmem:[#allocation2 + $0x38] sm:$0xff] %vm264, %v261
    %v273 = vld [vmem:[%s4] sm:$0xff]
    %v274 = vld [vmem:[%s4 + $0x8] sm:$0xff]
    %v275 = vld [vmem:[%s4 + $0x10] sm:$0xff]
    %v276 = vld [vmem:[%s4 + $0x18] sm:$0xff]
    %v277 = vld [vmem:[%s4 + $0x20] sm:$0xff]
    %v278 = vld [vmem:[%s4 + $0x28] sm:$0xff]
    %v279 = vld [vmem:[%s4 + $0x30] sm:$0xff]
    %v280 = vld [vmem:[%s4 + $0x38] sm:$0xff]
    %v281 = vld [vmem:[%s6] sm:$0x1]
    %v283 = vlaneseq
    %v284 = vshrl.u32 %v283, 7
    %v285 = vsub.s32 0, %v284
    %v286 = vrot.slane %v281, %v285
    %v288 = vld [vmem:[%s7] sm:$0x1]
    %v290 = vlaneseq
    %v291 = vshrl.u32 %v290, 7
    %v292 = vsub.s32 0, %v291
    %v293 = vrot.slane %v288, %v292
    %v294 = vld [vmem:[#allocation2] sm:$0xff]
    %v295 = vld [vmem:[#allocation2 + $0x8] sm:$0xff]
    %v296 = vld [vmem:[#allocation2 + $0x10] sm:$0xff]
    %v297 = vld [vmem:[#allocation2 + $0x18] sm:$0xff]
    %v298 = vld [vmem:[#allocation2 + $0x20] sm:$0xff]
    %v299 = vld [vmem:[#allocation2 + $0x28] sm:$0xff]
    %v300 = vld [vmem:[#allocation2 + $0x30] sm:$0xff]
    %v301 = vld [vmem:[#allocation2 + $0x38] sm:$0xff]
    %v302 = vld [vmem:[#allocation8] sm:$0xff]
    %v303 = vld [vmem:[#allocation8 + $0x8] sm:$0xff]
    %v304 = vld [vmem:[#allocation8 + $0x10] sm:$0xff]
    %v305 = vld [vmem:[#allocation8 + $0x18] sm:$0xff]
    %v306 = vld [vmem:[%s5] sm:$0x1]
    %v308 = vlaneseq
    %v309 = vshrl.u32 %v308, 7
    %v310 = vsub.s32 0, %v309
    %v311 = vrot.slane %v306, %v310
    %v314 = vsel %vm264, %v294, 0
    %v317 = vsel %vm264, %v295, 0
    %v320 = vsel %vm264, %v296, 0
    %v323 = vsel %vm264, %v297, 0
    %v326 = vsel %vm264, %v298, 0
    %v329 = vsel %vm264, %v299, 0
    %v332 = vsel %vm264, %v300, 0
    %v335 = vsel %vm264, %v301, 0
    %337 = vmatprep.subr.mxu0 0.0
    %338 = vmatpush1.msra.mxu0 %v302
    %339 = vmatprep.subr.mxu0 0.0
    %340 = vmatpush1.msra.mxu0 %v303
    %341 = vmatprep.subr.mxu0 0.0
    %342 = vmatpush1.msra.mxu0 %v304
    %343 = vmatprep.subr.mxu0 0.0
    %344 = vmatpush1.msra.mxu0 %v305
    %345 = vmatprep.subr.mxu0 0.0
    %346 = vmatpush1.msra.mxu0 0.0
    %347 = vmatprep.subr.mxu0 0.0
    %348 = vmatpush1.msra.mxu0 0.0
    %349 = vmatprep.subr.mxu0 0.0
    %350 = vmatpush1.msra.mxu0 0.0
    %351 = vmatprep.subr.mxu0 0.0
    %352 = vmatpush1.msra.mxu0 0.0
    %353 = vmatprep.subr.mxu0 0.0
    %354 = vmatpush1.msra.mxu0 0.0
    %355 = vmatprep.subr.mxu0 0.0
    %356 = vmatpush1.msra.mxu0 0.0
    %357 = vmatprep.subr.mxu0 0.0
    %358 = vmatpush1.msra.mxu0 0.0
    %359 = vmatprep.subr.mxu0 0.0
    %360 = vmatpush1.msra.mxu0 0.0
    %361 = vmatprep.subr.mxu0 0.0
    %362 = vmatpush1.msra.mxu0 0.0
    %363 = vmatprep.subr.mxu0 0.0
    %364 = vmatpush1.msra.mxu0 0.0
    %365 = vmatprep.subr.mxu0 0.0
    %366 = vmatpush1.msra.mxu0 0.0
    %367 = vmatprep.subr.mxu0 0.0
    %368 = vmatpush1.msra.mxu0 0.0
    %369 = vmatprep.subr.mxu0 0.0
    %370 = vmatpush1.msra.mxu0 0.0
    %371 = vmatprep.subr.mxu0 0.0
    %372 = vmatpush1.msra.mxu0 0.0
    %373 = vmatprep.subr.mxu0 0.0
    %374 = vmatpush1.msra.mxu0 0.0
    %375 = vmatprep.subr.mxu0 0.0
    %376 = vmatpush1.msra.mxu0 0.0
    %377 = vmatprep.subr.mxu0 0.0
    %378 = vmatpush1.msra.mxu0 0.0
    %379 = vmatprep.subr.mxu0 0.0
    %380 = vmatpush1.msra.mxu0 0.0
    %381 = vmatprep.subr.mxu0 0.0
    %382 = vmatpush1.msra.mxu0 0.0
    %383 = vmatprep.subr.mxu0 0.0
    %384 = vmatpush1.msra.mxu0 0.0
    %385 = vmatprep.subr.mxu0 0.0
    %386 = vmatpush1.msra.mxu0 0.0
    %387 = vmatprep.subr.mxu0 0.0
    %388 = vmatpush1.msra.mxu0 0.0
    %389 = vmatprep.subr.mxu0 0.0
    %390 = vmatpush1.msra.mxu0 0.0
    %391 = vmatprep.subr.mxu0 0.0
    %392 = vmatpush1.msra.mxu0 0.0
    %393 = vmatprep.subr.mxu0 0.0
    %394 = vmatpush1.msra.mxu0 0.0
    %395 = vmatprep.subr.mxu0 0.0
    %396 = vmatpush1.msra.mxu0 0.0
    %397 = vmatprep.subr.mxu0 0.0
    %398 = vmatpush1.msra.mxu0 0.0
    %399 = vmatprep.subr.mxu0 0.0
    %400 = vmatpush1.msra.mxu0 0.0
    %401 = vmatprep.mubr.f32.mxu0 0.0
    %402 = vmatmul.mubr.f32.gmra.mrb[0].mxu0 %v314
    %v403 = vpop.f32.mrb[0].mxu0
    %v404 = vadd.f32 %v311, %v403
    %v405 = vpop.f32.mrb[0].mxu0
    %406 = vmatprep.mubr.f32.mxu0 0.0
    %407 = vmatmul.mubr.f32.gmra.mrb[0].mxu0 %v317
    %v408 = vpop.f32.mrb[0].mxu0
    %v409 = vadd.f32 %v311, %v408
    %v410 = vpop.f32.mrb[0].mxu0
    %411 = vmatprep.mubr.f32.mxu0 0.0
    %412 = vmatmul.mubr.f32.gmra.mrb[0].mxu0 %v320
    %v413 = vpop.f32.mrb[0].mxu0
    %v414 = vadd.f32 %v311, %v413
    %v415 = vpop.f32.mrb[0].mxu0
    %416 = vmatprep.mubr.f32.mxu0 0.0
    %417 = vmatmul.mubr.f32.gmra.mrb[0].mxu0 %v323
    %v418 = vpop.f32.mrb[0].mxu0
    %v419 = vadd.f32 %v311, %v418
    %v420 = vpop.f32.mrb[0].mxu0
    %421 = vmatprep.mubr.f32.mxu0 0.0
    %422 = vmatmul.mubr.f32.gmra.mrb[0].mxu0 %v326
    %v423 = vpop.f32.mrb[0].mxu0
    %v424 = vadd.f32 %v311, %v423
    %v425 = vpop.f32.mrb[0].mxu0
    %426 = vmatprep.mubr.f32.mxu0 0.0
    %427 = vmatmul.mubr.f32.gmra.mrb[0].mxu0 %v329
    %v428 = vpop.f32.mrb[0].mxu0
    %v429 = vadd.f32 %v311, %v428
    %v430 = vpop.f32.mrb[0].mxu0
    %431 = vmatprep.mubr.f32.mxu0 0.0
    %432 = vmatmul.mubr.f32.gmra.mrb[0].mxu0 %v332
    %v433 = vpop.f32.mrb[0].mxu0
    %v434 = vadd.f32 %v311, %v433
    %v435 = vpop.f32.mrb[0].mxu0
    %436 = vmatprep.mubr.f32.mxu0 0.0
    %437 = vmatmul.mubr.f32.gmra.mrb[0].mxu0 %v335
    %v438 = vpop.f32.mrb[0].mxu0
    %v439 = vadd.f32 %v311, %v438
    %v440 = vpop.f32.mrb[0].mxu0
    %441 = vdwg.mxu0
    %442 = vst [vmem:[#allocation3] sm:$0xff] %v404
    %443 = vst [vmem:[#allocation3 + $0x8] sm:$0xff] %v409
    %444 = vst [vmem:[#allocation3 + $0x10] sm:$0xff] %v414
    %445 = vst [vmem:[#allocation3 + $0x18] sm:$0xff] %v419
    %446 = vst [vmem:[#allocation3 + $0x20] sm:$0xff] %v424
    %447 = vst [vmem:[#allocation3 + $0x28] sm:$0xff] %v429
    %448 = vst [vmem:[#allocation3 + $0x30] sm:$0xff] %v434
    %449 = vst [vmem:[#allocation3 + $0x38] sm:$0xff] %v439
    %450 = vrot.lane.b32.xlu0 %v293, 32
    %v451 = vpop.permute.xlu0 %450
    %v453 = vsel %vm264, %v286, %v451
    %v454 = vld [vmem:[#allocation3] sm:$0xff]
    %vm455 = vcmask 523264
    %v457 = vsel %vm455, %v453, 0
    %459 = vmatprep.subr.mxu0 0.0
    %460 = vmatpush1.msra.mxu0 %v273
    %461 = vmatprep.subr.mxu0 0.0
    %462 = vmatpush1.msra.mxu0 %v274
    %463 = vmatprep.subr.mxu0 0.0
    %464 = vmatpush1.msra.mxu0 %v275
    %465 = vmatprep.subr.mxu0 0.0
    %466 = vmatpush1.msra.mxu0 %v276
    %467 = vmatprep.subr.mxu0 0.0
    %468 = vmatpush1.msra.mxu0 %v277
    %469 = vmatprep.subr.mxu0 0.0
    %470 = vmatpush1.msra.mxu0 %v278
    %471 = vmatprep.subr.mxu0 0.0
    %472 = vmatpush1.msra.mxu0 %v279
    %473 = vmatprep.subr.mxu0 0.0
    %474 = vmatpush1.msra.mxu0 %v280
    %475 = vmatprep.subr.mxu0 0.0
    %476 = vmatpush1.msra.mxu0 0.0
    %477 = vmatprep.subr.mxu0 0.0
    %478 = vmatpush1.msra.mxu0 0.0
    %479 = vmatprep.subr.mxu0 0.0
    %480 = vmatpush1.msra.mxu0 0.0
    %481 = vmatprep.subr.mxu0 0.0
    %482 = vmatpush1.msra.mxu0 0.0
    %483 = vmatprep.subr.mxu0 0.0
    %484 = vmatpush1.msra.mxu0 0.0
    %485 = vmatprep.subr.mxu0 0.0
    %486 = vmatpush1.msra.mxu0 0.0
    %487 = vmatprep.subr.mxu0 0.0
    %488 = vmatpush1.msra.mxu0 0.0
    %489 = vmatprep.subr.mxu0 0.0
    %490 = vmatpush1.msra.mxu0 0.0
    %491 = vmatprep.subr.mxu0 0.0
    %492 = vmatpush1.msra.mxu0 0.0
    %493 = vmatprep.subr.mxu0 0.0
    %494 = vmatpush1.msra.mxu0 0.0
    %495 = vmatprep.subr.mxu0 0.0
    %496 = vmatpush1.msra.mxu0 0.0
    %497 = vmatprep.subr.mxu0 0.0
    %498 = vmatpush1.msra.mxu0 0.0
    %499 = vmatprep.subr.mxu0 0.0
    %500 = vmatpush1.msra.mxu0 0.0
    %501 = vmatprep.subr.mxu0 0.0
    %502 = vmatpush1.msra.mxu0 0.0
    %503 = vmatprep.subr.mxu0 0.0
    %504 = vmatpush1.msra.mxu0 0.0
    %505 = vmatprep.subr.mxu0 0.0
    %506 = vmatpush1.msra.mxu0 0.0
    %507 = vmatprep.subr.mxu0 0.0
    %508 = vmatpush1.msra.mxu0 0.0
    %509 = vmatprep.subr.mxu0 0.0
    %510 = vmatpush1.msra.mxu0 0.0
    %511 = vmatprep.subr.mxu0 0.0
    %512 = vmatpush1.msra.mxu0 0.0
    %513 = vmatprep.subr.mxu0 0.0
    %514 = vmatpush1.msra.mxu0 0.0
    %515 = vmatprep.subr.mxu0 0.0
    %516 = vmatpush1.msra.mxu0 0.0
    %517 = vmatprep.subr.mxu0 0.0
    %518 = vmatpush1.msra.mxu0 0.0
    %519 = vmatprep.subr.mxu0 0.0
    %520 = vmatpush1.msra.mxu0 0.0
    %521 = vmatprep.subr.mxu0 0.0
    %522 = vmatpush1.msra.mxu0 0.0
    %523 = vmatprep.mubr.f32.mxu0 0.0
    %524 = vmatmul.mubr.f32.gmra.mrb[0].mxu0 %v457
    %v525 = vpop.f32.mrb[0].mxu0
    %v526 = vadd.f32 0.0, %v525
    %v527 = vpop.f32.mrb[0].mxu0
    %528 = vdwg.mxu0
    %v529 = vadd.f32 %v454, %v526
    %v530 = vmul.f32 %v529, %v529
    %531 = vmatprep.subr.mxu0 0.0
    %532 = vmatpush1.msra.mxu0 %v97
    %533 = vmatprep.subr.mxu0 0.0
    %534 = vmatpush1.msra.mxu0 %v98
    %535 = vmatprep.subr.mxu0 0.0
    %536 = vmatpush1.msra.mxu0 %v99
    %537 = vmatprep.subr.mxu0 0.0
    %538 = vmatpush1.msra.mxu0 %v100
    %539 = vmatprep.subr.mxu0 0.0
    %540 = vmatpush1.msra.mxu0 %v101
    %541 = vmatprep.subr.mxu0 0.0
    %542 = vmatpush1.msra.mxu0 %v102
    %543 = vmatprep.subr.mxu0 0.0
    %544 = vmatpush1.msra.mxu0 %v103
    %545 = vmatprep.subr.mxu0 0.0
    %546 = vmatpush1.msra.mxu0 %v104
    %547 = vmatprep.subr.mxu0 0.0
    %548 = vmatpush1.msra.mxu0 %v105
    %549 = vmatprep.subr.mxu0 0.0
    %550 = vmatpush1.msra.mxu0 %v106
    %551 = vmatprep.subr.mxu0 0.0
    %552 = vmatpush1.msra.mxu0 %v107
    %553 = vmatprep.subr.mxu0 0.0
    %554 = vmatpush1.msra.mxu0 %v108
    %555 = vmatprep.subr.mxu0 0.0
    %556 = vmatpush1.msra.mxu0 %v109
    %557 = vmatprep.subr.mxu0 0.0
    %558 = vmatpush1.msra.mxu0 %v110
    %559 = vmatprep.subr.mxu0 0.0
    %560 = vmatpush1.msra.mxu0 %v111
    %561 = vmatprep.subr.mxu0 0.0
    %562 = vmatpush1.msra.mxu0 %v112
    %563 = vmatprep.subr.mxu0 0.0
    %564 = vmatpush1.msra.mxu0 0.0
    %565 = vmatprep.subr.mxu0 0.0
    %566 = vmatpush1.msra.mxu0 0.0
    %567 = vmatprep.subr.mxu0 0.0
    %568 = vmatpush1.msra.mxu0 0.0
    %569 = vmatprep.subr.mxu0 0.0
    %570 = vmatpush1.msra.mxu0 0.0
    %571 = vmatprep.subr.mxu0 0.0
    %572 = vmatpush1.msra.mxu0 0.0
    %573 = vmatprep.subr.mxu0 0.0
    %574 = vmatpush1.msra.mxu0 0.0
    %575 = vmatprep.subr.mxu0 0.0
    %576 = vmatpush1.msra.mxu0 0.0
    %577 = vmatprep.subr.mxu0 0.0
    %578 = vmatpush1.msra.mxu0 0.0
    %579 = vmatprep.subr.mxu0 0.0
    %580 = vmatpush1.msra.mxu0 0.0
    %581 = vmatprep.subr.mxu0 0.0
    %582 = vmatpush1.msra.mxu0 0.0
    %583 = vmatprep.subr.mxu0 0.0
    %584 = vmatpush1.msra.mxu0 0.0
    %585 = vmatprep.subr.mxu0 0.0
    %586 = vmatpush1.msra.mxu0 0.0
    %587 = vmatprep.subr.mxu0 0.0
    %588 = vmatpush1.msra.mxu0 0.0
    %589 = vmatprep.subr.mxu0 0.0
    %590 = vmatpush1.msra.mxu0 0.0
    %591 = vmatprep.subr.mxu0 0.0
    %592 = vmatpush1.msra.mxu0 0.0
    %593 = vmatprep.subr.mxu0 0.0
    %594 = vmatpush1.msra.mxu0 0.0
    %595 = vmatprep.mubr.f32.mxu0 0.0
    %596 = vmatmul.mubr.f32.gmra.mrb[0].mxu0 %v529
    %v597 = vpop.f32.mrb[0].mxu0
    %v598 = vadd.f32 0.0, %v597
    %v599 = vpop.f32.mrb[0].mxu0
    %600 = vmatprep.mubr.f32.mxu0 0.0
    %601 = vmatmul.mubr.f32.gmra.mrb[0].mxu0 %v530
    %v602 = vpop.f32.mrb[0].mxu0
    %v603 = vadd.f32 0.0, %v602
    %v604 = vpop.f32.mrb[0].mxu0
    %605 = vdwg.mxu0
    %v606 = vmul.f32 %v598, %v598
    %v607 = vsub.f32 %v603, %v606
    %v608 = vmax.f32 %v607, 0.0
    %v609 = vadd.f32 %v608, 1e-05
    %v610 = vmul.f32 %v609, %v94
    %v611 = vrsqrt.pop %v610
    %v612 = vsub.f32 %v529, %v598
    %v613 = vmul.f32 %v612, %v611
    %v614 = vxor.u32 %v613, 2147483648
    %v615 = vmul.f32 %v614, 1.442695
    %v616 = vpow.pop %v615
    %v617 = vadd.f32 %v616, 1.0
    %v618 = vrcp.pop %v617
    %v619 = vmul.f32 1.0, %v618
    %v620 = vmul.f32 %v619, %v95
    %v621 = vadd.f32 %v620, %v96
    %v622 = vmul.f32 %v621, %v451
    %624 = vrot.lane.b32.xlu0 %v621, 32
    %v625 = vpop.permute.xlu0 %624
    %v627 = vmul.f32 %v621, %v625
    %629 = vrot.lane.b32.xlu0 %v627, 32
    %v630 = vpop.permute.xlu0 %629
    %v632 = vadd.f32 %v622, %v630
    %v633 = vtanh.pop %v632
    %634 = vrot.lane.b32.xlu0 %v621, 96
    %v635 = vpop.permute.xlu0 %634
    %v637 = vmul.f32 %v633, %v635
    %639 = vrot.lane.b32.xlu0 %v637, 96
    %v640 = vpop.permute.xlu0 %639
    %642 = vst.msk [vmem:[#allocation2] sm:$0xff] %vm264, %v640
    %v643 = vadd.f32 %v637, 0.0
    %v644 = vsel %vm264, %v640, %v632
    %s645 = scalar_lea.vmem [#allocation3], 8
    %v646 = vld [vmem:[%s645] sm:$0xff]
    %v648 = vsel %vm455, %v644, 0
    %650 = vmatprep.subr.mxu0 0.0
    %651 = vmatpush1.msra.mxu0 %v273
    %652 = vmatprep.subr.mxu0 0.0
    %653 = vmatpush1.msra.mxu0 %v274
    %654 = vmatprep.subr.mxu0 0.0
    %655 = vmatpush1.msra.mxu0 %v275
    %656 = vmatprep.subr.mxu0 0.0
    %657 = vmatpush1.msra.mxu0 %v276
    %658 = vmatprep.subr.mxu0 0.0
    %659 = vmatpush1.msra.mxu0 %v277
    %660 = vmatprep.subr.mxu0 0.0
    %661 = vmatpush1.msra.mxu0 %v278
    %662 = vmatprep.subr.mxu0 0.0
    %663 = vmatpush1.msra.mxu0 %v279
    %664 = vmatprep.subr.mxu0 0.0
    %665 = vmatpush1.msra.mxu0 %v280
    %666 = vmatprep.subr.mxu0 0.0
    %667 = vmatpush1.msra.mxu0 0.0
    %668 = vmatprep.subr.mxu0 0.0
    %669 = vmatpush1.msra.mxu0 0.0
    %670 = vmatprep.subr.mxu0 0.0
    %671 = vmatpush1.msra.mxu0 0.0
    %672 = vmatprep.subr.mxu0 0.0
    %673 = vmatpush1.msra.mxu0 0.0
    %674 = vmatprep.subr.mxu0 0.0
    %675 = vmatpush1.msra.mxu0 0.0
    %676 = vmatprep.subr.mxu0 0.0
    %677 = vmatpush1.msra.mxu0 0.0
    %678 = vmatprep.subr.mxu0 0.0
    %679 = vmatpush1.msra.mxu0 0.0
    %680 = vmatprep.subr.mxu0 0.0
    %681 = vmatpush1.msra.mxu0 0.0
    %682 = vmatprep.subr.mxu0 0.0
    %683 = vmatpush1.msra.mxu0 0.0
    %684 = vmatprep.subr.mxu0 0.0
    %685 = vmatpush1.msra.mxu0 0.0
    %686 = vmatprep.subr.mxu0 0.0
    %687 = vmatpush1.msra.mxu0 0.0
    %688 = vmatprep.subr.mxu0 0.0
    %689 = vmatpush1.msra.mxu0 0.0
    %690 = vmatprep.subr.mxu0 0.0
    %691 = vmatpush1.msra.mxu0 0.0
    %692 = vmatprep.subr.mxu0 0.0
    %693 = vmatpush1.msra.mxu0 0.0
    %694 = vmatprep.subr.mxu0 0.0
    %695 = vmatpush1.msra.mxu0 0.0
    %696 = vmatprep.subr.mxu0 0.0
    %697 = vmatpush1.msra.mxu0 0.0
    %698 = vmatprep.subr.mxu0 0.0
    %699 = vmatpush1.msra.mxu0 0.0
    %700 = vmatprep.subr.mxu0 0.0
    %701 = vmatpush1.msra.mxu0 0.0
    %702 = vmatprep.subr.mxu0 0.0
    %703 = vmatpush1.msra.mxu0 0.0
    %704 = vmatprep.subr.mxu0 0.0
    %705 = vmatpush1.msra.mxu0 0.0
    %706 = vmatprep.subr.mxu0 0.0
    %707 = vmatpush1.msra.mxu0 0.0
    %708 = vmatprep.subr.mxu0 0.0
    %709 = vmatpush1.msra.mxu0 0.0
    %710 = vmatprep.subr.mxu0 0.0
    %711 = vmatpush1.msra.mxu0 0.0
    %712 = vmatprep.subr.mxu0 0.0
    %713 = vmatpush1.msra.mxu0 0.0
    %714 = vmatprep.mubr.f32.mxu0 0.0
    %715 = vmatmul.mubr.f32.gmra.mrb[0].mxu0 %v648
    %v716 = vpop.f32.mrb[0].mxu0
    %v717 = vadd.f32 0.0, %v716
    %v718 = vpop.f32.mrb[0].mxu0
    %719 = vdwg.mxu0
    %v720 = vadd.f32 %v646, %v717
    %v721 = vmul.f32 %v720, %v720
    %722 = vmatprep.subr.mxu0 0.0
    %723 = vmatpush1.msra.mxu0 %v97
    %724 = vmatprep.subr.mxu0 0.0
    %725 = vmatpush1.msra.mxu0 %v98
    %726 = vmatprep.subr.mxu0 0.0
    %727 = vmatpush1.msra.mxu0 %v99
    %728 = vmatprep.subr.mxu0 0.0
    %729 = vmatpush1.msra.mxu0 %v100
    %730 = vmatprep.subr.mxu0 0.0
    %731 = vmatpush1.msra.mxu0 %v101
    %732 = vmatprep.subr.mxu0 0.0
    %733 = vmatpush1.msra.mxu0 %v102
    %734 = vmatprep.subr.mxu0 0.0
    %735 = vmatpush1.msra.mxu0 %v103
    %736 = vmatprep.subr.mxu0 0.0
    %737 = vmatpush1.msra.mxu0 %v104
    %738 = vmatprep.subr.mxu0 0.0
    %739 = vmatpush1.msra.mxu0 %v105
    %740 = vmatprep.subr.mxu0 0.0
    %741 = vmatpush1.msra.mxu0 %v106
    %742 = vmatprep.subr.mxu0 0.0
    %743 = vmatpush1.msra.mxu0 %v107
    %744 = vmatprep.subr.mxu0 0.0
    %745 = vmatpush1.msra.mxu0 %v108
    %746 = vmatprep.subr.mxu0 0.0
    %747 = vmatpush1.msra.mxu0 %v109
    %748 = vmatprep.subr.mxu0 0.0
    %749 = vmatpush1.msra.mxu0 %v110
    %750 = vmatprep.subr.mxu0 0.0
    %751 = vmatpush1.msra.mxu0 %v111
    %752 = vmatprep.subr.mxu0 0.0
    %753 = vmatpush1.msra.mxu0 %v112
    %754 = vmatprep.subr.mxu0 0.0
    %755 = vmatpush1.msra.mxu0 0.0
    %756 = vmatprep.subr.mxu0 0.0
    %757 = vmatpush1.msra.mxu0 0.0
    %758 = vmatprep.subr.mxu0 0.0
    %759 = vmatpush1.msra.mxu0 0.0
    %760 = vmatprep.subr.mxu0 0.0
    %761 = vmatpush1.msra.mxu0 0.0
    %762 = vmatprep.subr.mxu0 0.0
    %763 = vmatpush1.msra.mxu0 0.0
    %764 = vmatprep.subr.mxu0 0.0
    %765 = vmatpush1.msra.mxu0 0.0
    %766 = vmatprep.subr.mxu0 0.0
    %767 = vmatpush1.msra.mxu0 0.0
    %768 = vmatprep.subr.mxu0 0.0
    %769 = vmatpush1.msra.mxu0 0.0
    %770 = vmatprep.subr.mxu0 0.0
    %771 = vmatpush1.msra.mxu0 0.0
    %772 = vmatprep.subr.mxu0 0.0
    %773 = vmatpush1.msra.mxu0 0.0
    %774 = vmatprep.subr.mxu0 0.0
    %775 = vmatpush1.msra.mxu0 0.0
    %776 = vmatprep.subr.mxu0 0.0
    %777 = vmatpush1.msra.mxu0 0.0
    %778 = vmatprep.subr.mxu0 0.0
    %779 = vmatpush1.msra.mxu0 0.0
    %780 = vmatprep.subr.mxu0 0.0
    %781 = vmatpush1.msra.mxu0 0.0
    %782 = vmatprep.subr.mxu0 0.0
    %783 = vmatpush1.msra.mxu0 0.0
    %784 = vmatprep.subr.mxu0 0.0
    %785 = vmatpush1.msra.mxu0 0.0
    %786 = vmatprep.mubr.f32.mxu0 0.0
    %787 = vmatmul.mubr.f32.gmra.mrb[0].mxu0 %v720
    %v788 = vpop.f32.mrb[0].mxu0
    %v789 = vadd.f32 0.0, %v788
    %v790 = vpop.f32.mrb[0].mxu0
    %791 = vmatprep.mubr.f32.mxu0 0.0
    %792 = vmatmul.mubr.f32.gmra.mrb[0].mxu0 %v721
    %v793 = vpop.f32.mrb[0].mxu0
    %v794 = vadd.f32 0.0, %v793
    %v795 = vpop.f32.mrb[0].mxu0
    %796 = vdwg.mxu0
    %v797 = vmul.f32 %v789, %v789
    %v798 = vsub.f32 %v794, %v797
    %v799 = vmax.f32 %v798, 0.0
    %v800 = vadd.f32 %v799, 1e-05
    %v801 = vmul.f32 %v800, %v94
    %v802 = vrsqrt.pop %v801
    %v803 = vsub.f32 %v720, %v789
    %v804 = vmul.f32 %v803, %v802
    %v805 = vxor.u32 %v804, 2147483648
    %v806 = vmul.f32 %v805, 1.442695
    %v807 = vpow.pop %v806
    %v808 = vadd.f32 %v807, 1.0
    %v809 = vrcp.pop %v808
    %v810 = vmul.f32 1.0, %v809
    %v811 = vmul.f32 %v810, %v95
    %v812 = vadd.f32 %v811, %v96
    %v813 = vmul.f32 %v812, %v632
    %815 = vrot.lane.b32.xlu0 %v812, 32
    %v816 = vpop.permute.xlu0 %815
    %v818 = vmul.f32 %v812, %v816
    %820 = vrot.lane.b32.xlu0 %v818, 32
    %v821 = vpop.permute.xlu0 %820
    %v823 = vadd.f32 %v813, %v821
    %v824 = vtanh.pop %v823
    %825 = vrot.lane.b32.xlu0 %v812, 96
    %v826 = vpop.permute.xlu0 %825
    %v828 = vmul.f32 %v824, %v826
    %830 = vrot.lane.b32.xlu0 %v828, 96
    %v831 = vpop.permute.xlu0 %830
    %s833 = scalar_lea.vmem [#allocation2], 8
    %834 = vst.msk [vmem:[%s833] sm:$0xff] %vm264, %v831
    %v835 = vadd.f32 %v643, %v828
    %v836 = vsel %vm264, %v831, %v823
    %s837 = scalar_lea.vmem [#allocation3], 16
    %v838 = vld [vmem:[%s837] sm:$0xff]
    %v840 = vsel %vm455, %v836, 0
    %842 = vmatprep.subr.mxu0 0.0
    %843 = vmatpush1.msra.mxu0 %v273
    %844 = vmatprep.subr.mxu0 0.0
    %845 = vmatpush1.msra.mxu0 %v274
    %846 = vmatprep.subr.mxu0 0.0
    %847 = vmatpush1.msra.mxu0 %v275
    %848 = vmatprep.subr.mxu0 0.0
    %849 = vmatpush1.msra.mxu0 %v276
    %850 = vmatprep.subr.mxu0 0.0
    %851 = vmatpush1.msra.mxu0 %v277
    %852 = vmatprep.subr.mxu0 0.0
    %853 = vmatpush1.msra.mxu0 %v278
    %854 = vmatprep.subr.mxu0 0.0
    %855 = vmatpush1.msra.mxu0 %v279
    %856 = vmatprep.subr.mxu0 0.0
    %857 = vmatpush1.msra.mxu0 %v280
    %858 = vmatprep.subr.mxu0 0.0
    %859 = vmatpush1.msra.mxu0 0.0
    %860 = vmatprep.subr.mxu0 0.0
    %861 = vmatpush1.msra.mxu0 0.0
    %862 = vmatprep.subr.mxu0 0.0
    %863 = vmatpush1.msra.mxu0 0.0
    %864 = vmatprep.subr.mxu0 0.0
    %865 = vmatpush1.msra.mxu0 0.0
    %866 = vmatprep.subr.mxu0 0.0
    %867 = vmatpush1.msra.mxu0 0.0
    %868 = vmatprep.subr.mxu0 0.0
    %869 = vmatpush1.msra.mxu0 0.0
    %870 = vmatprep.subr.mxu0 0.0
    %871 = vmatpush1.msra.mxu0 0.0
    %872 = vmatprep.subr.mxu0 0.0
    %873 = vmatpush1.msra.mxu0 0.0
    %874 = vmatprep.subr.mxu0 0.0
    %875 = vmatpush1.msra.mxu0 0.0
    %876 = vmatprep.subr.mxu0 0.0
    %877 = vmatpush1.msra.mxu0 0.0
    %878 = vmatprep.subr.mxu0 0.0
    %879 = vmatpush1.msra.mxu0 0.0
    %880 = vmatprep.subr.mxu0 0.0
    %881 = vmatpush1.msra.mxu0 0.0
    %882 = vmatprep.subr.mxu0 0.0
    %883 = vmatpush1.msra.mxu0 0.0
    %884 = vmatprep.subr.mxu0 0.0
    %885 = vmatpush1.msra.mxu0 0.0
    %886 = vmatprep.subr.mxu0 0.0
    %887 = vmatpush1.msra.mxu0 0.0
    %888 = vmatprep.subr.mxu0 0.0
    %889 = vmatpush1.msra.mxu0 0.0
    %890 = vmatprep.subr.mxu0 0.0
    %891 = vmatpush1.msra.mxu0 0.0
    %892 = vmatprep.subr.mxu0 0.0
    %893 = vmatpush1.msra.mxu0 0.0
    %894 = vmatprep.subr.mxu0 0.0
    %895 = vmatpush1.msra.mxu0 0.0
    %896 = vmatprep.subr.mxu0 0.0
    %897 = vmatpush1.msra.mxu0 0.0
    %898 = vmatprep.subr.mxu0 0.0
    %899 = vmatpush1.msra.mxu0 0.0
    %900 = vmatprep.subr.mxu0 0.0
    %901 = vmatpush1.msra.mxu0 0.0
    %902 = vmatprep.subr.mxu0 0.0
    %903 = vmatpush1.msra.mxu0 0.0
    %904 = vmatprep.subr.mxu0 0.0
    %905 = vmatpush1.msra.mxu0 0.0
    %906 = vmatprep.mubr.f32.mxu0 0.0
    %907 = vmatmul.mubr.f32.gmra.mrb[0].mxu0 %v840
    %v908 = vpop.f32.mrb[0].mxu0
    %v909 = vadd.f32 0.0, %v908
    %v910 = vpop.f32.mrb[0].mxu0
    %911 = vdwg.mxu0
    %v912 = vadd.f32 %v838, %v909
    %v913 = vmul.f32 %v912, %v912
    %914 = vmatprep.subr.mxu0 0.0
    %915 = vmatpush1.msra.mxu0 %v97
    %916 = vmatprep.subr.mxu0 0.0
    %917 = vmatpush1.msra.mxu0 %v98
    %918 = vmatprep.subr.mxu0 0.0
    %919 = vmatpush1.msra.mxu0 %v99
    %920 = vmatprep.subr.mxu0 0.0
    %921 = vmatpush1.msra.mxu0 %v100
    %922 = vmatprep.subr.mxu0 0.0
    %923 = vmatpush1.msra.mxu0 %v101
    %924 = vmatprep.subr.mxu0 0.0
    %925 = vmatpush1.msra.mxu0 %v102
    %926 = vmatprep.subr.mxu0 0.0
    %927 = vmatpush1.msra.mxu0 %v103
    %928 = vmatprep.subr.mxu0 0.0
    %929 = vmatpush1.msra.mxu0 %v104
    %930 = vmatprep.subr.mxu0 0.0
    %931 = vmatpush1.msra.mxu0 %v105
    %932 = vmatprep.subr.mxu0 0.0
    %933 = vmatpush1.msra.mxu0 %v106
    %934 = vmatprep.subr.mxu0 0.0
    %935 = vmatpush1.msra.mxu0 %v107
    %936 = vmatprep.subr.mxu0 0.0
    %937 = vmatpush1.msra.mxu0 %v108
    %938 = vmatprep.subr.mxu0 0.0
    %939 = vmatpush1.msra.mxu0 %v109
    %940 = vmatprep.subr.mxu0 0.0
    %941 = vmatpush1.msra.mxu0 %v110
    %942 = vmatprep.subr.mxu0 0.0
    %943 = vmatpush1.msra.mxu0 %v111
    %944 = vmatprep.subr.mxu0 0.0
    %945 = vmatpush1.msra.mxu0 %v112
    %946 = vmatprep.subr.mxu0 0.0
    %947 = vmatpush1.msra.mxu0 0.0
    %948 = vmatprep.subr.mxu0 0.0
    %949 = vmatpush1.msra.mxu0 0.0
    %950 = vmatprep.subr.mxu0 0.0
    %951 = vmatpush1.msra.mxu0 0.0
    %952 = vmatprep.subr.mxu0 0.0
    %953 = vmatpush1.msra.mxu0 0.0
    %954 = vmatprep.subr.mxu0 0.0
    %955 = vmatpush1.msra.mxu0 0.0
    %956 = vmatprep.subr.mxu0 0.0
    %957 = vmatpush1.msra.mxu0 0.0
    %958 = vmatprep.subr.mxu0 0.0
    %959 = vmatpush1.msra.mxu0 0.0
    %960 = vmatprep.subr.mxu0 0.0
    %961 = vmatpush1.msra.mxu0 0.0
    %962 = vmatprep.subr.mxu0 0.0
    %963 = vmatpush1.msra.mxu0 0.0
    %964 = vmatprep.subr.mxu0 0.0
    %965 = vmatpush1.msra.mxu0 0.0
    %966 = vmatprep.subr.mxu0 0.0
    %967 = vmatpush1.msra.mxu0 0.0
    %968 = vmatprep.subr.mxu0 0.0
    %969 = vmatpush1.msra.mxu0 0.0
    %970 = vmatprep.subr.mxu0 0.0
    %971 = vmatpush1.msra.mxu0 0.0
    %972 = vmatprep.subr.mxu0 0.0
    %973 = vmatpush1.msra.mxu0 0.0
    %974 = vmatprep.subr.mxu0 0.0
    %975 = vmatpush1.msra.mxu0 0.0
    %976 = vmatprep.subr.mxu0 0.0
    %977 = vmatpush1.msra.mxu0 0.0
    %978 = vmatprep.mubr.f32.mxu0 0.0
    %979 = vmatmul.mubr.f32.gmra.mrb[0].mxu0 %v912
    %v980 = vpop.f32.mrb[0].mxu0
    %v981 = vadd.f32 0.0, %v980
    %v982 = vpop.f32.mrb[0].mxu0
    %983 = vmatprep.mubr.f32.mxu0 0.0
    %984 = vmatmul.mubr.f32.gmra.mrb[0].mxu0 %v913
    %v985 = vpop.f32.mrb[0].mxu0
    %v986 = vadd.f32 0.0, %v985
    %v987 = vpop.f32.mrb[0].mxu0
    %988 = vdwg.mxu0
    %v989 = vmul.f32 %v981, %v981
    %v990 = vsub.f32 %v986, %v989
    %v991 = vmax.f32 %v990, 0.0
    %v992 = vadd.f32 %v991, 1e-05
    %v993 = vmul.f32 %v992, %v94
    %v994 = vrsqrt.pop %v993
    %v995 = vsub.f32 %v912, %v981
    %v996 = vmul.f32 %v995, %v994
    %v997 = vxor.u32 %v996, 2147483648
    %v998 = vmul.f32 %v997, 1.442695
    %v999 = vpow.pop %v998
    %v1000 = vadd.f32 %v999, 1.0
    %v1001 = vrcp.pop %v1000
    %v1002 = vmul.f32 1.0, %v1001
    %v1003 = vmul.f32 %v1002, %v95
    %v1004 = vadd.f32 %v1003, %v96
    %v1005 = vmul.f32 %v1004, %v823
    %1007 = vrot.lane.b32.xlu0 %v1004, 32
    %v1008 = vpop.permute.xlu0 %1007
    %v1010 = vmul.f32 %v1004, %v1008
    %1012 = vrot.lane.b32.xlu0 %v1010, 32
    %v1013 = vpop.permute.xlu0 %1012
    %v1015 = vadd.f32 %v1005, %v1013
    %v1016 = vtanh.pop %v1015
    %1017 = vrot.lane.b32.xlu0 %v1004, 96
    %v1018 = vpop.permute.xlu0 %1017
    %v1020 = vmul.f32 %v1016, %v1018
    %1022 = vrot.lane.b32.xlu0 %v1020, 96
    %v1023 = vpop.permute.xlu0 %1022
    %s1025 = scalar_lea.vmem [#allocation2], 16
    %1026 = vst.msk [vmem:[%s1025] sm:$0xff] %vm264, %v1023
    %v1027 = vadd.f32 %v835, %v1020
    %v1028 = vsel %vm264, %v1023, %v1015
    %s1029 = scalar_lea.vmem [#allocation3], 24
    %v1030 = vld [vmem:[%s1029] sm:$0xff]
    %v1032 = vsel %vm455, %v1028, 0
    %1034 = vmatprep.subr.mxu0 0.0
    %1035 = vmatpush1.msra.mxu0 %v273
    %1036 = vmatprep.subr.mxu0 0.0
    %1037 = vmatpush1.msra.mxu0 %v274
    %1038 = vmatprep.subr.mxu0 0.0
    %1039 = vmatpush1.msra.mxu0 %v275
    %1040 = vmatprep.subr.mxu0 0.0
    %1041 = vmatpush1.msra.mxu0 %v276
    %1042 = vmatprep.subr.mxu0 0.0
    %1043 = vmatpush1.msra.mxu0 %v277
    %1044 = vmatprep.subr.mxu0 0.0
    %1045 = vmatpush1.msra.mxu0 %v278
    %1046 = vmatprep.subr.mxu0 0.0
    %1047 = vmatpush1.msra.mxu0 %v279
    %1048 = vmatprep.subr.mxu0 0.0
    %1049 = vmatpush1.msra.mxu0 %v280
    %1050 = vmatprep.subr.mxu0 0.0
    %1051 = vmatpush1.msra.mxu0 0.0
    %1052 = vmatprep.subr.mxu0 0.0
    %1053 = vmatpush1.msra.mxu0 0.0
    %1054 = vmatprep.subr.mxu0 0.0
    %1055 = vmatpush1.msra.mxu0 0.0
    %1056 = vmatprep.subr.mxu0 0.0
    %1057 = vmatpush1.msra.mxu0 0.0
    %1058 = vmatprep.subr.mxu0 0.0
    %1059 = vmatpush1.msra.mxu0 0.0
    %1060 = vmatprep.subr.mxu0 0.0
    %1061 = vmatpush1.msra.mxu0 0.0
    %1062 = vmatprep.subr.mxu0 0.0
    %1063 = vmatpush1.msra.mxu0 0.0
    %1064 = vmatprep.subr.mxu0 0.0
    %1065 = vmatpush1.msra.mxu0 0.0
    %1066 = vmatprep.subr.mxu0 0.0
    %1067 = vmatpush1.msra.mxu0 0.0
    %1068 = vmatprep.subr.mxu0 0.0
    %1069 = vmatpush1.msra.mxu0 0.0
    %1070 = vmatprep.subr.mxu0 0.0
    %1071 = vmatpush1.msra.mxu0 0.0
    %1072 = vmatprep.subr.mxu0 0.0
    %1073 = vmatpush1.msra.mxu0 0.0
    %1074 = vmatprep.subr.mxu0 0.0
    %1075 = vmatpush1.msra.mxu0 0.0
    %1076 = vmatprep.subr.mxu0 0.0
    %1077 = vmatpush1.msra.mxu0 0.0
    %1078 = vmatprep.subr.mxu0 0.0
    %1079 = vmatpush1.msra.mxu0 0.0
    %1080 = vmatprep.subr.mxu0 0.0
    %1081 = vmatpush1.msra.mxu0 0.0
    %1082 = vmatprep.subr.mxu0 0.0
    %1083 = vmatpush1.msra.mxu0 0.0
    %1084 = vmatprep.subr.mxu0 0.0
    %1085 = vmatpush1.msra.mxu0 0.0
    %1086 = vmatprep.subr.mxu0 0.0
    %1087 = vmatpush1.msra.mxu0 0.0
    %1088 = vmatprep.subr.mxu0 0.0
    %1089 = vmatpush1.msra.mxu0 0.0
    %1090 = vmatprep.subr.mxu0 0.0
    %1091 = vmatpush1.msra.mxu0 0.0
    %1092 = vmatprep.subr.mxu0 0.0
    %1093 = vmatpush1.msra.mxu0 0.0
    %1094 = vmatprep.subr.mxu0 0.0
    %1095 = vmatpush1.msra.mxu0 0.0
    %1096 = vmatprep.subr.mxu0 0.0
    %1097 = vmatpush1.msra.mxu0 0.0
    %1098 = vmatprep.mubr.f32.mxu0 0.0
    %1099 = vmatmul.mubr.f32.gmra.mrb[0].mxu0 %v1032
    %v1100 = vpop.f32.mrb[0].mxu0
    %v1101 = vadd.f32 0.0, %v1100
    %v1102 = vpop.f32.mrb[0].mxu0
    %1103 = vdwg.mxu0
    %v1104 = vadd.f32 %v1030, %v1101
    %v1105 = vmul.f32 %v1104, %v1104
    %1106 = vmatprep.subr.mxu0 0.0
    %1107 = vmatpush1.msra.mxu0 %v97
    %1108 = vmatprep.subr.mxu0 0.0
    %1109 = vmatpush1.msra.mxu0 %v98
    %1110 = vmatprep.subr.mxu0 0.0
    %1111 = vmatpush1.msra.mxu0 %v99
    %1112 = vmatprep.subr.mxu0 0.0
    %1113 = vmatpush1.msra.mxu0 %v100
    %1114 = vmatprep.subr.mxu0 0.0
    %1115 = vmatpush1.msra.mxu0 %v101
    %1116 = vmatprep.subr.mxu0 0.0
    %1117 = vmatpush1.msra.mxu0 %v102
    %1118 = vmatprep.subr.mxu0 0.0
    %1119 = vmatpush1.msra.mxu0 %v103
    %1120 = vmatprep.subr.mxu0 0.0
    %1121 = vmatpush1.msra.mxu0 %v104
    %1122 = vmatprep.subr.mxu0 0.0
    %1123 = vmatpush1.msra.mxu0 %v105
    %1124 = vmatprep.subr.mxu0 0.0
    %1125 = vmatpush1.msra.mxu0 %v106
    %1126 = vmatprep.subr.mxu0 0.0
    %1127 = vmatpush1.msra.mxu0 %v107
    %1128 = vmatprep.subr.mxu0 0.0
    %1129 = vmatpush1.msra.mxu0 %v108
    %1130 = vmatprep.subr.mxu0 0.0
    %1131 = vmatpush1.msra.mxu0 %v109
    %1132 = vmatprep.subr.mxu0 0.0
    %1133 = vmatpush1.msra.mxu0 %v110
    %1134 = vmatprep.subr.mxu0 0.0
    %1135 = vmatpush1.msra.mxu0 %v111
    %1136 = vmatprep.subr.mxu0 0.0
    %1137 = vmatpush1.msra.mxu0 %v112
    %1138 = vmatprep.subr.mxu0 0.0
    %1139 = vmatpush1.msra.mxu0 0.0
    %1140 = vmatprep.subr.mxu0 0.0
    %1141 = vmatpush1.msra.mxu0 0.0
    %1142 = vmatprep.subr.mxu0 0.0
    %1143 = vmatpush1.msra.mxu0 0.0
    %1144 = vmatprep.subr.mxu0 0.0
    %1145 = vmatpush1.msra.mxu0 0.0
    %1146 = vmatprep.subr.mxu0 0.0
    %1147 = vmatpush1.msra.mxu0 0.0
    %1148 = vmatprep.subr.mxu0 0.0
    %1149 = vmatpush1.msra.mxu0 0.0
    %1150 = vmatprep.subr.mxu0 0.0
    %1151 = vmatpush1.msra.mxu0 0.0
    %1152 = vmatprep.subr.mxu0 0.0
    %1153 = vmatpush1.msra.mxu0 0.0
    %1154 = vmatprep.subr.mxu0 0.0
    %1155 = vmatpush1.msra.mxu0 0.0
    %1156 = vmatprep.subr.mxu0 0.0
    %1157 = vmatpush1.msra.mxu0 0.0
    %1158 = vmatprep.subr.mxu0 0.0
    %1159 = vmatpush1.msra.mxu0 0.0
    %1160 = vmatprep.subr.mxu0 0.0
    %1161 = vmatpush1.msra.mxu0 0.0
    %1162 = vmatprep.subr.mxu0 0.0
    %1163 = vmatpush1.msra.mxu0 0.0
    %1164 = vmatprep.subr.mxu0 0.0
    %1165 = vmatpush1.msra.mxu0 0.0
    %1166 = vmatprep.subr.mxu0 0.0
    %1167 = vmatpush1.msra.mxu0 0.0
    %1168 = vmatprep.subr.mxu0 0.0
    %1169 = vmatpush1.msra.mxu0 0.0
    %1170 = vmatprep.mubr.f32.mxu0 0.0
    %1171 = vmatmul.mubr.f32.gmra.mrb[0].mxu0 %v1104
    %v1172 = vpop.f32.mrb[0].mxu0
    %v1173 = vadd.f32 0.0, %v1172
    %v1174 = vpop.f32.mrb[0].mxu0
    %1175 = vmatprep.mubr.f32.mxu0 0.0
    %1176 = vmatmul.mubr.f32.gmra.mrb[0].mxu0 %v1105
    %v1177 = vpop.f32.mrb[0].mxu0
    %v1178 = vadd.f32 0.0, %v1177
    %v1179 = vpop.f32.mrb[0].mxu0
    %1180 = vdwg.mxu0
    %v1181 = vmul.f32 %v1173, %v1173
    %v1182 = vsub.f32 %v1178, %v1181
    %v1183 = vmax.f32 %v1182, 0.0
    %v1184 = vadd.f32 %v1183, 1e-05
    %v1185 = vmul.f32 %v1184, %v94
    %v1186 = vrsqrt.pop %v1185
    %v1187 = vsub.f32 %v1104, %v1173
    %v1188 = vmul.f32 %v1187, %v1186
    %v1189 = vxor.u32 %v1188, 2147483648
    %v1190 = vmul.f32 %v1189, 1.442695
    %v1191 = vpow.pop %v1190
    %v1192 = vadd.f32 %v1191, 1.0
    %v1193 = vrcp.pop %v1192
    %v1194 = vmul.f32 1.0, %v1193
    %v1195 = vmul.f32 %v1194, %v95
    %v1196 = vadd.f32 %v1195, %v96
    %v1197 = vmul.f32 %v1196, %v1015
    %1199 = vrot.lane.b32.xlu0 %v1196, 32
    %v1200 = vpop.permute.xlu0 %1199
    %v1202 = vmul.f32 %v1196, %v1200
    %1204 = vrot.lane.b32.xlu0 %v1202, 32
    %v1205 = vpop.permute.xlu0 %1204
    %v1207 = vadd.f32 %v1197, %v1205
    %v1208 = vtanh.pop %v1207
    %1209 = vrot.lane.b32.xlu0 %v1196, 96
    %v1210 = vpop.permute.xlu0 %1209
    %v1212 = vmul.f32 %v1208, %v1210
    %1214 = vrot.lane.b32.xlu0 %v1212, 96
    %v1215 = vpop.permute.xlu0 %1214
    %s1217 = scalar_lea.vmem [#allocation2], 24
    %1218 = vst.msk [vmem:[%s1217] sm:$0xff] %vm264, %v1215
    %v1219 = vadd.f32 %v1027, %v1212
    %v1220 = vsel %vm264, %v1215, %v1207
    %s1221 = scalar_lea.vmem [#allocation3], 32
    %v1222 = vld [vmem:[%s1221] sm:$0xff]
    %v1224 = vsel %vm455, %v1220, 0
    %1226 = vmatprep.subr.mxu0 0.0
    %1227 = vmatpush1.msra.mxu0 %v273
    %1228 = vmatprep.subr.mxu0 0.0
    %1229 = vmatpush1.msra.mxu0 %v274
    %1230 = vmatprep.subr.mxu0 0.0
    %1231 = vmatpush1.msra.mxu0 %v275
    %1232 = vmatprep.subr.mxu0 0.0
    %1233 = vmatpush1.msra.mxu0 %v276
    %1234 = vmatprep.subr.mxu0 0.0
    %1235 = vmatpush1.msra.mxu0 %v277
    %1236 = vmatprep.subr.mxu0 0.0
    %1237 = vmatpush1.msra.mxu0 %v278
    %1238 = vmatprep.subr.mxu0 0.0
    %1239 = vmatpush1.msra.mxu0 %v279
    %1240 = vmatprep.subr.mxu0 0.0
    %1241 = vmatpush1.msra.mxu0 %v280
    %1242 = vmatprep.subr.mxu0 0.0
    %1243 = vmatpush1.msra.mxu0 0.0
    %1244 = vmatprep.subr.mxu0 0.0
    %1245 = vmatpush1.msra.mxu0 0.0
    %1246 = vmatprep.subr.mxu0 0.0
    %1247 = vmatpush1.msra.mxu0 0.0
    %1248 = vmatprep.subr.mxu0 0.0
    %1249 = vmatpush1.msra.mxu0 0.0
    %1250 = vmatprep.subr.mxu0 0.0
    %1251 = vmatpush1.msra.mxu0 0.0
    %1252 = vmatprep.subr.mxu0 0.0
    %1253 = vmatpush1.msra.mxu0 0.0
    %1254 = vmatprep.subr.mxu0 0.0
    %1255 = vmatpush1.msra.mxu0 0.0
    %1256 = vmatprep.subr.mxu0 0.0
    %1257 = vmatpush1.msra.mxu0 0.0
    %1258 = vmatprep.subr.mxu0 0.0
    %1259 = vmatpush1.msra.mxu0 0.0
    %1260 = vmatprep.subr.mxu0 0.0
    %1261 = vmatpush1.msra.mxu0 0.0
    %1262 = vmatprep.subr.mxu0 0.0
    %1263 = vmatpush1.msra.mxu0 0.0
    %1264 = vmatprep.subr.mxu0 0.0
    %1265 = vmatpush1.msra.mxu0 0.0
    %1266 = vmatprep.subr.mxu0 0.0
    %1267 = vmatpush1.msra.mxu0 0.0
    %1268 = vmatprep.subr.mxu0 0.0
    %1269 = vmatpush1.msra.mxu0 0.0
    %1270 = vmatprep.subr.mxu0 0.0
    %1271 = vmatpush1.msra.mxu0 0.0
    %1272 = vmatprep.subr.mxu0 0.0
    %1273 = vmatpush1.msra.mxu0 0.0
    %1274 = vmatprep.subr.mxu0 0.0
    %1275 = vmatpush1.msra.mxu0 0.0
    %1276 = vmatprep.subr.mxu0 0.0
    %1277 = vmatpush1.msra.mxu0 0.0
    %1278 = vmatprep.subr.mxu0 0.0
    %1279 = vmatpush1.msra.mxu0 0.0
    %1280 = vmatprep.subr.mxu0 0.0
    %1281 = vmatpush1.msra.mxu0 0.0
    %1282 = vmatprep.subr.mxu0 0.0
    %1283 = vmatpush1.msra.mxu0 0.0
    %1284 = vmatprep.subr.mxu0 0.0
    %1285 = vmatpush1.msra.mxu0 0.0
    %1286 = vmatprep.subr.mxu0 0.0
    %1287 = vmatpush1.msra.mxu0 0.0
    %1288 = vmatprep.subr.mxu0 0.0
    %1289 = vmatpush1.msra.mxu0 0.0
    %1290 = vmatprep.mubr.f32.mxu0 0.0
    %1291 = vmatmul.mubr.f32.gmra.mrb[0].mxu0 %v1224
    %v1292 = vpop.f32.mrb[0].mxu0
    %v1293 = vadd.f32 0.0, %v1292
    %v1294 = vpop.f32.mrb[0].mxu0
    %1295 = vdwg.mxu0
    %v1296 = vadd.f32 %v1222, %v1293
    %v1297 = vmul.f32 %v1296, %v1296
    %1298 = vmatprep.subr.mxu0 0.0
    %1299 = vmatpush1.msra.mxu0 %v97
    %1300 = vmatprep.subr.mxu0 0.0
    %1301 = vmatpush1.msra.mxu0 %v98
    %1302 = vmatprep.subr.mxu0 0.0
    %1303 = vmatpush1.msra.mxu0 %v99
    %1304 = vmatprep.subr.mxu0 0.0
    %1305 = vmatpush1.msra.mxu0 %v100
    %1306 = vmatprep.subr.mxu0 0.0
    %1307 = vmatpush1.msra.mxu0 %v101
    %1308 = vmatprep.subr.mxu0 0.0
    %1309 = vmatpush1.msra.mxu0 %v102
    %1310 = vmatprep.subr.mxu0 0.0
    %1311 = vmatpush1.msra.mxu0 %v103
    %1312 = vmatprep.subr.mxu0 0.0
    %1313 = vmatpush1.msra.mxu0 %v104
    %1314 = vmatprep.subr.mxu0 0.0
    %1315 = vmatpush1.msra.mxu0 %v105
    %1316 = vmatprep.subr.mxu0 0.0
    %1317 = vmatpush1.msra.mxu0 %v106
    %1318 = vmatprep.subr.mxu0 0.0
    %1319 = vmatpush1.msra.mxu0 %v107
    %1320 = vmatprep.subr.mxu0 0.0
    %1321 = vmatpush1.msra.mxu0 %v108
    %1322 = vmatprep.subr.mxu0 0.0
    %1323 = vmatpush1.msra.mxu0 %v109
    %1324 = vmatprep.subr.mxu0 0.0
    %1325 = vmatpush1.msra.mxu0 %v110
    %1326 = vmatprep.subr.mxu0 0.0
    %1327 = vmatpush1.msra.mxu0 %v111
    %1328 = vmatprep.subr.mxu0 0.0
    %1329 = vmatpush1.msra.mxu0 %v112
    %1330 = vmatprep.subr.mxu0 0.0
    %1331 = vmatpush1.msra.mxu0 0.0
    %1332 = vmatprep.subr.mxu0 0.0
    %1333 = vmatpush1.msra.mxu0 0.0
    %1334 = vmatprep.subr.mxu0 0.0
    %1335 = vmatpush1.msra.mxu0 0.0
    %1336 = vmatprep.subr.mxu0 0.0
    %1337 = vmatpush1.msra.mxu0 0.0
    %1338 = vmatprep.subr.mxu0 0.0
    %1339 = vmatpush1.msra.mxu0 0.0
    %1340 = vmatprep.subr.mxu0 0.0
    %1341 = vmatpush1.msra.mxu0 0.0
    %1342 = vmatprep.subr.mxu0 0.0
    %1343 = vmatpush1.msra.mxu0 0.0
    %1344 = vmatprep.subr.mxu0 0.0
    %1345 = vmatpush1.msra.mxu0 0.0
    %1346 = vmatprep.subr.mxu0 0.0
    %1347 = vmatpush1.msra.mxu0 0.0
    %1348 = vmatprep.subr.mxu0 0.0
    %1349 = vmatpush1.msra.mxu0 0.0
    %1350 = vmatprep.subr.mxu0 0.0
    %1351 = vmatpush1.msra.mxu0 0.0
    %1352 = vmatprep.subr.mxu0 0.0
    %1353 = vmatpush1.msra.mxu0 0.0
    %1354 = vmatprep.subr.mxu0 0.0
    %1355 = vmatpush1.msra.mxu0 0.0
    %1356 = vmatprep.subr.mxu0 0.0
    %1357 = vmatpush1.msra.mxu0 0.0
    %1358 = vmatprep.subr.mxu0 0.0
    %1359 = vmatpush1.msra.mxu0 0.0
    %1360 = vmatprep.subr.mxu0 0.0
    %1361 = vmatpush1.msra.mxu0 0.0
    %1362 = vmatprep.mubr.f32.mxu0 0.0
    %1363 = vmatmul.mubr.f32.gmra.mrb[0].mxu0 %v1296
    %v1364 = vpop.f32.mrb[0].mxu0
    %v1365 = vadd.f32 0.0, %v1364
    %v1366 = vpop.f32.mrb[0].mxu0
    %1367 = vmatprep.mubr.f32.mxu0 0.0
    %1368 = vmatmul.mubr.f32.gmra.mrb[0].mxu0 %v1297
    %v1369 = vpop.f32.mrb[0].mxu0
    %v1370 = vadd.f32 0.0, %v1369
    %v1371 = vpop.f32.mrb[0].mxu0
    %1372 = vdwg.mxu0
    %v1373 = vmul.f32 %v1365, %v1365
    %v1374 = vsub.f32 %v1370, %v1373
    %v1375 = vmax.f32 %v1374, 0.0
    %v1376 = vadd.f32 %v1375, 1e-05
    %v1377 = vmul.f32 %v1376, %v94
    %v1378 = vrsqrt.pop %v1377
    %v1379 = vsub.f32 %v1296, %v1365
    %v1380 = vmul.f32 %v1379, %v1378
    %v1381 = vxor.u32 %v1380, 2147483648
    %v1382 = vmul.f32 %v1381, 1.442695
    %v1383 = vpow.pop %v1382
    %v1384 = vadd.f32 %v1383, 1.0
    %v1385 = vrcp.pop %v1384
    %v1386 = vmul.f32 1.0, %v1385
    %v1387 = vmul.f32 %v1386, %v95
    %v1388 = vadd.f32 %v1387, %v96
    %v1389 = vmul.f32 %v1388, %v1207
    %1391 = vrot.lane.b32.xlu0 %v1388, 32
    %v1392 = vpop.permute.xlu0 %1391
    %v1394 = vmul.f32 %v1388, %v1392
    %1396 = vrot.lane.b32.xlu0 %v1394, 32
    %v1397 = vpop.permute.xlu0 %1396
    %v1399 = vadd.f32 %v1389, %v1397
    %v1400 = vtanh.pop %v1399
    %1401 = vrot.lane.b32.xlu0 %v1388, 96
    %v1402 = vpop.permute.xlu0 %1401
    %v1404 = vmul.f32 %v1400, %v1402
    %1406 = vrot.lane.b32.xlu0 %v1404, 96
    %v1407 = vpop.permute.xlu0 %1406
    %s1409 = scalar_lea.vmem [#allocation2], 32
    %1410 = vst.msk [vmem:[%s1409] sm:$0xff] %vm264, %v1407
    %v1411 = vadd.f32 %v1219, %v1404
    %v1412 = vsel %vm264, %v1407, %v1399
    %s1413 = scalar_lea.vmem [#allocation3], 40
    %v1414 = vld [vmem:[%s1413] sm:$0xff]
    %v1416 = vsel %vm455, %v1412, 0
    %1418 = vmatprep.subr.mxu0 0.0
    %1419 = vmatpush1.msra.mxu0 %v273
    %1420 = vmatprep.subr.mxu0 0.0
    %1421 = vmatpush1.msra.mxu0 %v274
    %1422 = vmatprep.subr.mxu0 0.0
    %1423 = vmatpush1.msra.mxu0 %v275
    %1424 = vmatprep.subr.mxu0 0.0
    %1425 = vmatpush1.msra.mxu0 %v276
    %1426 = vmatprep.subr.mxu0 0.0
    %1427 = vmatpush1.msra.mxu0 %v277
    %1428 = vmatprep.subr.mxu0 0.0
    %1429 = vmatpush1.msra.mxu0 %v278
    %1430 = vmatprep.subr.mxu0 0.0
    %1431 = vmatpush1.msra.mxu0 %v279
    %1432 = vmatprep.subr.mxu0 0.0
    %1433 = vmatpush1.msra.mxu0 %v280
    %1434 = vmatprep.subr.mxu0 0.0
    %1435 = vmatpush1.msra.mxu0 0.0
    %1436 = vmatprep.subr.mxu0 0.0
    %1437 = vmatpush1.msra.mxu0 0.0
    %1438 = vmatprep.subr.mxu0 0.0
    %1439 = vmatpush1.msra.mxu0 0.0
    %1440 = vmatprep.subr.mxu0 0.0
    %1441 = vmatpush1.msra.mxu0 0.0
    %1442 = vmatprep.subr.mxu0 0.0
    %1443 = vmatpush1.msra.mxu0 0.0
    %1444 = vmatprep.subr.mxu0 0.0
    %1445 = vmatpush1.msra.mxu0 0.0
    %1446 = vmatprep.subr.mxu0 0.0
    %1447 = vmatpush1.msra.mxu0 0.0
    %1448 = vmatprep.subr.mxu0 0.0
    %1449 = vmatpush1.msra.mxu0 0.0
    %1450 = vmatprep.subr.mxu0 0.0
    %1451 = vmatpush1.msra.mxu0 0.0
    %1452 = vmatprep.subr.mxu0 0.0
    %1453 = vmatpush1.msra.mxu0 0.0
    %1454 = vmatprep.subr.mxu0 0.0
    %1455 = vmatpush1.msra.mxu0 0.0
    %1456 = vmatprep.subr.mxu0 0.0
    %1457 = vmatpush1.msra.mxu0 0.0
    %1458 = vmatprep.subr.mxu0 0.0
    %1459 = vmatpush1.msra.mxu0 0.0
    %1460 = vmatprep.subr.mxu0 0.0
    %1461 = vmatpush1.msra.mxu0 0.0
    %1462 = vmatprep.subr.mxu0 0.0
    %1463 = vmatpush1.msra.mxu0 0.0
    %1464 = vmatprep.subr.mxu0 0.0
    %1465 = vmatpush1.msra.mxu0 0.0
    %1466 = vmatprep.subr.mxu0 0.0
    %1467 = vmatpush1.msra.mxu0 0.0
    %1468 = vmatprep.subr.mxu0 0.0
    %1469 = vmatpush1.msra.mxu0 0.0
    %1470 = vmatprep.subr.mxu0 0.0
    %1471 = vmatpush1.msra.mxu0 0.0
    %1472 = vmatprep.subr.mxu0 0.0
    %1473 = vmatpush1.msra.mxu0 0.0
    %1474 = vmatprep.subr.mxu0 0.0
    %1475 = vmatpush1.msra.mxu0 0.0
    %1476 = vmatprep.subr.mxu0 0.0
    %1477 = vmatpush1.msra.mxu0 0.0
    %1478 = vmatprep.subr.mxu0 0.0
    %1479 = vmatpush1.msra.mxu0 0.0
    %1480 = vmatprep.subr.mxu0 0.0
    %1481 = vmatpush1.msra.mxu0 0.0
    %1482 = vmatprep.mubr.f32.mxu0 0.0
    %1483 = vmatmul.mubr.f32.gmra.mrb[0].mxu0 %v1416
    %v1484 = vpop.f32.mrb[0].mxu0
    %v1485 = vadd.f32 0.0, %v1484
    %v1486 = vpop.f32.mrb[0].mxu0
    %1487 = vdwg.mxu0
    %v1488 = vadd.f32 %v1414, %v1485
    %v1489 = vmul.f32 %v1488, %v1488
    %1490 = vmatprep.subr.mxu0 0.0
    %1491 = vmatpush1.msra.mxu0 %v97
    %1492 = vmatprep.subr.mxu0 0.0
    %1493 = vmatpush1.msra.mxu0 %v98
    %1494 = vmatprep.subr.mxu0 0.0
    %1495 = vmatpush1.msra.mxu0 %v99
    %1496 = vmatprep.subr.mxu0 0.0
    %1497 = vmatpush1.msra.mxu0 %v100
    %1498 = vmatprep.subr.mxu0 0.0
    %1499 = vmatpush1.msra.mxu0 %v101
    %1500 = vmatprep.subr.mxu0 0.0
    %1501 = vmatpush1.msra.mxu0 %v102
    %1502 = vmatprep.subr.mxu0 0.0
    %1503 = vmatpush1.msra.mxu0 %v103
    %1504 = vmatprep.subr.mxu0 0.0
    %1505 = vmatpush1.msra.mxu0 %v104
    %1506 = vmatprep.subr.mxu0 0.0
    %1507 = vmatpush1.msra.mxu0 %v105
    %1508 = vmatprep.subr.mxu0 0.0
    %1509 = vmatpush1.msra.mxu0 %v106
    %1510 = vmatprep.subr.mxu0 0.0
    %1511 = vmatpush1.msra.mxu0 %v107
    %1512 = vmatprep.subr.mxu0 0.0
    %1513 = vmatpush1.msra.mxu0 %v108
    %1514 = vmatprep.subr.mxu0 0.0
    %1515 = vmatpush1.msra.mxu0 %v109
    %1516 = vmatprep.subr.mxu0 0.0
    %1517 = vmatpush1.msra.mxu0 %v110
    %1518 = vmatprep.subr.mxu0 0.0
    %1519 = vmatpush1.msra.mxu0 %v111
    %1520 = vmatprep.subr.mxu0 0.0
    %1521 = vmatpush1.msra.mxu0 %v112
    %1522 = vmatprep.subr.mxu0 0.0
    %1523 = vmatpush1.msra.mxu0 0.0
    %1524 = vmatprep.subr.mxu0 0.0
    %1525 = vmatpush1.msra.mxu0 0.0
    %1526 = vmatprep.subr.mxu0 0.0
    %1527 = vmatpush1.msra.mxu0 0.0
    %1528 = vmatprep.subr.mxu0 0.0
    %1529 = vmatpush1.msra.mxu0 0.0
    %1530 = vmatprep.subr.mxu0 0.0
    %1531 = vmatpush1.msra.mxu0 0.0
    %1532 = vmatprep.subr.mxu0 0.0
    %1533 = vmatpush1.msra.mxu0 0.0
    %1534 = vmatprep.subr.mxu0 0.0
    %1535 = vmatpush1.msra.mxu0 0.0
    %1536 = vmatprep.subr.mxu0 0.0
    %1537 = vmatpush1.msra.mxu0 0.0
    %1538 = vmatprep.subr.mxu0 0.0
    %1539 = vmatpush1.msra.mxu0 0.0
    %1540 = vmatprep.subr.mxu0 0.0
    %1541 = vmatpush1.msra.mxu0 0.0
    %1542 = vmatprep.subr.mxu0 0.0
    %1543 = vmatpush1.msra.mxu0 0.0
    %1544 = vmatprep.subr.mxu0 0.0
    %1545 = vmatpush1.msra.mxu0 0.0
    %1546 = vmatprep.subr.mxu0 0.0
    %1547 = vmatpush1.msra.mxu0 0.0
    %1548 = vmatprep.subr.mxu0 0.0
    %1549 = vmatpush1.msra.mxu0 0.0
    %1550 = vmatprep.subr.mxu0 0.0
    %1551 = vmatpush1.msra.mxu0 0.0
    %1552 = vmatprep.subr.mxu0 0.0
    %1553 = vmatpush1.msra.mxu0 0.0
    %1554 = vmatprep.mubr.f32.mxu0 0.0
    %1555 = vmatmul.mubr.f32.gmra.mrb[0].mxu0 %v1488
    %v1556 = vpop.f32.mrb[0].mxu0
    %v1557 = vadd.f32 0.0, %v1556
    %v1558 = vpop.f32.mrb[0].mxu0
    %1559 = vmatprep.mubr.f32.mxu0 0.0
    %1560 = vmatmul.mubr.f32.gmra.mrb[0].mxu0 %v1489
    %v1561 = vpop.f32.mrb[0].mxu0
    %v1562 = vadd.f32 0.0, %v1561
    %v1563 = vpop.f32.mrb[0].mxu0
    %1564 = vdwg.mxu0
    %v1565 = vmul.f32 %v1557, %v1557
    %v1566 = vsub.f32 %v1562, %v1565
    %v1567 = vmax.f32 %v1566, 0.0
    %v1568 = vadd.f32 %v1567, 1e-05
    %v1569 = vmul.f32 %v1568, %v94
    %v1570 = vrsqrt.pop %v1569
    %v1571 = vsub.f32 %v1488, %v1557
    %v1572 = vmul.f32 %v1571, %v1570
    %v1573 = vxor.u32 %v1572, 2147483648
    %v1574 = vmul.f32 %v1573, 1.442695
    %v1575 = vpow.pop %v1574
    %v1576 = vadd.f32 %v1575, 1.0
    %v1577 = vrcp.pop %v1576
    %v1578 = vmul.f32 1.0, %v1577
    %v1579 = vmul.f32 %v1578, %v95
    %v1580 = vadd.f32 %v1579, %v96
    %v1581 = vmul.f32 %v1580, %v1399
    %1583 = vrot.lane.b32.xlu0 %v1580, 32
    %v1584 = vpop.permute.xlu0 %1583
    %v1586 = vmul.f32 %v1580, %v1584
    %1588 = vrot.lane.b32.xlu0 %v1586, 32
    %v1589 = vpop.permute.xlu0 %1588
    %v1591 = vadd.f32 %v1581, %v1589
    %v1592 = vtanh.pop %v1591
    %1593 = vrot.lane.b32.xlu0 %v1580, 96
    %v1594 = vpop.permute.xlu0 %1593
    %v1596 = vmul.f32 %v1592, %v1594
    %1598 = vrot.lane.b32.xlu0 %v1596, 96
    %v1599 = vpop.permute.xlu0 %1598
    %s1601 = scalar_lea.vmem [#allocation2], 40
    %1602 = vst.msk [vmem:[%s1601] sm:$0xff] %vm264, %v1599
    %v1603 = vadd.f32 %v1411, %v1596
    %v1604 = vsel %vm264, %v1599, %v1591
    %s1605 = scalar_lea.vmem [#allocation3], 48
    %v1606 = vld [vmem:[%s1605] sm:$0xff]
    %v1608 = vsel %vm455, %v1604, 0
    %1610 = vmatprep.subr.mxu0 0.0
    %1611 = vmatpush1.msra.mxu0 %v273
    %1612 = vmatprep.subr.mxu0 0.0
    %1613 = vmatpush1.msra.mxu0 %v274
    %1614 = vmatprep.subr.mxu0 0.0
    %1615 = vmatpush1.msra.mxu0 %v275
    %1616 = vmatprep.subr.mxu0 0.0
    %1617 = vmatpush1.msra.mxu0 %v276
    %1618 = vmatprep.subr.mxu0 0.0
    %1619 = vmatpush1.msra.mxu0 %v277
    %1620 = vmatprep.subr.mxu0 0.0
    %1621 = vmatpush1.msra.mxu0 %v278
    %1622 = vmatprep.subr.mxu0 0.0
    %1623 = vmatpush1.msra.mxu0 %v279
    %1624 = vmatprep.subr.mxu0 0.0
    %1625 = vmatpush1.msra.mxu0 %v280
    %1626 = vmatprep.subr.mxu0 0.0
    %1627 = vmatpush1.msra.mxu0 0.0
    %1628 = vmatprep.subr.mxu0 0.0
    %1629 = vmatpush1.msra.mxu0 0.0
    %1630 = vmatprep.subr.mxu0 0.0
    %1631 = vmatpush1.msra.mxu0 0.0
    %1632 = vmatprep.subr.mxu0 0.0
    %1633 = vmatpush1.msra.mxu0 0.0
    %1634 = vmatprep.subr.mxu0 0.0
    %1635 = vmatpush1.msra.mxu0 0.0
    %1636 = vmatprep.subr.mxu0 0.0
    %1637 = vmatpush1.msra.mxu0 0.0
    %1638 = vmatprep.subr.mxu0 0.0
    %1639 = vmatpush1.msra.mxu0 0.0
    %1640 = vmatprep.subr.mxu0 0.0
    %1641 = vmatpush1.msra.mxu0 0.0
    %1642 = vmatprep.subr.mxu0 0.0
    %1643 = vmatpush1.msra.mxu0 0.0
    %1644 = vmatprep.subr.mxu0 0.0
    %1645 = vmatpush1.msra.mxu0 0.0
    %1646 = vmatprep.subr.mxu0 0.0
    %1647 = vmatpush1.msra.mxu0 0.0
    %1648 = vmatprep.subr.mxu0 0.0
    %1649 = vmatpush1.msra.mxu0 0.0
    %1650 = vmatprep.subr.mxu0 0.0
    %1651 = vmatpush1.msra.mxu0 0.0
    %1652 = vmatprep.subr.mxu0 0.0
    %1653 = vmatpush1.msra.mxu0 0.0
    %1654 = vmatprep.subr.mxu0 0.0
    %1655 = vmatpush1.msra.mxu0 0.0
    %1656 = vmatprep.subr.mxu0 0.0
    %1657 = vmatpush1.msra.mxu0 0.0
    %1658 = vmatprep.subr.mxu0 0.0
    %1659 = vmatpush1.msra.mxu0 0.0
    %1660 = vmatprep.subr.mxu0 0.0
    %1661 = vmatpush1.msra.mxu0 0.0
    %1662 = vmatprep.subr.mxu0 0.0
    %1663 = vmatpush1.msra.mxu0 0.0
    %1664 = vmatprep.subr.mxu0 0.0
    %1665 = vmatpush1.msra.mxu0 0.0
    %1666 = vmatprep.subr.mxu0 0.0
    %1667 = vmatpush1.msra.mxu0 0.0
    %1668 = vmatprep.subr.mxu0 0.0
    %1669 = vmatpush1.msra.mxu0 0.0
    %1670 = vmatprep.subr.mxu0 0.0
    %1671 = vmatpush1.msra.mxu0 0.0
    %1672 = vmatprep.subr.mxu0 0.0
    %1673 = vmatpush1.msra.mxu0 0.0
    %1674 = vmatprep.mubr.f32.mxu0 0.0
    %1675 = vmatmul.mubr.f32.gmra.mrb[0].mxu0 %v1608
    %v1676 = vpop.f32.mrb[0].mxu0
    %v1677 = vadd.f32 0.0, %v1676
    %v1678 = vpop.f32.mrb[0].mxu0
    %1679 = vdwg.mxu0
    %v1680 = vadd.f32 %v1606, %v1677
    %v1681 = vmul.f32 %v1680, %v1680
    %1682 = vmatprep.subr.mxu0 0.0
    %1683 = vmatpush1.msra.mxu0 %v97
    %1684 = vmatprep.subr.mxu0 0.0
    %1685 = vmatpush1.msra.mxu0 %v98
    %1686 = vmatprep.subr.mxu0 0.0
    %1687 = vmatpush1.msra.mxu0 %v99
    %1688 = vmatprep.subr.mxu0 0.0
    %1689 = vmatpush1.msra.mxu0 %v100
    %1690 = vmatprep.subr.mxu0 0.0
    %1691 = vmatpush1.msra.mxu0 %v101
    %1692 = vmatprep.subr.mxu0 0.0
    %1693 = vmatpush1.msra.mxu0 %v102
    %1694 = vmatprep.subr.mxu0 0.0
    %1695 = vmatpush1.msra.mxu0 %v103
    %1696 = vmatprep.subr.mxu0 0.0
    %1697 = vmatpush1.msra.mxu0 %v104
    %1698 = vmatprep.subr.mxu0 0.0
    %1699 = vmatpush1.msra.mxu0 %v105
    %1700 = vmatprep.subr.mxu0 0.0
    %1701 = vmatpush1.msra.mxu0 %v106
    %1702 = vmatprep.subr.mxu0 0.0
    %1703 = vmatpush1.msra.mxu0 %v107
    %1704 = vmatprep.subr.mxu0 0.0
    %1705 = vmatpush1.msra.mxu0 %v108
    %1706 = vmatprep.subr.mxu0 0.0
    %1707 = vmatpush1.msra.mxu0 %v109
    %1708 = vmatprep.subr.mxu0 0.0
    %1709 = vmatpush1.msra.mxu0 %v110
    %1710 = vmatprep.subr.mxu0 0.0
    %1711 = vmatpush1.msra.mxu0 %v111
    %1712 = vmatprep.subr.mxu0 0.0
    %1713 = vmatpush1.msra.mxu0 %v112
    %1714 = vmatprep.subr.mxu0 0.0
    %1715 = vmatpush1.msra.mxu0 0.0
    %1716 = vmatprep.subr.mxu0 0.0
    %1717 = vmatpush1.msra.mxu0 0.0
    %1718 = vmatprep.subr.mxu0 0.0
    %1719 = vmatpush1.msra.mxu0 0.0
    %1720 = vmatprep.subr.mxu0 0.0
    %1721 = vmatpush1.msra.mxu0 0.0
    %1722 = vmatprep.subr.mxu0 0.0
    %1723 = vmatpush1.msra.mxu0 0.0
    %1724 = vmatprep.subr.mxu0 0.0
    %1725 = vmatpush1.msra.mxu0 0.0
    %1726 = vmatprep.subr.mxu0 0.0
    %1727 = vmatpush1.msra.mxu0 0.0
    %1728 = vmatprep.subr.mxu0 0.0
    %1729 = vmatpush1.msra.mxu0 0.0
    %1730 = vmatprep.subr.mxu0 0.0
    %1731 = vmatpush1.msra.mxu0 0.0
    %1732 = vmatprep.subr.mxu0 0.0
    %1733 = vmatpush1.msra.mxu0 0.0
    %1734 = vmatprep.subr.mxu0 0.0
    %1735 = vmatpush1.msra.mxu0 0.0
    %1736 = vmatprep.subr.mxu0 0.0
    %1737 = vmatpush1.msra.mxu0 0.0
    %1738 = vmatprep.subr.mxu0 0.0
    %1739 = vmatpush1.msra.mxu0 0.0
    %1740 = vmatprep.subr.mxu0 0.0
    %1741 = vmatpush1.msra.mxu0 0.0
    %1742 = vmatprep.subr.mxu0 0.0
    %1743 = vmatpush1.msra.mxu0 0.0
    %1744 = vmatprep.subr.mxu0 0.0
    %1745 = vmatpush1.msra.mxu0 0.0
    %1746 = vmatprep.mubr.f32.mxu0 0.0
    %1747 = vmatmul.mubr.f32.gmra.mrb[0].mxu0 %v1680
    %v1748 = vpop.f32.mrb[0].mxu0
    %v1749 = vadd.f32 0.0, %v1748
    %v1750 = vpop.f32.mrb[0].mxu0
    %1751 = vmatprep.mubr.f32.mxu0 0.0
    %1752 = vmatmul.mubr.f32.gmra.mrb[0].mxu0 %v1681
    %v1753 = vpop.f32.mrb[0].mxu0
    %v1754 = vadd.f32 0.0, %v1753
    %v1755 = vpop.f32.mrb[0].mxu0
    %1756 = vdwg.mxu0
    %v1757 = vmul.f32 %v1749, %v1749
    %v1758 = vsub.f32 %v1754, %v1757
    %v1759 = vmax.f32 %v1758, 0.0
    %v1760 = vadd.f32 %v1759, 1e-05
    %v1761 = vmul.f32 %v1760, %v94
    %v1762 = vrsqrt.pop %v1761
    %v1763 = vsub.f32 %v1680, %v1749
    %v1764 = vmul.f32 %v1763, %v1762
    %v1765 = vxor.u32 %v1764, 2147483648
    %v1766 = vmul.f32 %v1765, 1.442695
    %v1767 = vpow.pop %v1766
    %v1768 = vadd.f32 %v1767, 1.0
    %v1769 = vrcp.pop %v1768
    %v1770 = vmul.f32 1.0, %v1769
    %v1771 = vmul.f32 %v1770, %v95
    %v1772 = vadd.f32 %v1771, %v96
    %v1773 = vmul.f32 %v1772, %v1591
    %1775 = vrot.lane.b32.xlu0 %v1772, 32
    %v1776 = vpop.permute.xlu0 %1775
    %v1778 = vmul.f32 %v1772, %v1776
    %1780 = vrot.lane.b32.xlu0 %v1778, 32
    %v1781 = vpop.permute.xlu0 %1780
    %v1783 = vadd.f32 %v1773, %v1781
    %v1784 = vtanh.pop %v1783
    %1785 = vrot.lane.b32.xlu0 %v1772, 96
    %v1786 = vpop.permute.xlu0 %1785
    %v1788 = vmul.f32 %v1784, %v1786
    %1790 = vrot.lane.b32.xlu0 %v1788, 96
    %v1791 = vpop.permute.xlu0 %1790
    %s1793 = scalar_lea.vmem [#allocation2], 48
    %1794 = vst.msk [vmem:[%s1793] sm:$0xff] %vm264, %v1791
    %v1795 = vadd.f32 %v1603, %v1788
    %v1796 = vsel %vm264, %v1791, %v1783
    %s1797 = scalar_lea.vmem [#allocation3], 56
    %v1798 = vld [vmem:[%s1797] sm:$0xff]
    %v1800 = vsel %vm455, %v1796, 0
    %1802 = vmatprep.subr.mxu0 0.0
    %1803 = vmatpush1.msra.mxu0 %v273
    %1804 = vmatprep.subr.mxu0 0.0
    %1805 = vmatpush1.msra.mxu0 %v274
    %1806 = vmatprep.subr.mxu0 0.0
    %1807 = vmatpush1.msra.mxu0 %v275
    %1808 = vmatprep.subr.mxu0 0.0
    %1809 = vmatpush1.msra.mxu0 %v276
    %1810 = vmatprep.subr.mxu0 0.0
    %1811 = vmatpush1.msra.mxu0 %v277
    %1812 = vmatprep.subr.mxu0 0.0
    %1813 = vmatpush1.msra.mxu0 %v278
    %1814 = vmatprep.subr.mxu0 0.0
    %1815 = vmatpush1.msra.mxu0 %v279
    %1816 = vmatprep.subr.mxu0 0.0
    %1817 = vmatpush1.msra.mxu0 %v280
    %1818 = vmatprep.subr.mxu0 0.0
    %1819 = vmatpush1.msra.mxu0 0.0
    %1820 = vmatprep.subr.mxu0 0.0
    %1821 = vmatpush1.msra.mxu0 0.0
    %1822 = vmatprep.subr.mxu0 0.0
    %1823 = vmatpush1.msra.mxu0 0.0
    %1824 = vmatprep.subr.mxu0 0.0
    %1825 = vmatpush1.msra.mxu0 0.0
    %1826 = vmatprep.subr.mxu0 0.0
    %1827 = vmatpush1.msra.mxu0 0.0
    %1828 = vmatprep.subr.mxu0 0.0
    %1829 = vmatpush1.msra.mxu0 0.0
    %1830 = vmatprep.subr.mxu0 0.0
    %1831 = vmatpush1.msra.mxu0 0.0
    %1832 = vmatprep.subr.mxu0 0.0
    %1833 = vmatpush1.msra.mxu0 0.0
    %1834 = vmatprep.subr.mxu0 0.0
    %1835 = vmatpush1.msra.mxu0 0.0
    %1836 = vmatprep.subr.mxu0 0.0
    %1837 = vmatpush1.msra.mxu0 0.0
    %1838 = vmatprep.subr.mxu0 0.0
    %1839 = vmatpush1.msra.mxu0 0.0
    %1840 = vmatprep.subr.mxu0 0.0
    %1841 = vmatpush1.msra.mxu0 0.0
    %1842 = vmatprep.subr.mxu0 0.0
    %1843 = vmatpush1.msra.mxu0 0.0
    %1844 = vmatprep.subr.mxu0 0.0
    %1845 = vmatpush1.msra.mxu0 0.0
    %1846 = vmatprep.subr.mxu0 0.0
    %1847 = vmatpush1.msra.mxu0 0.0
    %1848 = vmatprep.subr.mxu0 0.0
    %1849 = vmatpush1.msra.mxu0 0.0
    %1850 = vmatprep.subr.mxu0 0.0
    %1851 = vmatpush1.msra.mxu0 0.0
    %1852 = vmatprep.subr.mxu0 0.0
    %1853 = vmatpush1.msra.mxu0 0.0
    %1854 = vmatprep.subr.mxu0 0.0
    %1855 = vmatpush1.msra.mxu0 0.0
    %1856 = vmatprep.subr.mxu0 0.0
    %1857 = vmatpush1.msra.mxu0 0.0
    %1858 = vmatprep.subr.mxu0 0.0
    %1859 = vmatpush1.msra.mxu0 0.0
    %1860 = vmatprep.subr.mxu0 0.0
    %1861 = vmatpush1.msra.mxu0 0.0
    %1862 = vmatprep.subr.mxu0 0.0
    %1863 = vmatpush1.msra.mxu0 0.0
    %1864 = vmatprep.subr.mxu0 0.0
    %1865 = vmatpush1.msra.mxu0 0.0
    %1866 = vmatprep.mubr.f32.mxu0 0.0
    %1867 = vmatmul.mubr.f32.gmra.mrb[0].mxu0 %v1800
    %v1868 = vpop.f32.mrb[0].mxu0
    %v1869 = vadd.f32 0.0, %v1868
    %v1870 = vpop.f32.mrb[0].mxu0
    %1871 = vdwg.mxu0
    %v1872 = vadd.f32 %v1798, %v1869
    %v1873 = vmul.f32 %v1872, %v1872
    %1874 = vmatprep.subr.mxu0 0.0
    %1875 = vmatpush1.msra.mxu0 %v97
    %1876 = vmatprep.subr.mxu0 0.0
    %1877 = vmatpush1.msra.mxu0 %v98
    %1878 = vmatprep.subr.mxu0 0.0
    %1879 = vmatpush1.msra.mxu0 %v99
    %1880 = vmatprep.subr.mxu0 0.0
    %1881 = vmatpush1.msra.mxu0 %v100
    %1882 = vmatprep.subr.mxu0 0.0
    %1883 = vmatpush1.msra.mxu0 %v101
    %1884 = vmatprep.subr.mxu0 0.0
    %1885 = vmatpush1.msra.mxu0 %v102
    %1886 = vmatprep.subr.mxu0 0.0
    %1887 = vmatpush1.msra.mxu0 %v103
    %1888 = vmatprep.subr.mxu0 0.0
    %1889 = vmatpush1.msra.mxu0 %v104
    %1890 = vmatprep.subr.mxu0 0.0
    %1891 = vmatpush1.msra.mxu0 %v105
    %1892 = vmatprep.subr.mxu0 0.0
    %1893 = vmatpush1.msra.mxu0 %v106
    %1894 = vmatprep.subr.mxu0 0.0
    %1895 = vmatpush1.msra.mxu0 %v107
    %1896 = vmatprep.subr.mxu0 0.0
    %1897 = vmatpush1.msra.mxu0 %v108
    %1898 = vmatprep.subr.mxu0 0.0
    %1899 = vmatpush1.msra.mxu0 %v109
    %1900 = vmatprep.subr.mxu0 0.0
    %1901 = vmatpush1.msra.mxu0 %v110
    %1902 = vmatprep.subr.mxu0 0.0
    %1903 = vmatpush1.msra.mxu0 %v111
    %1904 = vmatprep.subr.mxu0 0.0
    %1905 = vmatpush1.msra.mxu0 %v112
    %1906 = vmatprep.subr.mxu0 0.0
    %1907 = vmatpush1.msra.mxu0 0.0
    %1908 = vmatprep.subr.mxu0 0.0
    %1909 = vmatpush1.msra.mxu0 0.0
    %1910 = vmatprep.subr.mxu0 0.0
    %1911 = vmatpush1.msra.mxu0 0.0
    %1912 = vmatprep.subr.mxu0 0.0
    %1913 = vmatpush1.msra.mxu0 0.0
    %1914 = vmatprep.subr.mxu0 0.0
    %1915 = vmatpush1.msra.mxu0 0.0
    %1916 = vmatprep.subr.mxu0 0.0
    %1917 = vmatpush1.msra.mxu0 0.0
    %1918 = vmatprep.subr.mxu0 0.0
    %1919 = vmatpush1.msra.mxu0 0.0
    %1920 = vmatprep.subr.mxu0 0.0
    %1921 = vmatpush1.msra.mxu0 0.0
    %1922 = vmatprep.subr.mxu0 0.0
    %1923 = vmatpush1.msra.mxu0 0.0
    %1924 = vmatprep.subr.mxu0 0.0
    %1925 = vmatpush1.msra.mxu0 0.0
    %1926 = vmatprep.subr.mxu0 0.0
    %1927 = vmatpush1.msra.mxu0 0.0
    %1928 = vmatprep.subr.mxu0 0.0
    %1929 = vmatpush1.msra.mxu0 0.0
    %1930 = vmatprep.subr.mxu0 0.0
    %1931 = vmatpush1.msra.mxu0 0.0
    %1932 = vmatprep.subr.mxu0 0.0
    %1933 = vmatpush1.msra.mxu0 0.0
    %1934 = vmatprep.subr.mxu0 0.0
    %1935 = vmatpush1.msra.mxu0 0.0
    %1936 = vmatprep.subr.mxu0 0.0
    %1937 = vmatpush1.msra.mxu0 0.0
    %1938 = vmatprep.mubr.f32.mxu0 0.0
    %1939 = vmatmul.mubr.f32.gmra.mrb[0].mxu0 %v1872
    %v1940 = vpop.f32.mrb[0].mxu0
    %v1941 = vadd.f32 0.0, %v1940
    %v1942 = vpop.f32.mrb[0].mxu0
    %1943 = vmatprep.mubr.f32.mxu0 0.0
    %1944 = vmatmul.mubr.f32.gmra.mrb[0].mxu0 %v1873
    %v1945 = vpop.f32.mrb[0].mxu0
    %v1946 = vadd.f32 0.0, %v1945
    %v1947 = vpop.f32.mrb[0].mxu0
    %1948 = vdwg.mxu0
    %v1949 = vmul.f32 %v1941, %v1941
    %v1950 = vsub.f32 %v1946, %v1949
    %v1951 = vmax.f32 %v1950, 0.0
    %v1952 = vadd.f32 %v1951, 1e-05
    %v1953 = vmul.f32 %v1952, %v94
    %v1954 = vrsqrt.pop %v1953
    %v1955 = vsub.f32 %v1872, %v1941
    %v1956 = vmul.f32 %v1955, %v1954
    %v1957 = vxor.u32 %v1956, 2147483648
    %v1958 = vmul.f32 %v1957, 1.442695
    %v1959 = vpow.pop %v1958
    %v1960 = vadd.f32 %v1959, 1.0
    %v1961 = vrcp.pop %v1960
    %v1962 = vmul.f32 1.0, %v1961
    %v1963 = vmul.f32 %v1962, %v95
    %v1964 = vadd.f32 %v1963, %v96
    %v1965 = vmul.f32 %v1964, %v1783
    %1967 = vrot.lane.b32.xlu0 %v1964, 32
    %v1968 = vpop.permute.xlu0 %1967
    %v1970 = vmul.f32 %v1964, %v1968
    %1972 = vrot.lane.b32.xlu0 %v1970, 32
    %v1973 = vpop.permute.xlu0 %1972
    %v1975 = vadd.f32 %v1965, %v1973
    %v1976 = vtanh.pop %v1975
    %1977 = vrot.lane.b32.xlu0 %v1964, 96
    %v1978 = vpop.permute.xlu0 %1977
    %v1980 = vmul.f32 %v1976, %v1978
    %1982 = vrot.lane.b32.xlu0 %v1980, 96
    %v1983 = vpop.permute.xlu0 %1982
    %s1985 = scalar_lea.vmem [#allocation2], 56
    %1986 = vst.msk [vmem:[%s1985] sm:$0xff] %vm264, %v1983
    %v1987 = vadd.f32 %v1795, %v1980
    %s1988 = scalar_lea.vmem %s4, 64
    %v1989 = vld [vmem:[%s1988] sm:$0xff]
    %v1990 = vld [vmem:[%s1988 + $0x8] sm:$0xff]
    %v1991 = vld [vmem:[%s1988 + $0x10] sm:$0xff]
    %v1992 = vld [vmem:[%s1988 + $0x18] sm:$0xff]
    %v1993 = vld [vmem:[%s1988 + $0x20] sm:$0xff]
    %v1994 = vld [vmem:[%s1988 + $0x28] sm:$0xff]
    %v1995 = vld [vmem:[%s1988 + $0x30] sm:$0xff]
    %v1996 = vld [vmem:[%s1988 + $0x38] sm:$0xff]
    %s1997 = scalar_lea.vmem %s6, 1
    %v1998 = vld [vmem:[%s1997] sm:$0x1]
    %v2000 = vlaneseq
    %v2001 = vshrl.u32 %v2000, 7
    %v2002 = vsub.s32 0, %v2001
    %v2003 = vrot.slane %v1998, %v2002
    %s2005 = scalar_lea.vmem %s7, 1
    %v2006 = vld [vmem:[%s2005] sm:$0x1]
    %v2008 = vlaneseq
    %v2009 = vshrl.u32 %v2008, 7
    %v2010 = vsub.s32 0, %v2009
    %v2011 = vrot.slane %v2006, %v2010
    %v2012 = vld [vmem:[#allocation2] sm:$0xff]
    %v2013 = vld [vmem:[#allocation2 + $0x8] sm:$0xff]
    %v2014 = vld [vmem:[#allocation2 + $0x10] sm:$0xff]
    %v2015 = vld [vmem:[#allocation2 + $0x18] sm:$0xff]
    %v2016 = vld [vmem:[#allocation2 + $0x20] sm:$0xff]
    %v2017 = vld [vmem:[#allocation2 + $0x28] sm:$0xff]
    %v2018 = vld [vmem:[#allocation2 + $0x30] sm:$0xff]
    %v2019 = vld [vmem:[#allocation2 + $0x38] sm:$0xff]
    %s2020 = scalar_lea.vmem [#allocation8], 32
    %v2021 = vld [vmem:[%s2020] sm:$0xff]
    %v2022 = vld [vmem:[%s2020 + $0x8] sm:$0xff]
    %v2023 = vld [vmem:[%s2020 + $0x10] sm:$0xff]
    %v2024 = vld [vmem:[%s2020 + $0x18] sm:$0xff]
    %s2025 = scalar_lea.vmem %s5, 1
    %v2026 = vld [vmem:[%s2025] sm:$0x1]
    %v2028 = vlaneseq
    %v2029 = vshrl.u32 %v2028, 7
    %v2030 = vsub.s32 0, %v2029
    %v2031 = vrot.slane %v2026, %v2030
    %v2034 = vsel %vm264, %v2012, 0
    %v2037 = vsel %vm264, %v2013, 0
    %v2040 = vsel %vm264, %v2014, 0
    %v2043 = vsel %vm264, %v2015, 0
    %v2046 = vsel %vm264, %v2016, 0
    %v2049 = vsel %vm264, %v2017, 0
    %v2052 = vsel %vm264, %v2018, 0
    %v2055 = vsel %vm264, %v2019, 0
    %2057 = vmatprep.subr.mxu0 0.0
    %2058 = vmatpush1.msra.mxu0 %v2021
    %2059 = vmatprep.subr.mxu0 0.0
    %2060 = vmatpush1.msra.mxu0 %v2022
    %2061 = vmatprep.subr.mxu0 0.0
    %2062 = vmatpush1.msra.mxu0 %v2023
    %2063 = vmatprep.subr.mxu0 0.0
    %2064 = vmatpush1.msra.mxu0 %v2024
    %2065 = vmatprep.subr.mxu0 0.0
    %2066 = vmatpush1.msra.mxu0 0.0
    %2067 = vmatprep.subr.mxu0 0.0
    %2068 = vmatpush1.msra.mxu0 0.0
    %2069 = vmatprep.subr.mxu0 0.0
    %2070 = vmatpush1.msra.mxu0 0.0
    %2071 = vmatprep.subr.mxu0 0.0
    %2072 = vmatpush1.msra.mxu0 0.0
    %2073 = vmatprep.subr.mxu0 0.0
    %2074 = vmatpush1.msra.mxu0 0.0
    %2075 = vmatprep.subr.mxu0 0.0
    %2076 = vmatpush1.msra.mxu0 0.0
    %2077 = vmatprep.subr.mxu0 0.0
    %2078 = vmatpush1.msra.mxu0 0.0
    %2079 = vmatprep.subr.mxu0 0.0
    %2080 = vmatpush1.msra.mxu0 0.0
    %2081 = vmatprep.subr.mxu0 0.0
    %2082 = vmatpush1.msra.mxu0 0.0
    %2083 = vmatprep.subr.mxu0 0.0
    %2084 = vmatpush1.msra.mxu0 0.0
    %2085 = vmatprep.subr.mxu0 0.0
    %2086 = vmatpush1.msra.mxu0 0.0
    %2087 = vmatprep.subr.mxu0 0.0
    %2088 = vmatpush1.msra.mxu0 0.0
    %2089 = vmatprep.subr.mxu0 0.0
    %2090 = vmatpush1.msra.mxu0 0.0
    %2091 = vmatprep.subr.mxu0 0.0
    %2092 = vmatpush1.msra.mxu0 0.0
    %2093 = vmatprep.subr.mxu0 0.0
    %2094 = vmatpush1.msra.mxu0 0.0
    %2095 = vmatprep.subr.mxu0 0.0
    %2096 = vmatpush1.msra.mxu0 0.0
    %2097 = vmatprep.subr.mxu0 0.0
    %2098 = vmatpush1.msra.mxu0 0.0
    %2099 = vmatprep.subr.mxu0 0.0
    %2100 = vmatpush1.msra.mxu0 0.0
    %2101 = vmatprep.subr.mxu0 0.0
    %2102 = vmatpush1.msra.mxu0 0.0
    %2103 = vmatprep.subr.mxu0 0.0
    %2104 = vmatpush1.msra.mxu0 0.0
    %2105 = vmatprep.subr.mxu0 0.0
    %2106 = vmatpush1.msra.mxu0 0.0
    %2107 = vmatprep.subr.mxu0 0.0
    %2108 = vmatpush1.msra.mxu0 0.0
    %2109 = vmatprep.subr.mxu0 0.0
    %2110 = vmatpush1.msra.mxu0 0.0
    %2111 = vmatprep.subr.mxu0 0.0
    %2112 = vmatpush1.msra.mxu0 0.0
    %2113 = vmatprep.subr.mxu0 0.0
    %2114 = vmatpush1.msra.mxu0 0.0
    %2115 = vmatprep.subr.mxu0 0.0
    %2116 = vmatpush1.msra.mxu0 0.0
    %2117 = vmatprep.subr.mxu0 0.0
    %2118 = vmatpush1.msra.mxu0 0.0
    %2119 = vmatprep.subr.mxu0 0.0
    %2120 = vmatpush1.msra.mxu0 0.0
    %2121 = vmatprep.mubr.f32.mxu0 0.0
    %2122 = vmatmul.mubr.f32.gmra.mrb[0].mxu0 %v2034
    %v2123 = vpop.f32.mrb[0].mxu0
    %v2124 = vadd.f32 %v2031, %v2123
    %v2125 = vpop.f32.mrb[0].mxu0
    %2126 = vmatprep.mubr.f32.mxu0 0.0
    %2127 = vmatmul.mubr.f32.gmra.mrb[0].mxu0 %v2037
    %v2128 = vpop.f32.mrb[0].mxu0
    %v2129 = vadd.f32 %v2031, %v2128
    %v2130 = vpop.f32.mrb[0].mxu0
    %2131 = vmatprep.mubr.f32.mxu0 0.0
    %2132 = vmatmul.mubr.f32.gmra.mrb[0].mxu0 %v2040
    %v2133 = vpop.f32.mrb[0].mxu0
    %v2134 = vadd.f32 %v2031, %v2133
    %v2135 = vpop.f32.mrb[0].mxu0
    %2136 = vmatprep.mubr.f32.mxu0 0.0
    %2137 = vmatmul.mubr.f32.gmra.mrb[0].mxu0 %v2043
    %v2138 = vpop.f32.mrb[0].mxu0
    %v2139 = vadd.f32 %v2031, %v2138
    %v2140 = vpop.f32.mrb[0].mxu0
    %2141 = vmatprep.mubr.f32.mxu0 0.0
    %2142 = vmatmul.mubr.f32.gmra.mrb[0].mxu0 %v2046
    %v2143 = vpop.f32.mrb[0].mxu0
    %v2144 = vadd.f32 %v2031, %v2143
    %v2145 = vpop.f32.mrb[0].mxu0
    %2146 = vmatprep.mubr.f32.mxu0 0.0
    %2147 = vmatmul.mubr.f32.gmra.mrb[0].mxu0 %v2049
    %v2148 = vpop.f32.mrb[0].mxu0
    %v2149 = vadd.f32 %v2031, %v2148
    %v2150 = vpop.f32.mrb[0].mxu0
    %2151 = vmatprep.mubr.f32.mxu0 0.0
    %2152 = vmatmul.mubr.f32.gmra.mrb[0].mxu0 %v2052
    %v2153 = vpop.f32.mrb[0].mxu0
    %v2154 = vadd.f32 %v2031, %v2153
    %v2155 = vpop.f32.mrb[0].mxu0
    %2156 = vmatprep.mubr.f32.mxu0 0.0
    %2157 = vmatmul.mubr.f32.gmra.mrb[0].mxu0 %v2055
    %v2158 = vpop.f32.mrb[0].mxu0
    %v2159 = vadd.f32 %v2031, %v2158
    %v2160 = vpop.f32.mrb[0].mxu0
    %2161 = vdwg.mxu0
    %2162 = vst [vmem:[#allocation3] sm:$0xff] %v2124
    %2163 = vst [vmem:[#allocation3 + $0x8] sm:$0xff] %v2129
    %2164 = vst [vmem:[#allocation3 + $0x10] sm:$0xff] %v2134
    %2165 = vst [vmem:[#allocation3 + $0x18] sm:$0xff] %v2139
    %2166 = vst [vmem:[#allocation3 + $0x20] sm:$0xff] %v2144
    %2167 = vst [vmem:[#allocation3 + $0x28] sm:$0xff] %v2149
    %2168 = vst [vmem:[#allocation3 + $0x30] sm:$0xff] %v2154
    %2169 = vst [vmem:[#allocation3 + $0x38] sm:$0xff] %v2159
    %2170 = vrot.lane.b32.xlu0 %v2011, 32
    %v2171 = vpop.permute.xlu0 %2170
    %v2173 = vsel %vm264, %v2003, %v2171
    %v2174 = vld [vmem:[#allocation3] sm:$0xff]
    %v2176 = vsel %vm455, %v2173, 0
    %2178 = vmatprep.subr.mxu0 0.0
    %2179 = vmatpush1.msra.mxu0 %v1989
    %2180 = vmatprep.subr.mxu0 0.0
    %2181 = vmatpush1.msra.mxu0 %v1990
    %2182 = vmatprep.subr.mxu0 0.0
    %2183 = vmatpush1.msra.mxu0 %v1991
    %2184 = vmatprep.subr.mxu0 0.0
    %2185 = vmatpush1.msra.mxu0 %v1992
    %2186 = vmatprep.subr.mxu0 0.0
    %2187 = vmatpush1.msra.mxu0 %v1993
    %2188 = vmatprep.subr.mxu0 0.0
    %2189 = vmatpush1.msra.mxu0 %v1994
    %2190 = vmatprep.subr.mxu0 0.0
    %2191 = vmatpush1.msra.mxu0 %v1995
    %2192 = vmatprep.subr.mxu0 0.0
    %2193 = vmatpush1.msra.mxu0 %v1996
    %2194 = vmatprep.subr.mxu0 0.0
    %2195 = vmatpush1.msra.mxu0 0.0
    %2196 = vmatprep.subr.mxu0 0.0
    %2197 = vmatpush1.msra.mxu0 0.0
    %2198 = vmatprep.subr.mxu0 0.0
    %2199 = vmatpush1.msra.mxu0 0.0
    %2200 = vmatprep.subr.mxu0 0.0
    %2201 = vmatpush1.msra.mxu0 0.0
    %2202 = vmatprep.subr.mxu0 0.0
    %2203 = vmatpush1.msra.mxu0 0.0
    %2204 = vmatprep.subr.mxu0 0.0
    %2205 = vmatpush1.msra.mxu0 0.0
    %2206 = vmatprep.subr.mxu0 0.0
    %2207 = vmatpush1.msra.mxu0 0.0
    %2208 = vmatprep.subr.mxu0 0.0
    %2209 = vmatpush1.msra.mxu0 0.0
    %2210 = vmatprep.subr.mxu0 0.0
    %2211 = vmatpush1.msra.mxu0 0.0
    %2212 = vmatprep.subr.mxu0 0.0
    %2213 = vmatpush1.msra.mxu0 0.0
    %2214 = vmatprep.subr.mxu0 0.0
    %2215 = vmatpush1.msra.mxu0 0.0
    %2216 = vmatprep.subr.mxu0 0.0
    %2217 = vmatpush1.msra.mxu0 0.0
    %2218 = vmatprep.subr.mxu0 0.0
    %2219 = vmatpush1.msra.mxu0 0.0
    %2220 = vmatprep.subr.mxu0 0.0
    %2221 = vmatpush1.msra.mxu0 0.0
    %2222 = vmatprep.subr.mxu0 0.0
    %2223 = vmatpush1.msra.mxu0 0.0
    %2224 = vmatprep.subr.mxu0 0.0
    %2225 = vmatpush1.msra.mxu0 0.0
    %2226 = vmatprep.subr.mxu0 0.0
    %2227 = vmatpush1.msra.mxu0 0.0
    %2228 = vmatprep.subr.mxu0 0.0
    %2229 = vmatpush1.msra.mxu0 0.0
    %2230 = vmatprep.subr.mxu0 0.0
    %2231 = vmatpush1.msra.mxu0 0.0
    %2232 = vmatprep.subr.mxu0 0.0
    %2233 = vmatpush1.msra.mxu0 0.0
    %2234 = vmatprep.subr.mxu0 0.0
    %2235 = vmatpush1.msra.mxu0 0.0
    %2236 = vmatprep.subr.mxu0 0.0
    %2237 = vmatpush1.msra.mxu0 0.0
    %2238 = vmatprep.subr.mxu0 0.0
    %2239 = vmatpush1.msra.mxu0 0.0
    %2240 = vmatprep.subr.mxu0 0.0
    %2241 = vmatpush1.msra.mxu0 0.0
    %2242 = vmatprep.mubr.f32.mxu0 0.0
    %2243 = vmatmul.mubr.f32.gmra.mrb[0].mxu0 %v2176
    %v2244 = vpop.f32.mrb[0].mxu0
    %v2245 = vadd.f32 0.0, %v2244
    %v2246 = vpop.f32.mrb[0].mxu0
    %2247 = vdwg.mxu0
    %v2248 = vadd.f32 %v2174, %v2245
    %v2249 = vmul.f32 %v2248, %v2248
    %2250 = vmatprep.subr.mxu0 0.0
    %2251 = vmatpush1.msra.mxu0 %v97
    %2252 = vmatprep.subr.mxu0 0.0
    %2253 = vmatpush1.msra.mxu0 %v98
    %2254 = vmatprep.subr.mxu0 0.0
    %2255 = vmatpush1.msra.mxu0 %v99
    %2256 = vmatprep.subr.mxu0 0.0
    %2257 = vmatpush1.msra.mxu0 %v100
    %2258 = vmatprep.subr.mxu0 0.0
    %2259 = vmatpush1.msra.mxu0 %v101
    %2260 = vmatprep.subr.mxu0 0.0
    %2261 = vmatpush1.msra.mxu0 %v102
    %2262 = vmatprep.subr.mxu0 0.0
    %2263 = vmatpush1.msra.mxu0 %v103
    %2264 = vmatprep.subr.mxu0 0.0
    %2265 = vmatpush1.msra.mxu0 %v104
    %2266 = vmatprep.subr.mxu0 0.0
    %2267 = vmatpush1.msra.mxu0 %v105
    %2268 = vmatprep.subr.mxu0 0.0
    %2269 = vmatpush1.msra.mxu0 %v106
    %2270 = vmatprep.subr.mxu0 0.0
    %2271 = vmatpush1.msra.mxu0 %v107
    %2272 = vmatprep.subr.mxu0 0.0
    %2273 = vmatpush1.msra.mxu0 %v108
    %2274 = vmatprep.subr.mxu0 0.0
    %2275 = vmatpush1.msra.mxu0 %v109
    %2276 = vmatprep.subr.mxu0 0.0
    %2277 = vmatpush1.msra.mxu0 %v110
    %2278 = vmatprep.subr.mxu0 0.0
    %2279 = vmatpush1.msra.mxu0 %v111
    %2280 = vmatprep.subr.mxu0 0.0
    %2281 = vmatpush1.msra.mxu0 %v112
    %2282 = vmatprep.subr.mxu0 0.0
    %2283 = vmatpush1.msra.mxu0 0.0
    %2284 = vmatprep.subr.mxu0 0.0
    %2285 = vmatpush1.msra.mxu0 0.0
    %2286 = vmatprep.subr.mxu0 0.0
    %2287 = vmatpush1.msra.mxu0 0.0
    %2288 = vmatprep.subr.mxu0 0.0
    %2289 = vmatpush1.msra.mxu0 0.0
    %2290 = vmatprep.subr.mxu0 0.0
    %2291 = vmatpush1.msra.mxu0 0.0
    %2292 = vmatprep.subr.mxu0 0.0
    %2293 = vmatpush1.msra.mxu0 0.0
    %2294 = vmatprep.subr.mxu0 0.0
    %2295 = vmatpush1.msra.mxu0 0.0
    %2296 = vmatprep.subr.mxu0 0.0
    %2297 = vmatpush1.msra.mxu0 0.0
    %2298 = vmatprep.subr.mxu0 0.0
    %2299 = vmatpush1.msra.mxu0 0.0
    %2300 = vmatprep.subr.mxu0 0.0
    %2301 = vmatpush1.msra.mxu0 0.0
    %2302 = vmatprep.subr.mxu0 0.0
    %2303 = vmatpush1.msra.mxu0 0.0
    %2304 = vmatprep.subr.mxu0 0.0
    %2305 = vmatpush1.msra.mxu0 0.0
    %2306 = vmatprep.subr.mxu0 0.0
    %2307 = vmatpush1.msra.mxu0 0.0
    %2308 = vmatprep.subr.mxu0 0.0
    %2309 = vmatpush1.msra.mxu0 0.0
    %2310 = vmatprep.subr.mxu0 0.0
    %2311 = vmatpush1.msra.mxu0 0.0
    %2312 = vmatprep.subr.mxu0 0.0
    %2313 = vmatpush1.msra.mxu0 0.0
    %2314 = vmatprep.mubr.f32.mxu0 0.0
    %2315 = vmatmul.mubr.f32.gmra.mrb[0].mxu0 %v2248
    %v2316 = vpop.f32.mrb[0].mxu0
    %v2317 = vadd.f32 0.0, %v2316
    %v2318 = vpop.f32.mrb[0].mxu0
    %2319 = vmatprep.mubr.f32.mxu0 0.0
    %2320 = vmatmul.mubr.f32.gmra.mrb[0].mxu0 %v2249
    %v2321 = vpop.f32.mrb[0].mxu0
    %v2322 = vadd.f32 0.0, %v2321
    %v2323 = vpop.f32.mrb[0].mxu0
    %2324 = vdwg.mxu0
    %v2325 = vmul.f32 %v2317, %v2317
    %v2326 = vsub.f32 %v2322, %v2325
    %v2327 = vmax.f32 %v2326, 0.0
    %v2328 = vadd.f32 %v2327, 1e-05
    %v2329 = vmul.f32 %v2328, %v94
    %v2330 = vrsqrt.pop %v2329
    %v2331 = vsub.f32 %v2248, %v2317
    %v2332 = vmul.f32 %v2331, %v2330
    %v2333 = vxor.u32 %v2332, 2147483648
    %v2334 = vmul.f32 %v2333, 1.442695
    %v2335 = vpow.pop %v2334
    %v2336 = vadd.f32 %v2335, 1.0
    %v2337 = vrcp.pop %v2336
    %v2338 = vmul.f32 1.0, %v2337
    %v2339 = vmul.f32 %v2338, %v95
    %v2340 = vadd.f32 %v2339, %v96
    %v2341 = vmul.f32 %v2340, %v2171
    %2343 = vrot.lane.b32.xlu0 %v2340, 32
    %v2344 = vpop.permute.xlu0 %2343
    %v2346 = vmul.f32 %v2340, %v2344
    %2348 = vrot.lane.b32.xlu0 %v2346, 32
    %v2349 = vpop.permute.xlu0 %2348
    %v2351 = vadd.f32 %v2341, %v2349
    %v2352 = vtanh.pop %v2351
    %2353 = vrot.lane.b32.xlu0 %v2340, 96
    %v2354 = vpop.permute.xlu0 %2353
    %v2356 = vmul.f32 %v2352, %v2354
    %2358 = vrot.lane.b32.xlu0 %v2356, 96
    %v2359 = vpop.permute.xlu0 %2358
    %2361 = vst.msk [vmem:[#allocation2] sm:$0xff] %vm264, %v2359
    %v2362 = vadd.f32 %v1987, %v2356
    %v2363 = vsel %vm264, %v2359, %v2351
    %v2364 = vld [vmem:[%s645] sm:$0xff]
    %v2366 = vsel %vm455, %v2363, 0
    %2368 = vmatprep.subr.mxu0 0.0
    %2369 = vmatpush1.msra.mxu0 %v1989
    %2370 = vmatprep.subr.mxu0 0.0
    %2371 = vmatpush1.msra.mxu0 %v1990
    %2372 = vmatprep.subr.mxu0 0.0
    %2373 = vmatpush1.msra.mxu0 %v1991
    %2374 = vmatprep.subr.mxu0 0.0
    %2375 = vmatpush1.msra.mxu0 %v1992
    %2376 = vmatprep.subr.mxu0 0.0
    %2377 = vmatpush1.msra.mxu0 %v1993
    %2378 = vmatprep.subr.mxu0 0.0
    %2379 = vmatpush1.msra.mxu0 %v1994
    %2380 = vmatprep.subr.mxu0 0.0
    %2381 = vmatpush1.msra.mxu0 %v1995
    %2382 = vmatprep.subr.mxu0 0.0
    %2383 = vmatpush1.msra.mxu0 %v1996
    %2384 = vmatprep.subr.mxu0 0.0
    %2385 = vmatpush1.msra.mxu0 0.0
    %2386 = vmatprep.subr.mxu0 0.0
    %2387 = vmatpush1.msra.mxu0 0.0
    %2388 = vmatprep.subr.mxu0 0.0
    %2389 = vmatpush1.msra.mxu0 0.0
    %2390 = vmatprep.subr.mxu0 0.0
    %2391 = vmatpush1.msra.mxu0 0.0
    %2392 = vmatprep.subr.mxu0 0.0
    %2393 = vmatpush1.msra.mxu0 0.0
    %2394 = vmatprep.subr.mxu0 0.0
    %2395 = vmatpush1.msra.mxu0 0.0
    %2396 = vmatprep.subr.mxu0 0.0
    %2397 = vmatpush1.msra.mxu0 0.0
    %2398 = vmatprep.subr.mxu0 0.0
    %2399 = vmatpush1.msra.mxu0 0.0
    %2400 = vmatprep.subr.mxu0 0.0
    %2401 = vmatpush1.msra.mxu0 0.0
    %2402 = vmatprep.subr.mxu0 0.0
    %2403 = vmatpush1.msra.mxu0 0.0
    %2404 = vmatprep.subr.mxu0 0.0
    %2405 = vmatpush1.msra.mxu0 0.0
    %2406 = vmatprep.subr.mxu0 0.0
    %2407 = vmatpush1.msra.mxu0 0.0
    %2408 = vmatprep.subr.mxu0 0.0
    %2409 = vmatpush1.msra.mxu0 0.0
    %2410 = vmatprep.subr.mxu0 0.0
    %2411 = vmatpush1.msra.mxu0 0.0
    %2412 = vmatprep.subr.mxu0 0.0
    %2413 = vmatpush1.msra.mxu0 0.0
    %2414 = vmatprep.subr.mxu0 0.0
    %2415 = vmatpush1.msra.mxu0 0.0
    %2416 = vmatprep.subr.mxu0 0.0
    %2417 = vmatpush1.msra.mxu0 0.0
    %2418 = vmatprep.subr.mxu0 0.0
    %2419 = vmatpush1.msra.mxu0 0.0
    %2420 = vmatprep.subr.mxu0 0.0
    %2421 = vmatpush1.msra.mxu0 0.0
    %2422 = vmatprep.subr.mxu0 0.0
    %2423 = vmatpush1.msra.mxu0 0.0
    %2424 = vmatprep.subr.mxu0 0.0
    %2425 = vmatpush1.msra.mxu0 0.0
    %2426 = vmatprep.subr.mxu0 0.0
    %2427 = vmatpush1.msra.mxu0 0.0
    %2428 = vmatprep.subr.mxu0 0.0
    %2429 = vmatpush1.msra.mxu0 0.0
    %2430 = vmatprep.subr.mxu0 0.0
    %2431 = vmatpush1.msra.mxu0 0.0
    %2432 = vmatprep.mubr.f32.mxu0 0.0
    %2433 = vmatmul.mubr.f32.gmra.mrb[0].mxu0 %v2366
    %v2434 = vpop.f32.mrb[0].mxu0
    %v2435 = vadd.f32 0.0, %v2434
    %v2436 = vpop.f32.mrb[0].mxu0
    %2437 = vdwg.mxu0
    %v2438 = vadd.f32 %v2364, %v2435
    %v2439 = vmul.f32 %v2438, %v2438
    %2440 = vmatprep.subr.mxu0 0.0
    %2441 = vmatpush1.msra.mxu0 %v97
    %2442 = vmatprep.subr.mxu0 0.0
    %2443 = vmatpush1.msra.mxu0 %v98
    %2444 = vmatprep.subr.mxu0 0.0
    %2445 = vmatpush1.msra.mxu0 %v99
    %2446 = vmatprep.subr.mxu0 0.0
    %2447 = vmatpush1.msra.mxu0 %v100
    %2448 = vmatprep.subr.mxu0 0.0
    %2449 = vmatpush1.msra.mxu0 %v101
    %2450 = vmatprep.subr.mxu0 0.0
    %2451 = vmatpush1.msra.mxu0 %v102
    %2452 = vmatprep.subr.mxu0 0.0
    %2453 = vmatpush1.msra.mxu0 %v103
    %2454 = vmatprep.subr.mxu0 0.0
    %2455 = vmatpush1.msra.mxu0 %v104
    %2456 = vmatprep.subr.mxu0 0.0
    %2457 = vmatpush1.msra.mxu0 %v105
    %2458 = vmatprep.subr.mxu0 0.0
    %2459 = vmatpush1.msra.mxu0 %v106
    %2460 = vmatprep.subr.mxu0 0.0
    %2461 = vmatpush1.msra.mxu0 %v107
    %2462 = vmatprep.subr.mxu0 0.0
    %2463 = vmatpush1.msra.mxu0 %v108
    %2464 = vmatprep.subr.mxu0 0.0
    %2465 = vmatpush1.msra.mxu0 %v109
    %2466 = vmatprep.subr.mxu0 0.0
    %2467 = vmatpush1.msra.mxu0 %v110
    %2468 = vmatprep.subr.mxu0 0.0
    %2469 = vmatpush1.msra.mxu0 %v111
    %2470 = vmatprep.subr.mxu0 0.0
    %2471 = vmatpush1.msra.mxu0 %v112
    %2472 = vmatprep.subr.mxu0 0.0
    %2473 = vmatpush1.msra.mxu0 0.0
    %2474 = vmatprep.subr.mxu0 0.0
    %2475 = vmatpush1.msra.mxu0 0.0
    %2476 = vmatprep.subr.mxu0 0.0
    %2477 = vmatpush1.msra.mxu0 0.0
    %2478 = vmatprep.subr.mxu0 0.0
    %2479 = vmatpush1.msra.mxu0 0.0
    %2480 = vmatprep.subr.mxu0 0.0
    %2481 = vmatpush1.msra.mxu0 0.0
    %2482 = vmatprep.subr.mxu0 0.0
    %2483 = vmatpush1.msra.mxu0 0.0
    %2484 = vmatprep.subr.mxu0 0.0
    %2485 = vmatpush1.msra.mxu0 0.0
    %2486 = vmatprep.subr.mxu0 0.0
    %2487 = vmatpush1.msra.mxu0 0.0
    %2488 = vmatprep.subr.mxu0 0.0
    %2489 = vmatpush1.msra.mxu0 0.0
    %2490 = vmatprep.subr.mxu0 0.0
    %2491 = vmatpush1.msra.mxu0 0.0
    %2492 = vmatprep.subr.mxu0 0.0
    %2493 = vmatpush1.msra.mxu0 0.0
    %2494 = vmatprep.subr.mxu0 0.0
    %2495 = vmatpush1.msra.mxu0 0.0
    %2496 = vmatprep.subr.mxu0 0.0
    %2497 = vmatpush1.msra.mxu0 0.0
    %2498 = vmatprep.subr.mxu0 0.0
    %2499 = vmatpush1.msra.mxu0 0.0
    %2500 = vmatprep.subr.mxu0 0.0
    %2501 = vmatpush1.msra.mxu0 0.0
    %2502 = vmatprep.subr.mxu0 0.0
    %2503 = vmatpush1.msra.mxu0 0.0
    %2504 = vmatprep.mubr.f32.mxu0 0.0
    %2505 = vmatmul.mubr.f32.gmra.mrb[0].mxu0 %v2438
    %v2506 = vpop.f32.mrb[0].mxu0
    %v2507 = vadd.f32 0.0, %v2506
    %v2508 = vpop.f32.mrb[0].mxu0
    %2509 = vmatprep.mubr.f32.mxu0 0.0
    %2510 = vmatmul.mubr.f32.gmra.mrb[0].mxu0 %v2439
    %v2511 = vpop.f32.mrb[0].mxu0
    %v2512 = vadd.f32 0.0, %v2511
    %v2513 = vpop.f32.mrb[0].mxu0
    %2514 = vdwg.mxu0
    %v2515 = vmul.f32 %v2507, %v2507
    %v2516 = vsub.f32 %v2512, %v2515
    %v2517 = vmax.f32 %v2516, 0.0
    %v2518 = vadd.f32 %v2517, 1e-05
    %v2519 = vmul.f32 %v2518, %v94
    %v2520 = vrsqrt.pop %v2519
    %v2521 = vsub.f32 %v2438, %v2507
    %v2522 = vmul.f32 %v2521, %v2520
    %v2523 = vxor.u32 %v2522, 2147483648
    %v2524 = vmul.f32 %v2523, 1.442695
    %v2525 = vpow.pop %v2524
    %v2526 = vadd.f32 %v2525, 1.0
    %v2527 = vrcp.pop %v2526
    %v2528 = vmul.f32 1.0, %v2527
    %v2529 = vmul.f32 %v2528, %v95
    %v2530 = vadd.f32 %v2529, %v96
    %v2531 = vmul.f32 %v2530, %v2351
    %2533 = vrot.lane.b32.xlu0 %v2530, 32
    %v2534 = vpop.permute.xlu0 %2533
    %v2536 = vmul.f32 %v2530, %v2534
    %2538 = vrot.lane.b32.xlu0 %v2536, 32
    %v2539 = vpop.permute.xlu0 %2538
    %v2541 = vadd.f32 %v2531, %v2539
    %v2542 = vtanh.pop %v2541
    %2543 = vrot.lane.b32.xlu0 %v2530, 96
    %v2544 = vpop.permute.xlu0 %2543
    %v2546 = vmul.f32 %v2542, %v2544
    %2548 = vrot.lane.b32.xlu0 %v2546, 96
    %v2549 = vpop.permute.xlu0 %2548
    %2551 = vst.msk [vmem:[%s833] sm:$0xff] %vm264, %v2549
    %v2552 = vadd.f32 %v2362, %v2546
    %v2553 = vsel %vm264, %v2549, %v2541
    %v2554 = vld [vmem:[%s837] sm:$0xff]
    %v2556 = vsel %vm455, %v2553, 0
    %2558 = vmatprep.subr.mxu0 0.0
    %2559 = vmatpush1.msra.mxu0 %v1989
    %2560 = vmatprep.subr.mxu0 0.0
    %2561 = vmatpush1.msra.mxu0 %v1990
    %2562 = vmatprep.subr.mxu0 0.0
    %2563 = vmatpush1.msra.mxu0 %v1991
    %2564 = vmatprep.subr.mxu0 0.0
    %2565 = vmatpush1.msra.mxu0 %v1992
    %2566 = vmatprep.subr.mxu0 0.0
    %2567 = vmatpush1.msra.mxu0 %v1993
    %2568 = vmatprep.subr.mxu0 0.0
    %2569 = vmatpush1.msra.mxu0 %v1994
    %2570 = vmatprep.subr.mxu0 0.0
    %2571 = vmatpush1.msra.mxu0 %v1995
    %2572 = vmatprep.subr.mxu0 0.0
    %2573 = vmatpush1.msra.mxu0 %v1996
    %2574 = vmatprep.subr.mxu0 0.0
    %2575 = vmatpush1.msra.mxu0 0.0
    %2576 = vmatprep.subr.mxu0 0.0
    %2577 = vmatpush1.msra.mxu0 0.0
    %2578 = vmatprep.subr.mxu0 0.0
    %2579 = vmatpush1.msra.mxu0 0.0
    %2580 = vmatprep.subr.mxu0 0.0
    %2581 = vmatpush1.msra.mxu0 0.0
    %2582 = vmatprep.subr.mxu0 0.0
    %2583 = vmatpush1.msra.mxu0 0.0
    %2584 = vmatprep.subr.mxu0 0.0
    %2585 = vmatpush1.msra.mxu0 0.0
    %2586 = vmatprep.subr.mxu0 0.0
    %2587 = vmatpush1.msra.mxu0 0.0
    %2588 = vmatprep.subr.mxu0 0.0
    %2589 = vmatpush1.msra.mxu0 0.0
    %2590 = vmatprep.subr.mxu0 0.0
    %2591 = vmatpush1.msra.mxu0 0.0
    %2592 = vmatprep.subr.mxu0 0.0
    %2593 = vmatpush1.msra.mxu0 0.0
    %2594 = vmatprep.subr.mxu0 0.0
    %2595 = vmatpush1.msra.mxu0 0.0
    %2596 = vmatprep.subr.mxu0 0.0
    %2597 = vmatpush1.msra.mxu0 0.0
    %2598 = vmatprep.subr.mxu0 0.0
    %2599 = vmatpush1.msra.mxu0 0.0
    %2600 = vmatprep.subr.mxu0 0.0
    %2601 = vmatpush1.msra.mxu0 0.0
    %2602 = vmatprep.subr.mxu0 0.0
    %2603 = vmatpush1.msra.mxu0 0.0
    %2604 = vmatprep.subr.mxu0 0.0
    %2605 = vmatpush1.msra.mxu0 0.0
    %2606 = vmatprep.subr.mxu0 0.0
    %2607 = vmatpush1.msra.mxu0 0.0
    %2608 = vmatprep.subr.mxu0 0.0
    %2609 = vmatpush1.msra.mxu0 0.0
    %2610 = vmatprep.subr.mxu0 0.0
    %2611 = vmatpush1.msra.mxu0 0.0
    %2612 = vmatprep.subr.mxu0 0.0
    %2613 = vmatpush1.msra.mxu0 0.0
    %2614 = vmatprep.subr.mxu0 0.0
    %2615 = vmatpush1.msra.mxu0 0.0
    %2616 = vmatprep.subr.mxu0 0.0
    %2617 = vmatpush1.msra.mxu0 0.0
    %2618 = vmatprep.subr.mxu0 0.0
    %2619 = vmatpush1.msra.mxu0 0.0
    %2620 = vmatprep.subr.mxu0 0.0
    %2621 = vmatpush1.msra.mxu0 0.0
    %2622 = vmatprep.mubr.f32.mxu0 0.0
    %2623 = vmatmul.mubr.f32.gmra.mrb[0].mxu0 %v2556
    %v2624 = vpop.f32.mrb[0].mxu0
    %v2625 = vadd.f32 0.0, %v2624
    %v2626 = vpop.f32.mrb[0].mxu0
    %2627 = vdwg.mxu0
    %v2628 = vadd.f32 %v2554, %v2625
    %v2629 = vmul.f32 %v2628, %v2628
    %2630 = vmatprep.subr.mxu0 0.0
    %2631 = vmatpush1.msra.mxu0 %v97
    %2632 = vmatprep.subr.mxu0 0.0
    %2633 = vmatpush1.msra.mxu0 %v98
    %2634 = vmatprep.subr.mxu0 0.0
    %2635 = vmatpush1.msra.mxu0 %v99
    %2636 = vmatprep.subr.mxu0 0.0
    %2637 = vmatpush1.msra.mxu0 %v100
    %2638 = vmatprep.subr.mxu0 0.0
    %2639 = vmatpush1.msra.mxu0 %v101
    %2640 = vmatprep.subr.mxu0 0.0
    %2641 = vmatpush1.msra.mxu0 %v102
    %2642 = vmatprep.subr.mxu0 0.0
    %2643 = vmatpush1.msra.mxu0 %v103
    %2644 = vmatprep.subr.mxu0 0.0
    %2645 = vmatpush1.msra.mxu0 %v104
    %2646 = vmatprep.subr.mxu0 0.0
    %2647 = vmatpush1.msra.mxu0 %v105
    %2648 = vmatprep.subr.mxu0 0.0
    %2649 = vmatpush1.msra.mxu0 %v106
    %2650 = vmatprep.subr.mxu0 0.0
    %2651 = vmatpush1.msra.mxu0 %v107
    %2652 = vmatprep.subr.mxu0 0.0
    %2653 = vmatpush1.msra.mxu0 %v108
    %2654 = vmatprep.subr.mxu0 0.0
    %2655 = vmatpush1.msra.mxu0 %v109
    %2656 = vmatprep.subr.mxu0 0.0
    %2657 = vmatpush1.msra.mxu0 %v110
    %2658 = vmatprep.subr.mxu0 0.0
    %2659 = vmatpush1.msra.mxu0 %v111
    %2660 = vmatprep.subr.mxu0 0.0
    %2661 = vmatpush1.msra.mxu0 %v112
    %2662 = vmatprep.subr.mxu0 0.0
    %2663 = vmatpush1.msra.mxu0 0.0
    %2664 = vmatprep.subr.mxu0 0.0
    %2665 = vmatpush1.msra.mxu0 0.0
    %2666 = vmatprep.subr.mxu0 0.0
    %2667 = vmatpush1.msra.mxu0 0.0
    %2668 = vmatprep.subr.mxu0 0.0
    %2669 = vmatpush1.msra.mxu0 0.0
    %2670 = vmatprep.subr.mxu0 0.0
    %2671 = vmatpush1.msra.mxu0 0.0
    %2672 = vmatprep.subr.mxu0 0.0
    %2673 = vmatpush1.msra.mxu0 0.0
    %2674 = vmatprep.subr.mxu0 0.0
    %2675 = vmatpush1.msra.mxu0 0.0
    %2676 = vmatprep.subr.mxu0 0.0
    %2677 = vmatpush1.msra.mxu0 0.0
    %2678 = vmatprep.subr.mxu0 0.0
    %2679 = vmatpush1.msra.mxu0 0.0
    %2680 = vmatprep.subr.mxu0 0.0
    %2681 = vmatpush1.msra.mxu0 0.0
    %2682 = vmatprep.subr.mxu0 0.0
    %2683 = vmatpush1.msra.mxu0 0.0
    %2684 = vmatprep.subr.mxu0 0.0
    %2685 = vmatpush1.msra.mxu0 0.0
    %2686 = vmatprep.subr.mxu0 0.0
    %2687 = vmatpush1.msra.mxu0 0.0
    %2688 = vmatprep.subr.mxu0 0.0
    %2689 = vmatpush1.msra.mxu0 0.0
    %2690 = vmatprep.subr.mxu0 0.0
    %2691 = vmatpush1.msra.mxu0 0.0
    %2692 = vmatprep.subr.mxu0 0.0
    %2693 = vmatpush1.msra.mxu0 0.0
    %2694 = vmatprep.mubr.f32.mxu0 0.0
    %2695 = vmatmul.mubr.f32.gmra.mrb[0].mxu0 %v2628
    %v2696 = vpop.f32.mrb[0].mxu0
    %v2697 = vadd.f32 0.0, %v2696
    %v2698 = vpop.f32.mrb[0].mxu0
    %2699 = vmatprep.mubr.f32.mxu0 0.0
    %2700 = vmatmul.mubr.f32.gmra.mrb[0].mxu0 %v2629
    %v2701 = vpop.f32.mrb[0].mxu0
    %v2702 = vadd.f32 0.0, %v2701
    %v2703 = vpop.f32.mrb[0].mxu0
    %2704 = vdwg.mxu0
    %v2705 = vmul.f32 %v2697, %v2697
    %v2706 = vsub.f32 %v2702, %v2705
    %v2707 = vmax.f32 %v2706, 0.0
    %v2708 = vadd.f32 %v2707, 1e-05
    %v2709 = vmul.f32 %v2708, %v94
    %v2710 = vrsqrt.pop %v2709
    %v2711 = vsub.f32 %v2628, %v2697
    %v2712 = vmul.f32 %v2711, %v2710
    %v2713 = vxor.u32 %v2712, 2147483648
    %v2714 = vmul.f32 %v2713, 1.442695
    %v2715 = vpow.pop %v2714
    %v2716 = vadd.f32 %v2715, 1.0
    %v2717 = vrcp.pop %v2716
    %v2718 = vmul.f32 1.0, %v2717
    %v2719 = vmul.f32 %v2718, %v95
    %v2720 = vadd.f32 %v2719, %v96
    %v2721 = vmul.f32 %v2720, %v2541
    %2723 = vrot.lane.b32.xlu0 %v2720, 32
    %v2724 = vpop.permute.xlu0 %2723
    %v2726 = vmul.f32 %v2720, %v2724
    %2728 = vrot.lane.b32.xlu0 %v2726, 32
    %v2729 = vpop.permute.xlu0 %2728
    %v2731 = vadd.f32 %v2721, %v2729
    %v2732 = vtanh.pop %v2731
    %2733 = vrot.lane.b32.xlu0 %v2720, 96
    %v2734 = vpop.permute.xlu0 %2733
    %v2736 = vmul.f32 %v2732, %v2734
    %2738 = vrot.lane.b32.xlu0 %v2736, 96
    %v2739 = vpop.permute.xlu0 %2738
    %2741 = vst.msk [vmem:[%s1025] sm:$0xff] %vm264, %v2739
    %v2742 = vadd.f32 %v2552, %v2736
    %v2743 = vsel %vm264, %v2739, %v2731
    %v2744 = vld [vmem:[%s1029] sm:$0xff]
    %v2746 = vsel %vm455, %v2743, 0
    %2748 = vmatprep.subr.mxu0 0.0
    %2749 = vmatpush1.msra.mxu0 %v1989
    %2750 = vmatprep.subr.mxu0 0.0
    %2751 = vmatpush1.msra.mxu0 %v1990
    %2752 = vmatprep.subr.mxu0 0.0
    %2753 = vmatpush1.msra.mxu0 %v1991
    %2754 = vmatprep.subr.mxu0 0.0
    %2755 = vmatpush1.msra.mxu0 %v1992
    %2756 = vmatprep.subr.mxu0 0.0
    %2757 = vmatpush1.msra.mxu0 %v1993
    %2758 = vmatprep.subr.mxu0 0.0
    %2759 = vmatpush1.msra.mxu0 %v1994
    %2760 = vmatprep.subr.mxu0 0.0
    %2761 = vmatpush1.msra.mxu0 %v1995
    %2762 = vmatprep.subr.mxu0 0.0
    %2763 = vmatpush1.msra.mxu0 %v1996
    %2764 = vmatprep.subr.mxu0 0.0
    %2765 = vmatpush1.msra.mxu0 0.0
    %2766 = vmatprep.subr.mxu0 0.0
    %2767 = vmatpush1.msra.mxu0 0.0
    %2768 = vmatprep.subr.mxu0 0.0
    %2769 = vmatpush1.msra.mxu0 0.0
    %2770 = vmatprep.subr.mxu0 0.0
    %2771 = vmatpush1.msra.mxu0 0.0
    %2772 = vmatprep.subr.mxu0 0.0
    %2773 = vmatpush1.msra.mxu0 0.0
    %2774 = vmatprep.subr.mxu0 0.0
    %2775 = vmatpush1.msra.mxu0 0.0
    %2776 = vmatprep.subr.mxu0 0.0
    %2777 = vmatpush1.msra.mxu0 0.0
    %2778 = vmatprep.subr.mxu0 0.0
    %2779 = vmatpush1.msra.mxu0 0.0
    %2780 = vmatprep.subr.mxu0 0.0
    %2781 = vmatpush1.msra.mxu0 0.0
    %2782 = vmatprep.subr.mxu0 0.0
    %2783 = vmatpush1.msra.mxu0 0.0
    %2784 = vmatprep.subr.mxu0 0.0
    %2785 = vmatpush1.msra.mxu0 0.0
    %2786 = vmatprep.subr.mxu0 0.0
    %2787 = vmatpush1.msra.mxu0 0.0
    %2788 = vmatprep.subr.mxu0 0.0
    %2789 = vmatpush1.msra.mxu0 0.0
    %2790 = vmatprep.subr.mxu0 0.0
    %2791 = vmatpush1.msra.mxu0 0.0
    %2792 = vmatprep.subr.mxu0 0.0
    %2793 = vmatpush1.msra.mxu0 0.0
    %2794 = vmatprep.subr.mxu0 0.0
    %2795 = vmatpush1.msra.mxu0 0.0
    %2796 = vmatprep.subr.mxu0 0.0
    %2797 = vmatpush1.msra.mxu0 0.0
    %2798 = vmatprep.subr.mxu0 0.0
    %2799 = vmatpush1.msra.mxu0 0.0
    %2800 = vmatprep.subr.mxu0 0.0
    %2801 = vmatpush1.msra.mxu0 0.0
    %2802 = vmatprep.subr.mxu0 0.0
    %2803 = vmatpush1.msra.mxu0 0.0
    %2804 = vmatprep.subr.mxu0 0.0
    %2805 = vmatpush1.msra.mxu0 0.0
    %2806 = vmatprep.subr.mxu0 0.0
    %2807 = vmatpush1.msra.mxu0 0.0
    %2808 = vmatprep.subr.mxu0 0.0
    %2809 = vmatpush1.msra.mxu0 0.0
    %2810 = vmatprep.subr.mxu0 0.0
    %2811 = vmatpush1.msra.mxu0 0.0
    %2812 = vmatprep.mubr.f32.mxu0 0.0
    %2813 = vmatmul.mubr.f32.gmra.mrb[0].mxu0 %v2746
    %v2814 = vpop.f32.mrb[0].mxu0
    %v2815 = vadd.f32 0.0, %v2814
    %v2816 = vpop.f32.mrb[0].mxu0
    %2817 = vdwg.mxu0
    %v2818 = vadd.f32 %v2744, %v2815
    %v2819 = vmul.f32 %v2818, %v2818
    %2820 = vmatprep.subr.mxu0 0.0
    %2821 = vmatpush1.msra.mxu0 %v97
    %2822 = vmatprep.subr.mxu0 0.0
    %2823 = vmatpush1.msra.mxu0 %v98
    %2824 = vmatprep.subr.mxu0 0.0
    %2825 = vmatpush1.msra.mxu0 %v99
    %2826 = vmatprep.subr.mxu0 0.0
    %2827 = vmatpush1.msra.mxu0 %v100
    %2828 = vmatprep.subr.mxu0 0.0
    %2829 = vmatpush1.msra.mxu0 %v101
    %2830 = vmatprep.subr.mxu0 0.0
    %2831 = vmatpush1.msra.mxu0 %v102
    %2832 = vmatprep.subr.mxu0 0.0
    %2833 = vmatpush1.msra.mxu0 %v103
    %2834 = vmatprep.subr.mxu0 0.0
    %2835 = vmatpush1.msra.mxu0 %v104
    %2836 = vmatprep.subr.mxu0 0.0
    %2837 = vmatpush1.msra.mxu0 %v105
    %2838 = vmatprep.subr.mxu0 0.0
    %2839 = vmatpush1.msra.mxu0 %v106
    %2840 = vmatprep.subr.mxu0 0.0
    %2841 = vmatpush1.msra.mxu0 %v107
    %2842 = vmatprep.subr.mxu0 0.0
    %2843 = vmatpush1.msra.mxu0 %v108
    %2844 = vmatprep.subr.mxu0 0.0
    %2845 = vmatpush1.msra.mxu0 %v109
    %2846 = vmatprep.subr.mxu0 0.0
    %2847 = vmatpush1.msra.mxu0 %v110
    %2848 = vmatprep.subr.mxu0 0.0
    %2849 = vmatpush1.msra.mxu0 %v111
    %2850 = vmatprep.subr.mxu0 0.0
    %2851 = vmatpush1.msra.mxu0 %v112
    %2852 = vmatprep.subr.mxu0 0.0
    %2853 = vmatpush1.msra.mxu0 0.0
    %2854 = vmatprep.subr.mxu0 0.0
    %2855 = vmatpush1.msra.mxu0 0.0
    %2856 = vmatprep.subr.mxu0 0.0
    %2857 = vmatpush1.msra.mxu0 0.0
    %2858 = vmatprep.subr.mxu0 0.0
    %2859 = vmatpush1.msra.mxu0 0.0
    %2860 = vmatprep.subr.mxu0 0.0
    %2861 = vmatpush1.msra.mxu0 0.0
    %2862 = vmatprep.subr.mxu0 0.0
    %2863 = vmatpush1.msra.mxu0 0.0
    %2864 = vmatprep.subr.mxu0 0.0
    %2865 = vmatpush1.msra.mxu0 0.0
    %2866 = vmatprep.subr.mxu0 0.0
    %2867 = vmatpush1.msra.mxu0 0.0
    %2868 = vmatprep.subr.mxu0 0.0
    %2869 = vmatpush1.msra.mxu0 0.0
    %2870 = vmatprep.subr.mxu0 0.0
    %2871 = vmatpush1.msra.mxu0 0.0
    %2872 = vmatprep.subr.mxu0 0.0
    %2873 = vmatpush1.msra.mxu0 0.0
    %2874 = vmatprep.subr.mxu0 0.0
    %2875 = vmatpush1.msra.mxu0 0.0
    %2876 = vmatprep.subr.mxu0 0.0
    %2877 = vmatpush1.msra.mxu0 0.0
    %2878 = vmatprep.subr.mxu0 0.0
    %2879 = vmatpush1.msra.mxu0 0.0
    %2880 = vmatprep.subr.mxu0 0.0
    %2881 = vmatpush1.msra.mxu0 0.0
    %2882 = vmatprep.subr.mxu0 0.0
    %2883 = vmatpush1.msra.mxu0 0.0
    %2884 = vmatprep.mubr.f32.mxu0 0.0
    %2885 = vmatmul.mubr.f32.gmra.mrb[0].mxu0 %v2818
    %v2886 = vpop.f32.mrb[0].mxu0
    %v2887 = vadd.f32 0.0, %v2886
    %v2888 = vpop.f32.mrb[0].mxu0
    %2889 = vmatprep.mubr.f32.mxu0 0.0
    %2890 = vmatmul.mubr.f32.gmra.mrb[0].mxu0 %v2819
    %v2891 = vpop.f32.mrb[0].mxu0
    %v2892 = vadd.f32 0.0, %v2891
    %v2893 = vpop.f32.mrb[0].mxu0
    %2894 = vdwg.mxu0
    %v2895 = vmul.f32 %v2887, %v2887
    %v2896 = vsub.f32 %v2892, %v2895
    %v2897 = vmax.f32 %v2896, 0.0
    %v2898 = vadd.f32 %v2897, 1e-05
    %v2899 = vmul.f32 %v2898, %v94
    %v2900 = vrsqrt.pop %v2899
    %v2901 = vsub.f32 %v2818, %v2887
    %v2902 = vmul.f32 %v2901, %v2900
    %v2903 = vxor.u32 %v2902, 2147483648
    %v2904 = vmul.f32 %v2903, 1.442695
    %v2905 = vpow.pop %v2904
    %v2906 = vadd.f32 %v2905, 1.0
    %v2907 = vrcp.pop %v2906
    %v2908 = vmul.f32 1.0, %v2907
    %v2909 = vmul.f32 %v2908, %v95
    %v2910 = vadd.f32 %v2909, %v96
    %v2911 = vmul.f32 %v2910, %v2731
    %2913 = vrot.lane.b32.xlu0 %v2910, 32
    %v2914 = vpop.permute.xlu0 %2913
    %v2916 = vmul.f32 %v2910, %v2914
    %2918 = vrot.lane.b32.xlu0 %v2916, 32
    %v2919 = vpop.permute.xlu0 %2918
    %v2921 = vadd.f32 %v2911, %v2919
    %v2922 = vtanh.pop %v2921
    %2923 = vrot.lane.b32.xlu0 %v2910, 96
    %v2924 = vpop.permute.xlu0 %2923
    %v2926 = vmul.f32 %v2922, %v2924
    %2928 = vrot.lane.b32.xlu0 %v2926, 96
    %v2929 = vpop.permute.xlu0 %2928
    %2931 = vst.msk [vmem:[%s1217] sm:$0xff] %vm264, %v2929
    %v2932 = vadd.f32 %v2742, %v2926
    %v2933 = vsel %vm264, %v2929, %v2921
    %v2934 = vld [vmem:[%s1221] sm:$0xff]
    %v2936 = vsel %vm455, %v2933, 0
    %2938 = vmatprep.subr.mxu0 0.0
    %2939 = vmatpush1.msra.mxu0 %v1989
    %2940 = vmatprep.subr.mxu0 0.0
    %2941 = vmatpush1.msra.mxu0 %v1990
    %2942 = vmatprep.subr.mxu0 0.0
    %2943 = vmatpush1.msra.mxu0 %v1991
    %2944 = vmatprep.subr.mxu0 0.0
    %2945 = vmatpush1.msra.mxu0 %v1992
    %2946 = vmatprep.subr.mxu0 0.0
    %2947 = vmatpush1.msra.mxu0 %v1993
    %2948 = vmatprep.subr.mxu0 0.0
    %2949 = vmatpush1.msra.mxu0 %v1994
    %2950 = vmatprep.subr.mxu0 0.0
    %2951 = vmatpush1.msra.mxu0 %v1995
    %2952 = vmatprep.subr.mxu0 0.0
    %2953 = vmatpush1.msra.mxu0 %v1996
    %2954 = vmatprep.subr.mxu0 0.0
    %2955 = vmatpush1.msra.mxu0 0.0
    %2956 = vmatprep.subr.mxu0 0.0
    %2957 = vmatpush1.msra.mxu0 0.0
    %2958 = vmatprep.subr.mxu0 0.0
    %2959 = vmatpush1.msra.mxu0 0.0
    %2960 = vmatprep.subr.mxu0 0.0
    %2961 = vmatpush1.msra.mxu0 0.0
    %2962 = vmatprep.subr.mxu0 0.0
    %2963 = vmatpush1.msra.mxu0 0.0
    %2964 = vmatprep.subr.mxu0 0.0
    %2965 = vmatpush1.msra.mxu0 0.0
    %2966 = vmatprep.subr.mxu0 0.0
    %2967 = vmatpush1.msra.mxu0 0.0
    %2968 = vmatprep.subr.mxu0 0.0
    %2969 = vmatpush1.msra.mxu0 0.0
    %2970 = vmatprep.subr.mxu0 0.0
    %2971 = vmatpush1.msra.mxu0 0.0
    %2972 = vmatprep.subr.mxu0 0.0
    %2973 = vmatpush1.msra.mxu0 0.0
    %2974 = vmatprep.subr.mxu0 0.0
    %2975 = vmatpush1.msra.mxu0 0.0
    %2976 = vmatprep.subr.mxu0 0.0
    %2977 = vmatpush1.msra.mxu0 0.0
    %2978 = vmatprep.subr.mxu0 0.0
    %2979 = vmatpush1.msra.mxu0 0.0
    %2980 = vmatprep.subr.mxu0 0.0
    %2981 = vmatpush1.msra.mxu0 0.0
    %2982 = vmatprep.subr.mxu0 0.0
    %2983 = vmatpush1.msra.mxu0 0.0
    %2984 = vmatprep.subr.mxu0 0.0
    %2985 = vmatpush1.msra.mxu0 0.0
    %2986 = vmatprep.subr.mxu0 0.0
    %2987 = vmatpush1.msra.mxu0 0.0
    %2988 = vmatprep.subr.mxu0 0.0
    %2989 = vmatpush1.msra.mxu0 0.0
    %2990 = vmatprep.subr.mxu0 0.0
    %2991 = vmatpush1.msra.mxu0 0.0
    %2992 = vmatprep.subr.mxu0 0.0
    %2993 = vmatpush1.msra.mxu0 0.0
    %2994 = vmatprep.subr.mxu0 0.0
    %2995 = vmatpush1.msra.mxu0 0.0
    %2996 = vmatprep.subr.mxu0 0.0
    %2997 = vmatpush1.msra.mxu0 0.0
    %2998 = vmatprep.subr.mxu0 0.0
    %2999 = vmatpush1.msra.mxu0 0.0
    %3000 = vmatprep.subr.mxu0 0.0
    %3001 = vmatpush1.msra.mxu0 0.0
    %3002 = vmatprep.mubr.f32.mxu0 0.0
    %3003 = vmatmul.mubr.f32.gmra.mrb[0].mxu0 %v2936
    %v3004 = vpop.f32.mrb[0].mxu0
    %v3005 = vadd.f32 0.0, %v3004
    %v3006 = vpop.f32.mrb[0].mxu0
    %3007 = vdwg.mxu0
    %v3008 = vadd.f32 %v2934, %v3005
    %v3009 = vmul.f32 %v3008, %v3008
    %3010 = vmatprep.subr.mxu0 0.0
    %3011 = vmatpush1.msra.mxu0 %v97
    %3012 = vmatprep.subr.mxu0 0.0
    %3013 = vmatpush1.msra.mxu0 %v98
    %3014 = vmatprep.subr.mxu0 0.0
    %3015 = vmatpush1.msra.mxu0 %v99
    %3016 = vmatprep.subr.mxu0 0.0
    %3017 = vmatpush1.msra.mxu0 %v100
    %3018 = vmatprep.subr.mxu0 0.0
    %3019 = vmatpush1.msra.mxu0 %v101
    %3020 = vmatprep.subr.mxu0 0.0
    %3021 = vmatpush1.msra.mxu0 %v102
    %3022 = vmatprep.subr.mxu0 0.0
    %3023 = vmatpush1.msra.mxu0 %v103
    %3024 = vmatprep.subr.mxu0 0.0
    %3025 = vmatpush1.msra.mxu0 %v104
    %3026 = vmatprep.subr.mxu0 0.0
    %3027 = vmatpush1.msra.mxu0 %v105
    %3028 = vmatprep.subr.mxu0 0.0
    %3029 = vmatpush1.msra.mxu0 %v106
    %3030 = vmatprep.subr.mxu0 0.0
    %3031 = vmatpush1.msra.mxu0 %v107
    %3032 = vmatprep.subr.mxu0 0.0
    %3033 = vmatpush1.msra.mxu0 %v108
    %3034 = vmatprep.subr.mxu0 0.0
    %3035 = vmatpush1.msra.mxu0 %v109
    %3036 = vmatprep.subr.mxu0 0.0
    %3037 = vmatpush1.msra.mxu0 %v110
    %3038 = vmatprep.subr.mxu0 0.0
    %3039 = vmatpush1.msra.mxu0 %v111
    %3040 = vmatprep.subr.mxu0 0.0
    %3041 = vmatpush1.msra.mxu0 %v112
    %3042 = vmatprep.subr.mxu0 0.0
    %3043 = vmatpush1.msra.mxu0 0.0
    %3044 = vmatprep.subr.mxu0 0.0
    %3045 = vmatpush1.msra.mxu0 0.0
    %3046 = vmatprep.subr.mxu0 0.0
    %3047 = vmatpush1.msra.mxu0 0.0
    %3048 = vmatprep.subr.mxu0 0.0
    %3049 = vmatpush1.msra.mxu0 0.0
    %3050 = vmatprep.subr.mxu0 0.0
    %3051 = vmatpush1.msra.mxu0 0.0
    %3052 = vmatprep.subr.mxu0 0.0
    %3053 = vmatpush1.msra.mxu0 0.0
    %3054 = vmatprep.subr.mxu0 0.0
    %3055 = vmatpush1.msra.mxu0 0.0
    %3056 = vmatprep.subr.mxu0 0.0
    %3057 = vmatpush1.msra.mxu0 0.0
    %3058 = vmatprep.subr.mxu0 0.0
    %3059 = vmatpush1.msra.mxu0 0.0
    %3060 = vmatprep.subr.mxu0 0.0
    %3061 = vmatpush1.msra.mxu0 0.0
    %3062 = vmatprep.subr.mxu0 0.0
    %3063 = vmatpush1.msra.mxu0 0.0
    %3064 = vmatprep.subr.mxu0 0.0
    %3065 = vmatpush1.msra.mxu0 0.0
    %3066 = vmatprep.subr.mxu0 0.0
    %3067 = vmatpush1.msra.mxu0 0.0
    %3068 = vmatprep.subr.mxu0 0.0
    %3069 = vmatpush1.msra.mxu0 0.0
    %3070 = vmatprep.subr.mxu0 0.0
    %3071 = vmatpush1.msra.mxu0 0.0
    %3072 = vmatprep.subr.mxu0 0.0
    %3073 = vmatpush1.msra.mxu0 0.0
    %3074 = vmatprep.mubr.f32.mxu0 0.0
    %3075 = vmatmul.mubr.f32.gmra.mrb[0].mxu0 %v3008
    %v3076 = vpop.f32.mrb[0].mxu0
    %v3077 = vadd.f32 0.0, %v3076
    %v3078 = vpop.f32.mrb[0].mxu0
    %3079 = vmatprep.mubr.f32.mxu0 0.0
    %3080 = vmatmul.mubr.f32.gmra.mrb[0].mxu0 %v3009
    %v3081 = vpop.f32.mrb[0].mxu0
    %v3082 = vadd.f32 0.0, %v3081
    %v3083 = vpop.f32.mrb[0].mxu0
    %3084 = vdwg.mxu0
    %v3085 = vmul.f32 %v3077, %v3077
    %v3086 = vsub.f32 %v3082, %v3085
    %v3087 = vmax.f32 %v3086, 0.0
    %v3088 = vadd.f32 %v3087, 1e-05
    %v3089 = vmul.f32 %v3088, %v94
    %v3090 = vrsqrt.pop %v3089
    %v3091 = vsub.f32 %v3008, %v3077
    %v3092 = vmul.f32 %v3091, %v3090
    %v3093 = vxor.u32 %v3092, 2147483648
    %v3094 = vmul.f32 %v3093, 1.442695
    %v3095 = vpow.pop %v3094
    %v3096 = vadd.f32 %v3095, 1.0
    %v3097 = vrcp.pop %v3096
    %v3098 = vmul.f32 1.0, %v3097
    %v3099 = vmul.f32 %v3098, %v95
    %v3100 = vadd.f32 %v3099, %v96
    %v3101 = vmul.f32 %v3100, %v2921
    %3103 = vrot.lane.b32.xlu0 %v3100, 32
    %v3104 = vpop.permute.xlu0 %3103
    %v3106 = vmul.f32 %v3100, %v3104
    %3108 = vrot.lane.b32.xlu0 %v3106, 32
    %v3109 = vpop.permute.xlu0 %3108
    %v3111 = vadd.f32 %v3101, %v3109
    %v3112 = vtanh.pop %v3111
    %3113 = vrot.lane.b32.xlu0 %v3100, 96
    %v3114 = vpop.permute.xlu0 %3113
    %v3116 = vmul.f32 %v3112, %v3114
    %3118 = vrot.lane.b32.xlu0 %v3116, 96
    %v3119 = vpop.permute.xlu0 %3118
    %3121 = vst.msk [vmem:[%s1409] sm:$0xff] %vm264, %v3119
    %v3122 = vadd.f32 %v2932, %v3116
    %v3123 = vsel %vm264, %v3119, %v3111
    %v3124 = vld [vmem:[%s1413] sm:$0xff]
    %v3126 = vsel %vm455, %v3123, 0
    %3128 = vmatprep.subr.mxu0 0.0
    %3129 = vmatpush1.msra.mxu0 %v1989
    %3130 = vmatprep.subr.mxu0 0.0
    %3131 = vmatpush1.msra.mxu0 %v1990
    %3132 = vmatprep.subr.mxu0 0.0
    %3133 = vmatpush1.msra.mxu0 %v1991
    %3134 = vmatprep.subr.mxu0 0.0
    %3135 = vmatpush1.msra.mxu0 %v1992
    %3136 = vmatprep.subr.mxu0 0.0
    %3137 = vmatpush1.msra.mxu0 %v1993
    %3138 = vmatprep.subr.mxu0 0.0
    %3139 = vmatpush1.msra.mxu0 %v1994
    %3140 = vmatprep.subr.mxu0 0.0
    %3141 = vmatpush1.msra.mxu0 %v1995
    %3142 = vmatprep.subr.mxu0 0.0
    %3143 = vmatpush1.msra.mxu0 %v1996
    %3144 = vmatprep.subr.mxu0 0.0
    %3145 = vmatpush1.msra.mxu0 0.0
    %3146 = vmatprep.subr.mxu0 0.0
    %3147 = vmatpush1.msra.mxu0 0.0
    %3148 = vmatprep.subr.mxu0 0.0
    %3149 = vmatpush1.msra.mxu0 0.0
    %3150 = vmatprep.subr.mxu0 0.0
    %3151 = vmatpush1.msra.mxu0 0.0
    %3152 = vmatprep.subr.mxu0 0.0
    %3153 = vmatpush1.msra.mxu0 0.0
    %3154 = vmatprep.subr.mxu0 0.0
    %3155 = vmatpush1.msra.mxu0 0.0
    %3156 = vmatprep.subr.mxu0 0.0
    %3157 = vmatpush1.msra.mxu0 0.0
    %3158 = vmatprep.subr.mxu0 0.0
    %3159 = vmatpush1.msra.mxu0 0.0
    %3160 = vmatprep.subr.mxu0 0.0
    %3161 = vmatpush1.msra.mxu0 0.0
    %3162 = vmatprep.subr.mxu0 0.0
    %3163 = vmatpush1.msra.mxu0 0.0
    %3164 = vmatprep.subr.mxu0 0.0
    %3165 = vmatpush1.msra.mxu0 0.0
    %3166 = vmatprep.subr.mxu0 0.0
    %3167 = vmatpush1.msra.mxu0 0.0
    %3168 = vmatprep.subr.mxu0 0.0
    %3169 = vmatpush1.msra.mxu0 0.0
    %3170 = vmatprep.subr.mxu0 0.0
    %3171 = vmatpush1.msra.mxu0 0.0
    %3172 = vmatprep.subr.mxu0 0.0
    %3173 = vmatpush1.msra.mxu0 0.0
    %3174 = vmatprep.subr.mxu0 0.0
    %3175 = vmatpush1.msra.mxu0 0.0
    %3176 = vmatprep.subr.mxu0 0.0
    %3177 = vmatpush1.msra.mxu0 0.0
    %3178 = vmatprep.subr.mxu0 0.0
    %3179 = vmatpush1.msra.mxu0 0.0
    %3180 = vmatprep.subr.mxu0 0.0
    %3181 = vmatpush1.msra.mxu0 0.0
    %3182 = vmatprep.subr.mxu0 0.0
    %3183 = vmatpush1.msra.mxu0 0.0
    %3184 = vmatprep.subr.mxu0 0.0
    %3185 = vmatpush1.msra.mxu0 0.0
    %3186 = vmatprep.subr.mxu0 0.0
    %3187 = vmatpush1.msra.mxu0 0.0
    %3188 = vmatprep.subr.mxu0 0.0
    %3189 = vmatpush1.msra.mxu0 0.0
    %3190 = vmatprep.subr.mxu0 0.0
    %3191 = vmatpush1.msra.mxu0 0.0
    %3192 = vmatprep.mubr.f32.mxu0 0.0
    %3193 = vmatmul.mubr.f32.gmra.mrb[0].mxu0 %v3126
    %v3194 = vpop.f32.mrb[0].mxu0
    %v3195 = vadd.f32 0.0, %v3194
    %v3196 = vpop.f32.mrb[0].mxu0
    %3197 = vdwg.mxu0
    %v3198 = vadd.f32 %v3124, %v3195
    %v3199 = vmul.f32 %v3198, %v3198
    %3200 = vmatprep.subr.mxu0 0.0
    %3201 = vmatpush1.msra.mxu0 %v97
    %3202 = vmatprep.subr.mxu0 0.0
    %3203 = vmatpush1.msra.mxu0 %v98
    %3204 = vmatprep.subr.mxu0 0.0
    %3205 = vmatpush1.msra.mxu0 %v99
    %3206 = vmatprep.subr.mxu0 0.0
    %3207 = vmatpush1.msra.mxu0 %v100
    %3208 = vmatprep.subr.mxu0 0.0
    %3209 = vmatpush1.msra.mxu0 %v101
    %3210 = vmatprep.subr.mxu0 0.0
    %3211 = vmatpush1.msra.mxu0 %v102
    %3212 = vmatprep.subr.mxu0 0.0
    %3213 = vmatpush1.msra.mxu0 %v103
    %3214 = vmatprep.subr.mxu0 0.0
    %3215 = vmatpush1.msra.mxu0 %v104
    %3216 = vmatprep.subr.mxu0 0.0
    %3217 = vmatpush1.msra.mxu0 %v105
    %3218 = vmatprep.subr.mxu0 0.0
    %3219 = vmatpush1.msra.mxu0 %v106
    %3220 = vmatprep.subr.mxu0 0.0
    %3221 = vmatpush1.msra.mxu0 %v107
    %3222 = vmatprep.subr.mxu0 0.0
    %3223 = vmatpush1.msra.mxu0 %v108
    %3224 = vmatprep.subr.mxu0 0.0
    %3225 = vmatpush1.msra.mxu0 %v109
    %3226 = vmatprep.subr.mxu0 0.0
    %3227 = vmatpush1.msra.mxu0 %v110
    %3228 = vmatprep.subr.mxu0 0.0
    %3229 = vmatpush1.msra.mxu0 %v111
    %3230 = vmatprep.subr.mxu0 0.0
    %3231 = vmatpush1.msra.mxu0 %v112
    %3232 = vmatprep.subr.mxu0 0.0
    %3233 = vmatpush1.msra.mxu0 0.0
    %3234 = vmatprep.subr.mxu0 0.0
    %3235 = vmatpush1.msra.mxu0 0.0
    %3236 = vmatprep.subr.mxu0 0.0
    %3237 = vmatpush1.msra.mxu0 0.0
    %3238 = vmatprep.subr.mxu0 0.0
    %3239 = vmatpush1.msra.mxu0 0.0
    %3240 = vmatprep.subr.mxu0 0.0
    %3241 = vmatpush1.msra.mxu0 0.0
    %3242 = vmatprep.subr.mxu0 0.0
    %3243 = vmatpush1.msra.mxu0 0.0
    %3244 = vmatprep.subr.mxu0 0.0
    %3245 = vmatpush1.msra.mxu0 0.0
    %3246 = vmatprep.subr.mxu0 0.0
    %3247 = vmatpush1.msra.mxu0 0.0
    %3248 = vmatprep.subr.mxu0 0.0
    %3249 = vmatpush1.msra.mxu0 0.0
    %3250 = vmatprep.subr.mxu0 0.0
    %3251 = vmatpush1.msra.mxu0 0.0
    %3252 = vmatprep.subr.mxu0 0.0
    %3253 = vmatpush1.msra.mxu0 0.0
    %3254 = vmatprep.subr.mxu0 0.0
    %3255 = vmatpush1.msra.mxu0 0.0
    %3256 = vmatprep.subr.mxu0 0.0
    %3257 = vmatpush1.msra.mxu0 0.0
    %3258 = vmatprep.subr.mxu0 0.0
    %3259 = vmatpush1.msra.mxu0 0.0
    %3260 = vmatprep.subr.mxu0 0.0
    %3261 = vmatpush1.msra.mxu0 0.0
    %3262 = vmatprep.subr.mxu0 0.0
    %3263 = vmatpush1.msra.mxu0 0.0
    %3264 = vmatprep.mubr.f32.mxu0 0.0
    %3265 = vmatmul.mubr.f32.gmra.mrb[0].mxu0 %v3198
    %v3266 = vpop.f32.mrb[0].mxu0
    %v3267 = vadd.f32 0.0, %v3266
    %v3268 = vpop.f32.mrb[0].mxu0
    %3269 = vmatprep.mubr.f32.mxu0 0.0
    %3270 = vmatmul.mubr.f32.gmra.mrb[0].mxu0 %v3199
    %v3271 = vpop.f32.mrb[0].mxu0
    %v3272 = vadd.f32 0.0, %v3271
    %v3273 = vpop.f32.mrb[0].mxu0
    %3274 = vdwg.mxu0
    %v3275 = vmul.f32 %v3267, %v3267
    %v3276 = vsub.f32 %v3272, %v3275
    %v3277 = vmax.f32 %v3276, 0.0
    %v3278 = vadd.f32 %v3277, 1e-05
    %v3279 = vmul.f32 %v3278, %v94
    %v3280 = vrsqrt.pop %v3279
    %v3281 = vsub.f32 %v3198, %v3267
    %v3282 = vmul.f32 %v3281, %v3280
    %v3283 = vxor.u32 %v3282, 2147483648
    %v3284 = vmul.f32 %v3283, 1.442695
    %v3285 = vpow.pop %v3284
    %v3286 = vadd.f32 %v3285, 1.0
    %v3287 = vrcp.pop %v3286
    %v3288 = vmul.f32 1.0, %v3287
    %v3289 = vmul.f32 %v3288, %v95
    %v3290 = vadd.f32 %v3289, %v96
    %v3291 = vmul.f32 %v3290, %v3111
    %3293 = vrot.lane.b32.xlu0 %v3290, 32
    %v3294 = vpop.permute.xlu0 %3293
    %v3296 = vmul.f32 %v3290, %v3294
    %3298 = vrot.lane.b32.xlu0 %v3296, 32
    %v3299 = vpop.permute.xlu0 %3298
    %v3301 = vadd.f32 %v3291, %v3299
    %v3302 = vtanh.pop %v3301
    %3303 = vrot.lane.b32.xlu0 %v3290, 96
    %v3304 = vpop.permute.xlu0 %3303
    %v3306 = vmul.f32 %v3302, %v3304
    %3308 = vrot.lane.b32.xlu0 %v3306, 96
    %v3309 = vpop.permute.xlu0 %3308
    %3311 = vst.msk [vmem:[%s1601] sm:$0xff] %vm264, %v3309
    %v3312 = vadd.f32 %v3122, %v3306
    %v3313 = vsel %vm264, %v3309, %v3301
    %v3314 = vld [vmem:[%s1605] sm:$0xff]
    %v3316 = vsel %vm455, %v3313, 0
    %3318 = vmatprep.subr.mxu0 0.0
    %3319 = vmatpush1.msra.mxu0 %v1989
    %3320 = vmatprep.subr.mxu0 0.0
    %3321 = vmatpush1.msra.mxu0 %v1990
    %3322 = vmatprep.subr.mxu0 0.0
    %3323 = vmatpush1.msra.mxu0 %v1991
    %3324 = vmatprep.subr.mxu0 0.0
    %3325 = vmatpush1.msra.mxu0 %v1992
    %3326 = vmatprep.subr.mxu0 0.0
    %3327 = vmatpush1.msra.mxu0 %v1993
    %3328 = vmatprep.subr.mxu0 0.0
    %3329 = vmatpush1.msra.mxu0 %v1994
    %3330 = vmatprep.subr.mxu0 0.0
    %3331 = vmatpush1.msra.mxu0 %v1995
    %3332 = vmatprep.subr.mxu0 0.0
    %3333 = vmatpush1.msra.mxu0 %v1996
    %3334 = vmatprep.subr.mxu0 0.0
    %3335 = vmatpush1.msra.mxu0 0.0
    %3336 = vmatprep.subr.mxu0 0.0
    %3337 = vmatpush1.msra.mxu0 0.0
    %3338 = vmatprep.subr.mxu0 0.0
    %3339 = vmatpush1.msra.mxu0 0.0
    %3340 = vmatprep.subr.mxu0 0.0
    %3341 = vmatpush1.msra.mxu0 0.0
    %3342 = vmatprep.subr.mxu0 0.0
    %3343 = vmatpush1.msra.mxu0 0.0
    %3344 = vmatprep.subr.mxu0 0.0
    %3345 = vmatpush1.msra.mxu0 0.0
    %3346 = vmatprep.subr.mxu0 0.0
    %3347 = vmatpush1.msra.mxu0 0.0
    %3348 = vmatprep.subr.mxu0 0.0
    %3349 = vmatpush1.msra.mxu0 0.0
    %3350 = vmatprep.subr.mxu0 0.0
    %3351 = vmatpush1.msra.mxu0 0.0
    %3352 = vmatprep.subr.mxu0 0.0
    %3353 = vmatpush1.msra.mxu0 0.0
    %3354 = vmatprep.subr.mxu0 0.0
    %3355 = vmatpush1.msra.mxu0 0.0
    %3356 = vmatprep.subr.mxu0 0.0
    %3357 = vmatpush1.msra.mxu0 0.0
    %3358 = vmatprep.subr.mxu0 0.0
    %3359 = vmatpush1.msra.mxu0 0.0
    %3360 = vmatprep.subr.mxu0 0.0
    %3361 = vmatpush1.msra.mxu0 0.0
    %3362 = vmatprep.subr.mxu0 0.0
    %3363 = vmatpush1.msra.mxu0 0.0
    %3364 = vmatprep.subr.mxu0 0.0
    %3365 = vmatpush1.msra.mxu0 0.0
    %3366 = vmatprep.subr.mxu0 0.0
    %3367 = vmatpush1.msra.mxu0 0.0
    %3368 = vmatprep.subr.mxu0 0.0
    %3369 = vmatpush1.msra.mxu0 0.0
    %3370 = vmatprep.subr.mxu0 0.0
    %3371 = vmatpush1.msra.mxu0 0.0
    %3372 = vmatprep.subr.mxu0 0.0
    %3373 = vmatpush1.msra.mxu0 0.0
    %3374 = vmatprep.subr.mxu0 0.0
    %3375 = vmatpush1.msra.mxu0 0.0
    %3376 = vmatprep.subr.mxu0 0.0
    %3377 = vmatpush1.msra.mxu0 0.0
    %3378 = vmatprep.subr.mxu0 0.0
    %3379 = vmatpush1.msra.mxu0 0.0
    %3380 = vmatprep.subr.mxu0 0.0
    %3381 = vmatpush1.msra.mxu0 0.0
    %3382 = vmatprep.mubr.f32.mxu0 0.0
    %3383 = vmatmul.mubr.f32.gmra.mrb[0].mxu0 %v3316
    %v3384 = vpop.f32.mrb[0].mxu0
    %v3385 = vadd.f32 0.0, %v3384
    %v3386 = vpop.f32.mrb[0].mxu0
    %3387 = vdwg.mxu0
    %v3388 = vadd.f32 %v3314, %v3385
    %v3389 = vmul.f32 %v3388, %v3388
    %3390 = vmatprep.subr.mxu0 0.0
    %3391 = vmatpush1.msra.mxu0 %v97
    %3392 = vmatprep.subr.mxu0 0.0
    %3393 = vmatpush1.msra.mxu0 %v98
    %3394 = vmatprep.subr.mxu0 0.0
    %3395 = vmatpush1.msra.mxu0 %v99
    %3396 = vmatprep.subr.mxu0 0.0
    %3397 = vmatpush1.msra.mxu0 %v100
    %3398 = vmatprep.subr.mxu0 0.0
    %3399 = vmatpush1.msra.mxu0 %v101
    %3400 = vmatprep.subr.mxu0 0.0
    %3401 = vmatpush1.msra.mxu0 %v102
    %3402 = vmatprep.subr.mxu0 0.0
    %3403 = vmatpush1.msra.mxu0 %v103
    %3404 = vmatprep.subr.mxu0 0.0
    %3405 = vmatpush1.msra.mxu0 %v104
    %3406 = vmatprep.subr.mxu0 0.0
    %3407 = vmatpush1.msra.mxu0 %v105
    %3408 = vmatprep.subr.mxu0 0.0
    %3409 = vmatpush1.msra.mxu0 %v106
    %3410 = vmatprep.subr.mxu0 0.0
    %3411 = vmatpush1.msra.mxu0 %v107
    %3412 = vmatprep.subr.mxu0 0.0
    %3413 = vmatpush1.msra.mxu0 %v108
    %3414 = vmatprep.subr.mxu0 0.0
    %3415 = vmatpush1.msra.mxu0 %v109
    %3416 = vmatprep.subr.mxu0 0.0
    %3417 = vmatpush1.msra.mxu0 %v110
    %3418 = vmatprep.subr.mxu0 0.0
    %3419 = vmatpush1.msra.mxu0 %v111
    %3420 = vmatprep.subr.mxu0 0.0
    %3421 = vmatpush1.msra.mxu0 %v112
    %3422 = vmatprep.subr.mxu0 0.0
    %3423 = vmatpush1.msra.mxu0 0.0
    %3424 = vmatprep.subr.mxu0 0.0
    %3425 = vmatpush1.msra.mxu0 0.0
    %3426 = vmatprep.subr.mxu0 0.0
    %3427 = vmatpush1.msra.mxu0 0.0
    %3428 = vmatprep.subr.mxu0 0.0
    %3429 = vmatpush1.msra.mxu0 0.0
    %3430 = vmatprep.subr.mxu0 0.0
    %3431 = vmatpush1.msra.mxu0 0.0
    %3432 = vmatprep.subr.mxu0 0.0
    %3433 = vmatpush1.msra.mxu0 0.0
    %3434 = vmatprep.subr.mxu0 0.0
    %3435 = vmatpush1.msra.mxu0 0.0
    %3436 = vmatprep.subr.mxu0 0.0
    %3437 = vmatpush1.msra.mxu0 0.0
    %3438 = vmatprep.subr.mxu0 0.0
    %3439 = vmatpush1.msra.mxu0 0.0
    %3440 = vmatprep.subr.mxu0 0.0
    %3441 = vmatpush1.msra.mxu0 0.0
    %3442 = vmatprep.subr.mxu0 0.0
    %3443 = vmatpush1.msra.mxu0 0.0
    %3444 = vmatprep.subr.mxu0 0.0
    %3445 = vmatpush1.msra.mxu0 0.0
    %3446 = vmatprep.subr.mxu0 0.0
    %3447 = vmatpush1.msra.mxu0 0.0
    %3448 = vmatprep.subr.mxu0 0.0
    %3449 = vmatpush1.msra.mxu0 0.0
    %3450 = vmatprep.subr.mxu0 0.0
    %3451 = vmatpush1.msra.mxu0 0.0
    %3452 = vmatprep.subr.mxu0 0.0
    %3453 = vmatpush1.msra.mxu0 0.0
    %3454 = vmatprep.mubr.f32.mxu0 0.0
    %3455 = vmatmul.mubr.f32.gmra.mrb[0].mxu0 %v3388
    %v3456 = vpop.f32.mrb[0].mxu0
    %v3457 = vadd.f32 0.0, %v3456
    %v3458 = vpop.f32.mrb[0].mxu0
    %3459 = vmatprep.mubr.f32.mxu0 0.0
    %3460 = vmatmul.mubr.f32.gmra.mrb[0].mxu0 %v3389
    %v3461 = vpop.f32.mrb[0].mxu0
    %v3462 = vadd.f32 0.0, %v3461
    %v3463 = vpop.f32.mrb[0].mxu0
    %3464 = vdwg.mxu0
    %v3465 = vmul.f32 %v3457, %v3457
    %v3466 = vsub.f32 %v3462, %v3465
    %v3467 = vmax.f32 %v3466, 0.0
    %v3468 = vadd.f32 %v3467, 1e-05
    %v3469 = vmul.f32 %v3468, %v94
    %v3470 = vrsqrt.pop %v3469
    %v3471 = vsub.f32 %v3388, %v3457
    %v3472 = vmul.f32 %v3471, %v3470
    %v3473 = vxor.u32 %v3472, 2147483648
    %v3474 = vmul.f32 %v3473, 1.442695
    %v3475 = vpow.pop %v3474
    %v3476 = vadd.f32 %v3475, 1.0
    %v3477 = vrcp.pop %v3476
    %v3478 = vmul.f32 1.0, %v3477
    %v3479 = vmul.f32 %v3478, %v95
    %v3480 = vadd.f32 %v3479, %v96
    %v3481 = vmul.f32 %v3480, %v3301
    %3483 = vrot.lane.b32.xlu0 %v3480, 32
    %v3484 = vpop.permute.xlu0 %3483
    %v3486 = vmul.f32 %v3480, %v3484
    %3488 = vrot.lane.b32.xlu0 %v3486, 32
    %v3489 = vpop.permute.xlu0 %3488
    %v3491 = vadd.f32 %v3481, %v3489
    %v3492 = vtanh.pop %v3491
    %3493 = vrot.lane.b32.xlu0 %v3480, 96
    %v3494 = vpop.permute.xlu0 %3493
    %v3496 = vmul.f32 %v3492, %v3494
    %3498 = vrot.lane.b32.xlu0 %v3496, 96
    %v3499 = vpop.permute.xlu0 %3498
    %3501 = vst.msk [vmem:[%s1793] sm:$0xff] %vm264, %v3499
    %v3502 = vadd.f32 %v3312, %v3496
    %v3503 = vsel %vm264, %v3499, %v3491
    %v3504 = vld [vmem:[%s1797] sm:$0xff]
    %v3506 = vsel %vm455, %v3503, 0
    %3508 = vmatprep.subr.mxu0 0.0
    %3509 = vmatpush1.msra.mxu0 %v1989
    %3510 = vmatprep.subr.mxu0 0.0
    %3511 = vmatpush1.msra.mxu0 %v1990
    %3512 = vmatprep.subr.mxu0 0.0
    %3513 = vmatpush1.msra.mxu0 %v1991
    %3514 = vmatprep.subr.mxu0 0.0
    %3515 = vmatpush1.msra.mxu0 %v1992
    %3516 = vmatprep.subr.mxu0 0.0
    %3517 = vmatpush1.msra.mxu0 %v1993
    %3518 = vmatprep.subr.mxu0 0.0
    %3519 = vmatpush1.msra.mxu0 %v1994
    %3520 = vmatprep.subr.mxu0 0.0
    %3521 = vmatpush1.msra.mxu0 %v1995
    %3522 = vmatprep.subr.mxu0 0.0
    %3523 = vmatpush1.msra.mxu0 %v1996
    %3524 = vmatprep.subr.mxu0 0.0
    %3525 = vmatpush1.msra.mxu0 0.0
    %3526 = vmatprep.subr.mxu0 0.0
    %3527 = vmatpush1.msra.mxu0 0.0
    %3528 = vmatprep.subr.mxu0 0.0
    %3529 = vmatpush1.msra.mxu0 0.0
    %3530 = vmatprep.subr.mxu0 0.0
    %3531 = vmatpush1.msra.mxu0 0.0
    %3532 = vmatprep.subr.mxu0 0.0
    %3533 = vmatpush1.msra.mxu0 0.0
    %3534 = vmatprep.subr.mxu0 0.0
    %3535 = vmatpush1.msra.mxu0 0.0
    %3536 = vmatprep.subr.mxu0 0.0
    %3537 = vmatpush1.msra.mxu0 0.0
    %3538 = vmatprep.subr.mxu0 0.0
    %3539 = vmatpush1.msra.mxu0 0.0
    %3540 = vmatprep.subr.mxu0 0.0
    %3541 = vmatpush1.msra.mxu0 0.0
    %3542 = vmatprep.subr.mxu0 0.0
    %3543 = vmatpush1.msra.mxu0 0.0
    %3544 = vmatprep.subr.mxu0 0.0
    %3545 = vmatpush1.msra.mxu0 0.0
    %3546 = vmatprep.subr.mxu0 0.0
    %3547 = vmatpush1.msra.mxu0 0.0
    %3548 = vmatprep.subr.mxu0 0.0
    %3549 = vmatpush1.msra.mxu0 0.0
    %3550 = vmatprep.subr.mxu0 0.0
    %3551 = vmatpush1.msra.mxu0 0.0
    %3552 = vmatprep.subr.mxu0 0.0
    %3553 = vmatpush1.msra.mxu0 0.0
    %3554 = vmatprep.subr.mxu0 0.0
    %3555 = vmatpush1.msra.mxu0 0.0
    %3556 = vmatprep.subr.mxu0 0.0
    %3557 = vmatpush1.msra.mxu0 0.0
    %3558 = vmatprep.subr.mxu0 0.0
    %3559 = vmatpush1.msra.mxu0 0.0
    %3560 = vmatprep.subr.mxu0 0.0
    %3561 = vmatpush1.msra.mxu0 0.0
    %3562 = vmatprep.subr.mxu0 0.0
    %3563 = vmatpush1.msra.mxu0 0.0
    %3564 = vmatprep.subr.mxu0 0.0
    %3565 = vmatpush1.msra.mxu0 0.0
    %3566 = vmatprep.subr.mxu0 0.0
    %3567 = vmatpush1.msra.mxu0 0.0
    %3568 = vmatprep.subr.mxu0 0.0
    %3569 = vmatpush1.msra.mxu0 0.0
    %3570 = vmatprep.subr.mxu0 0.0
    %3571 = vmatpush1.msra.mxu0 0.0
    %3572 = vmatprep.mubr.f32.mxu0 0.0
    %3573 = vmatmul.mubr.f32.gmra.mrb[0].mxu0 %v3506
    %v3574 = vpop.f32.mrb[0].mxu0
    %v3575 = vadd.f32 0.0, %v3574
    %v3576 = vpop.f32.mrb[0].mxu0
    %3577 = vdwg.mxu0
    %v3578 = vadd.f32 %v3504, %v3575
    %v3579 = vmul.f32 %v3578, %v3578
    %3580 = vmatprep.subr.mxu0 0.0
    %3581 = vmatpush1.msra.mxu0 %v97
    %3582 = vmatprep.subr.mxu0 0.0
    %3583 = vmatpush1.msra.mxu0 %v98
    %3584 = vmatprep.subr.mxu0 0.0
    %3585 = vmatpush1.msra.mxu0 %v99
    %3586 = vmatprep.subr.mxu0 0.0
    %3587 = vmatpush1.msra.mxu0 %v100
    %3588 = vmatprep.subr.mxu0 0.0
    %3589 = vmatpush1.msra.mxu0 %v101
    %3590 = vmatprep.subr.mxu0 0.0
    %3591 = vmatpush1.msra.mxu0 %v102
    %3592 = vmatprep.subr.mxu0 0.0
    %3593 = vmatpush1.msra.mxu0 %v103
    %3594 = vmatprep.subr.mxu0 0.0
    %3595 = vmatpush1.msra.mxu0 %v104
    %3596 = vmatprep.subr.mxu0 0.0
    %3597 = vmatpush1.msra.mxu0 %v105
    %3598 = vmatprep.subr.mxu0 0.0
    %3599 = vmatpush1.msra.mxu0 %v106
    %3600 = vmatprep.subr.mxu0 0.0
    %3601 = vmatpush1.msra.mxu0 %v107
    %3602 = vmatprep.subr.mxu0 0.0
    %3603 = vmatpush1.msra.mxu0 %v108
    %3604 = vmatprep.subr.mxu0 0.0
    %3605 = vmatpush1.msra.mxu0 %v109
    %3606 = vmatprep.subr.mxu0 0.0
    %3607 = vmatpush1.msra.mxu0 %v110
    %3608 = vmatprep.subr.mxu0 0.0
    %3609 = vmatpush1.msra.mxu0 %v111
    %3610 = vmatprep.subr.mxu0 0.0
    %3611 = vmatpush1.msra.mxu0 %v112
    %3612 = vmatprep.subr.mxu0 0.0
    %3613 = vmatpush1.msra.mxu0 0.0
    %3614 = vmatprep.subr.mxu0 0.0
    %3615 = vmatpush1.msra.mxu0 0.0
    %3616 = vmatprep.subr.mxu0 0.0
    %3617 = vmatpush1.msra.mxu0 0.0
    %3618 = vmatprep.subr.mxu0 0.0
    %3619 = vmatpush1.msra.mxu0 0.0
    %3620 = vmatprep.subr.mxu0 0.0
    %3621 = vmatpush1.msra.mxu0 0.0
    %3622 = vmatprep.subr.mxu0 0.0
    %3623 = vmatpush1.msra.mxu0 0.0
    %3624 = vmatprep.subr.mxu0 0.0
    %3625 = vmatpush1.msra.mxu0 0.0
    %3626 = vmatprep.subr.mxu0 0.0
    %3627 = vmatpush1.msra.mxu0 0.0
    %3628 = vmatprep.subr.mxu0 0.0
    %3629 = vmatpush1.msra.mxu0 0.0
    %3630 = vmatprep.subr.mxu0 0.0
    %3631 = vmatpush1.msra.mxu0 0.0
    %3632 = vmatprep.subr.mxu0 0.0
    %3633 = vmatpush1.msra.mxu0 0.0
    %3634 = vmatprep.subr.mxu0 0.0
    %3635 = vmatpush1.msra.mxu0 0.0
    %3636 = vmatprep.subr.mxu0 0.0
    %3637 = vmatpush1.msra.mxu0 0.0
    %3638 = vmatprep.subr.mxu0 0.0
    %3639 = vmatpush1.msra.mxu0 0.0
    %3640 = vmatprep.subr.mxu0 0.0
    %3641 = vmatpush1.msra.mxu0 0.0
    %3642 = vmatprep.subr.mxu0 0.0
    %3643 = vmatpush1.msra.mxu0 0.0
    %3644 = vmatprep.mubr.f32.mxu0 0.0
    %3645 = vmatmul.mubr.f32.gmra.mrb[0].mxu0 %v3578
    %v3646 = vpop.f32.mrb[0].mxu0
    %v3647 = vadd.f32 0.0, %v3646
    %v3648 = vpop.f32.mrb[0].mxu0
    %3649 = vmatprep.mubr.f32.mxu0 0.0
    %3650 = vmatmul.mubr.f32.gmra.mrb[0].mxu0 %v3579
    %v3651 = vpop.f32.mrb[0].mxu0
    %v3652 = vadd.f32 0.0, %v3651
    %v3653 = vpop.f32.mrb[0].mxu0
    %3654 = vdwg.mxu0
    %v3655 = vmul.f32 %v3647, %v3647
    %v3656 = vsub.f32 %v3652, %v3655
    %v3657 = vmax.f32 %v3656, 0.0
    %v3658 = vadd.f32 %v3657, 1e-05
    %v3659 = vmul.f32 %v3658, %v94
    %v3660 = vrsqrt.pop %v3659
    %v3661 = vsub.f32 %v3578, %v3647
    %v3662 = vmul.f32 %v3661, %v3660
    %v3663 = vxor.u32 %v3662, 2147483648
    %v3664 = vmul.f32 %v3663, 1.442695
    %v3665 = vpow.pop %v3664
    %v3666 = vadd.f32 %v3665, 1.0
    %v3667 = vrcp.pop %v3666
    %v3668 = vmul.f32 1.0, %v3667
    %v3669 = vmul.f32 %v3668, %v95
    %v3670 = vadd.f32 %v3669, %v96
    %v3671 = vmul.f32 %v3670, %v3491
    %3673 = vrot.lane.b32.xlu0 %v3670, 32
    %v3674 = vpop.permute.xlu0 %3673
    %v3676 = vmul.f32 %v3670, %v3674
    %3678 = vrot.lane.b32.xlu0 %v3676, 32
    %v3679 = vpop.permute.xlu0 %3678
    %v3681 = vadd.f32 %v3671, %v3679
    %v3682 = vtanh.pop %v3681
    %3683 = vrot.lane.b32.xlu0 %v3670, 96
    %v3684 = vpop.permute.xlu0 %3683
    %v3686 = vmul.f32 %v3682, %v3684
    %3688 = vrot.lane.b32.xlu0 %v3686, 96
    %v3689 = vpop.permute.xlu0 %3688
    %3691 = vst.msk [vmem:[%s1985] sm:$0xff] %vm264, %v3689
    %v3692 = vadd.f32 %v3502, %v3686
    %v3693 = vmul.f32 %v3692, 0.0625
    %v3694 = vld [vmem:[%s9] sm:$0xff]
    %v3695 = vld [vmem:[%s9 + $0x8] sm:$0xff]
    %v3696 = vld [vmem:[%s9 + $0x10] sm:$0xff]
    %v3697 = vld [vmem:[%s9 + $0x18] sm:$0xff]
    %v3698 = vld [vmem:[%s10] sm:$0x1]
    %v3700 = vlaneseq
    %v3701 = vshrl.u32 %v3700, 7
    %v3702 = vsub.s32 0, %v3701
    %v3703 = vrot.slane %v3698, %v3702
    %3706 = vrot.lane.b32.xlu0 %v3693, 96
    %v3707 = vpop.permute.xlu0 %3706
    %v3708 = vsel %vm264, %v3707, 0
    %3710 = vmatprep.subr.mxu0 0.0
    %3711 = vmatpush1.msra.mxu0 %v3694
    %3712 = vmatprep.subr.mxu0 0.0
    %3713 = vmatpush1.msra.mxu0 %v3695
    %3714 = vmatprep.subr.mxu0 0.0
    %3715 = vmatpush1.msra.mxu0 %v3696
    %3716 = vmatprep.subr.mxu0 0.0
    %3717 = vmatpush1.msra.mxu0 %v3697
    %3718 = vmatprep.subr.mxu0 0.0
    %3719 = vmatpush1.msra.mxu0 0.0
    %3720 = vmatprep.subr.mxu0 0.0
    %3721 = vmatpush1.msra.mxu0 0.0
    %3722 = vmatprep.subr.mxu0 0.0
    %3723 = vmatpush1.msra.mxu0 0.0
    %3724 = vmatprep.subr.mxu0 0.0
    %3725 = vmatpush1.msra.mxu0 0.0
    %3726 = vmatprep.subr.mxu0 0.0
    %3727 = vmatpush1.msra.mxu0 0.0
    %3728 = vmatprep.subr.mxu0 0.0
    %3729 = vmatpush1.msra.mxu0 0.0
    %3730 = vmatprep.subr.mxu0 0.0
    %3731 = vmatpush1.msra.mxu0 0.0
    %3732 = vmatprep.subr.mxu0 0.0
    %3733 = vmatpush1.msra.mxu0 0.0
    %3734 = vmatprep.subr.mxu0 0.0
    %3735 = vmatpush1.msra.mxu0 0.0
    %3736 = vmatprep.subr.mxu0 0.0
    %3737 = vmatpush1.msra.mxu0 0.0
    %3738 = vmatprep.subr.mxu0 0.0
    %3739 = vmatpush1.msra.mxu0 0.0
    %3740 = vmatprep.subr.mxu0 0.0
    %3741 = vmatpush1.msra.mxu0 0.0
    %3742 = vmatprep.subr.mxu0 0.0
    %3743 = vmatpush1.msra.mxu0 0.0
    %3744 = vmatprep.subr.mxu0 0.0
    %3745 = vmatpush1.msra.mxu0 0.0
    %3746 = vmatprep.subr.mxu0 0.0
    %3747 = vmatpush1.msra.mxu0 0.0
    %3748 = vmatprep.subr.mxu0 0.0
    %3749 = vmatpush1.msra.mxu0 0.0
    %3750 = vmatprep.subr.mxu0 0.0
    %3751 = vmatpush1.msra.mxu0 0.0
    %3752 = vmatprep.subr.mxu0 0.0
    %3753 = vmatpush1.msra.mxu0 0.0
    %3754 = vmatprep.subr.mxu0 0.0
    %3755 = vmatpush1.msra.mxu0 0.0
    %3756 = vmatprep.subr.mxu0 0.0
    %3757 = vmatpush1.msra.mxu0 0.0
    %3758 = vmatprep.subr.mxu0 0.0
    %3759 = vmatpush1.msra.mxu0 0.0
    %3760 = vmatprep.subr.mxu0 0.0
    %3761 = vmatpush1.msra.mxu0 0.0
    %3762 = vmatprep.subr.mxu0 0.0
    %3763 = vmatpush1.msra.mxu0 0.0
    %3764 = vmatprep.subr.mxu0 0.0
    %3765 = vmatpush1.msra.mxu0 0.0
    %3766 = vmatprep.subr.mxu0 0.0
    %3767 = vmatpush1.msra.mxu0 0.0
    %3768 = vmatprep.subr.mxu0 0.0
    %3769 = vmatpush1.msra.mxu0 0.0
    %3770 = vmatprep.subr.mxu0 0.0
    %3771 = vmatpush1.msra.mxu0 0.0
    %3772 = vmatprep.subr.mxu0 0.0
    %3773 = vmatpush1.msra.mxu0 0.0
    %3774 = vmatprep.mubr.f32.mxu0 0.0
    %3775 = vmatmul.mubr.f32.gmra.mrb[0].mxu0 %v3708
    %v3776 = vpop.f32.mrb[0].mxu0
    %v3777 = vadd.f32 %v3703, %v3776
    %v3778 = vpop.f32.mrb[0].mxu0
    %3779 = vdwg.mxu0
    %vm3780 = vcmask 31744
    %v3781 = vsel %vm3780, %v3777, -inf
    %3782 = vmax.xlane.f32.xlu0 %v3781
    %v3783 = vpop.xlane.xlu0 %3782
    %v3784 = vsub.f32 %v3777, %v3783
    %v3785 = vmul.f32 %v3784, 1.442695
    %v3786 = vpow.pop %v3785
    %v3787 = vsel %vm3780, %v3786, 0.0
    %3788 = vadd.xlane.f32.xlu0 %v3787
    %v3789 = vpop.xlane.xlu0 %3788
    %v3790 = vrcp.pop %v3789
    %v3791 = vmul.f32 %v3786, %v3790
    %3792 = vst.msk [vmem:[%s11] sm:$0xff] %vm3780, %v3791
    // Predicated region
    $region62: #{tpu_custom_call.1} parent=1 // pred_check
      _
    $region63: #{tpu_custom_call.1} parent=1 // pred_check_branch
      %3794 = sbr.rel (0) target = $region65
    $region64: #{tpu_custom_call.1} parent=1 // pred_region
      _
    $region65: #{tpu_custom_call.1} parent=1 // pred_fallthru
      _
    // Predicated region
    $region66: #{tpu_custom_call.1} parent=1 // pred_check
      _
    $region67: #{tpu_custom_call.1} parent=1 // pred_check_branch
      %3796 = sbr.rel (0) target = $region69
    $region68: #{tpu_custom_call.1} parent=1 // pred_region
      _
    $region69: #{tpu_custom_call.1} parent=1 // pred_fallthru
      _
    %3797 = vsyncpa [#allocation5], 1
    %3798 = vsyncpa [#allocation7], 1
    %3799 = vsyncpa [#allocation10], 1

</llo_original>
